<compile_context>
chip_gen: v7x
topology: tpu7x:2x2x1
jax: 0.10.0
libtpu: 0.0.40
codegen_flags: <defaults>
</compile_context>

<pallas_src>
import math
import functools

import jax
import jax.numpy as jnp
from jax import lax
from jax.experimental import pallas as pl
from jax.experimental.pallas import tpu as pltpu

EPS = 1e-5  # nn.LayerNorm default eps

# ----------------------------- config (ZINC) --------------------------------
N_LAYERS = 2
NUM_HEADS = 4
HIDDEN = 32
FFN = 64
OUTPUT_DIM = 8
NUM_ATOMS = 64
NUM_EDGES = 64
NUM_SPATIAL = 40
NUM_IN_DEGREE = 64
NUM_OUT_DEGREE = 64

HEAD_DIM = HIDDEN // NUM_HEADS
SLAB_WIDTH = 128  # lane-dense weight slab (last dim = full vreg lane width)


# ----------------------------- kernel helpers --------------------------------
def _layernorm(x, g, b):
    mu = jnp.mean(x, axis=-1, keepdims=True)
    var = jnp.mean((x - mu) ** 2, axis=-1, keepdims=True)
    return (x - mu) * lax.rsqrt(var + EPS) * g + b


def _gelu(x):
    # exact (erf based) GELU, matching nn.GELU() default
    return 0.5 * x * (1.0 + lax.erf(x / jnp.sqrt(2.0).astype(x.dtype)))


# ----------------------------- fused stack kernel ----------------------------
def graphormer_stack_kernel(x_ref, bias_ref, slab_ref, o_ref, *,
                            layout, bb, seq, num_heads):
    """Runs the FULL encoder stack + final LN + head for `bb` graphs.

    x_ref   : (bb, S, H)      activations
    bias_ref: (bb, nh, S, S)  attention bias (same for every layer)
    slab_ref: (R, 128)        packed f32 weight slab (static offsets in layout)
    o_ref   : (bb, 1, OUT)    graph-level output
    """
    S, H, nh = seq, HIDDEN, num_heads
    d = H // nh
    R = bb * S

    def piece(off, rows, cols):
        # static slice out of the packed weight slab (row offsets are 8-aligned)
        return slab_ref[off:off + rows, 0:cols]

    x = x_ref[...].reshape(R, H)          # (R, H) -- GEMMs run over all rows
    bias = bias_ref[...]                  # (bb, nh, S, S)

    for lo in layout["layers"]:           # static unroll over layers
        vec = piece(lo["vec"], 8, SLAB_WIDTH)
        ln1_g, ln1_b = vec[0:1, 0:H], vec[1:2, 0:H]
        ln2_g, ln2_b = vec[2:3, 0:H], vec[3:4, 0:H]
        bo, b2 = vec[4:5, 0:H], vec[5:6, 0:H]
        bqkv, b1 = vec[6:7, 0:3 * H], vec[7:8, 0:FFN]

        # ---- self-attention block ----
        y = _layernorm(x, ln1_g, ln1_b)
        wqkv = piece(lo["wqkv"], H, 3 * H)                       # (H, 3H)
        # single wide GEMM: (R, H) @ (H, 3H) ; sqrt(d) scale already folded
        qkv = jnp.dot(y, wqkv, preferred_element_type=jnp.float32) + bqkv
        qkv3 = qkv.reshape(bb, S, 3 * H)                         # (bb, S, 3H)

        ctx_heads = []
        for h in range(nh):                                      # static, nh=4
            q_h = qkv3[:, :, h * d:(h + 1) * d]                  # (bb, S, d)
            k_h = qkv3[:, :, H + h * d:H + (h + 1) * d]
            v_h = qkv3[:, :, 2 * H + h * d:2 * H + (h + 1) * d]
            s = jnp.einsum("bqd,bkd->bqk", q_h, k_h,
                           preferred_element_type=jnp.float32) + bias[:, h]
            m = jnp.max(s, axis=-1, keepdims=True)
            e = jnp.exp(s - m)
            p = e / jnp.sum(e, axis=-1, keepdims=True)           # exact softmax
            ctx_heads.append(jnp.einsum("bqk,bkd->bqd", p, v_h,
                                        preferred_element_type=jnp.float32))
        ctx = jnp.concatenate(ctx_heads, axis=-1).reshape(R, H)  # (R, nh*d)

        wo = piece(lo["wo"], H, H)                               # (nh*d, H)
        x = x + jnp.dot(ctx, wo, preferred_element_type=jnp.float32) + bo

        # ---- FFN block ----
        y = _layernorm(x, ln2_g, ln2_b)
        w1 = piece(lo["w1"], H, FFN)
        w2 = piece(lo["w2"], FFN, H)
        h1 = _gelu(jnp.dot(y, w1, preferred_element_type=jnp.float32) + b1)
        x = x + jnp.dot(h1, w2, preferred_element_type=jnp.float32) + b2

    # ---- final LayerNorm + downstream projection on graph token (row 0) ----
    hd = layout["head"]
    hvec = piece(hd["vec"], 8, SLAB_WIDTH)
    out_w = piece(hd["out_w"], H, OUTPUT_DIM)
    xg = x.reshape(bb, S, H)[:, 0:1, :]                          # (bb, 1, H)
    yg = _layernorm(xg, hvec[0:1, 0:H], hvec[1:2, 0:H])
    out = jnp.einsum("bsh,ho->bso", yg, out_w,
                     preferred_element_type=jnp.float32)
    o_ref[...] = out + hvec[2:3, 0:OUTPUT_DIM]


def run_graphormer_stack(x, gab, slab, layout, *, fold_batch):
    B, S, H = x.shape
    nh = gab.shape[1]
    R, W = slab.shape
    bb = B if fold_batch else 1       # graphs per grid step
    steps = B // bb

    kernel = functools.partial(graphormer_stack_kernel, layout=layout,
                               bb=bb, seq=S, num_heads=nh)
    out = pl.pallas_call(
        kernel,
        out_shape=jax.ShapeDtypeStruct((B, 1, OUTPUT_DIM), jnp.float32),
        grid=(steps,),
        in_specs=[
            pl.BlockSpec((bb, S, H), lambda i: (i, 0, 0)),
            pl.BlockSpec((bb, nh, S, S), lambda i: (i, 0, 0, 0)),
            pl.BlockSpec((R, W), lambda i: (0, 0)),   # weight slab, grid-invariant
        ],
        out_specs=pl.BlockSpec((bb, 1, OUTPUT_DIM), lambda i: (i, 0, 0)),
        compiler_params=pltpu.CompilerParams(dimension_semantics=("parallel",)),
    )(x, gab, slab)
    return out[:, 0, :]


def _default_fold_batch():
    """Fold the batch into one grid step on single-TC chips (v5e/v6e);
    keep one graph per grid step on v7x so B maps onto the 2 TensorCores."""
    try:
        kind = jax.devices()[0].device_kind.lower()
    except Exception:
        return True
    return "v7" not in kind


# ----------------------------- parameter init --------------------------------
def init_params(key):
    lin_std = 0.02 / math.sqrt(N_LAYERS)
    emb_std = 0.02
    keys = iter(jax.random.split(key, 64))

    def nrm(shape, std):
        return std * jax.random.normal(next(keys), shape, jnp.float32)

    params = {
        # GraphNodeFeature
        "atom_emb": nrm((NUM_ATOMS, HIDDEN), emb_std),
        "in_deg_emb": nrm((NUM_IN_DEGREE, HIDDEN), emb_std),
        "out_deg_emb": nrm((NUM_OUT_DEGREE, HIDDEN), emb_std),
        "graph_token": nrm((1, HIDDEN), emb_std),
        # GraphAttnBias (non multi-hop)
        "edge_emb": nrm((NUM_EDGES, NUM_HEADS), emb_std),
        "spatial_emb": nrm((NUM_SPATIAL, NUM_HEADS), emb_std),
        "gtvd": nrm((1, NUM_HEADS), emb_std),
        # final LayerNorm + downstream projection
        "final_ln_g": jnp.ones((1, HIDDEN), jnp.float32),
        "final_ln_b": jnp.zeros((1, HIDDEN), jnp.float32),
        "out_w": nrm((HIDDEN, OUTPUT_DIM), lin_std),
        "out_b": jnp.zeros((1, OUTPUT_DIM), jnp.float32),
        "layers": [],
    }
    for _ in range(N_LAYERS):
        lp = {
            "ln1_g": jnp.ones((1, HIDDEN), jnp.float32),
            "ln1_b": jnp.zeros((1, HIDDEN), jnp.float32),
            "wq": nrm((HIDDEN, HIDDEN), lin_std), "bq": jnp.zeros((1, HIDDEN), jnp.float32),
            "wk": nrm((HIDDEN, HIDDEN), lin_std), "bk": jnp.zeros((1, HIDDEN), jnp.float32),
            "wv": nrm((HIDDEN, HIDDEN), lin_std), "bv": jnp.zeros((1, HIDDEN), jnp.float32),
            "wo": nrm((HIDDEN, HIDDEN), lin_std), "bo": jnp.zeros((1, HIDDEN), jnp.float32),
            "ln2_g": jnp.ones((1, HIDDEN), jnp.float32),
            "ln2_b": jnp.zeros((1, HIDDEN), jnp.float32),
            "w1": nrm((HIDDEN, FFN), lin_std), "b1": jnp.zeros((1, FFN), jnp.float32),
            "w2": nrm((FFN, HIDDEN), lin_std), "b2": jnp.zeros((1, HIDDEN), jnp.float32),
        }
        params["layers"].append(lp)
    return params


# ----------------------------- one-time weight packing -----------------------
class _SlabPacker:
    """Packs 2-D f32 arrays into one lane-dense (rows, SLAB_WIDTH) slab.
    Each piece is row-aligned to 8 (sublane tile) and zero padded in lanes."""

    def __init__(self, width):
        self.width = width
        self.pieces = []
        self.off = 0

    def add(self, arr2d):
        r, c = arr2d.shape
        assert c <= self.width
        pad_r = (-r) % 8
        piece = jnp.pad(arr2d.astype(jnp.float32),
                        ((0, pad_r), (0, self.width - c)))
        off = self.off
        self.pieces.append(piece)
        self.off += r + pad_r
        return off

    def finish(self):
        return jnp.concatenate(self.pieces, axis=0)


def _rows(arrs, width):
    """Stack a list of 1-row vectors, each zero-padded to `width` lanes."""
    rows = []
    for a in arrs:
        a = jnp.asarray(a, jnp.float32).reshape(1, -1)
        rows.append(jnp.pad(a, ((0, 0), (0, width - a.shape[1]))))
    return jnp.concatenate(rows, axis=0)


def pack_params(params):
    """One-time transform: fold the sqrt(d) scale into Wq/bq, fuse Wq|Wk|Wv
    into one (H, 3H) block, and pack everything into a single lane-dense slab.
    Returns (slab, layout) where layout holds only static Python int offsets."""
    H, d = HIDDEN, HEAD_DIM
    # NOTE: the reference CoreAttention MULTIPLIES q by sqrt(head_dim).
    scale = jnp.float32(math.sqrt(d))

    pk = _SlabPacker(SLAB_WIDTH)
    layer_layout = []
    for lp in params["layers"]:
        wqkv = jnp.concatenate([lp["wq"] * scale, lp["wk"], lp["wv"]], axis=1)   # (H, 3H)
        bqkv = jnp.concatenate([lp["bq"][0] * scale, lp["bk"][0], lp["bv"][0]])  # (3H,)
        vec = _rows([lp["ln1_g"], lp["ln1_b"], lp["ln2_g"], lp["ln2_b"],
                     lp["bo"], lp["b2"], bqkv, lp["b1"]], SLAB_WIDTH)            # (8, 128)
        layer_layout.append({
            "wqkv": pk.add(wqkv),          # (H, 3H)
            "wo":   pk.add(lp["wo"]),      # (nh*d, H)
            "w1":   pk.add(lp["w1"]),      # (H, FFN)
            "w2":   pk.add(lp["w2"]),      # (FFN, H)
            "vec":  pk.add(vec),           # (8, 128)
        })

    head_vec = _rows([params["final_ln_g"], params["final_ln_b"],
                      params["out_b"]], SLAB_WIDTH)                              # (3, 128)
    head = {"out_w": pk.add(params["out_w"]), "vec": pk.add(head_vec)}

    return pk.finish(), {"layers": layer_layout, "head": head}


# ----------------------------- forward pass -----------------------------------
def graphormer_forward(params, slab, batched_data, *, layout, fold_batch=True):
    x_tok = batched_data["x"]                 # (B, N, F_node) int32
    in_deg = batched_data["in_degree"]        # (B, N) int32
    out_deg = batched_data["out_degree"]      # (B, N) int32
    attn_bias_in = batched_data["attn_bias"]  # (B, S, S) float32
    spatial_pos = batched_data["spatial_pos"]         # (B, N, N) int32
    attn_edge_type = batched_data["attn_edge_type"]   # (B, N, N, F_edge) int32

    B, N = x_tok.shape[:2]
    S = N + 1
    nh = NUM_HEADS

    # ---- GraphNodeFeature (embedding gathers: jitted JAX glue) ----
    node_feat = params["atom_emb"][x_tok].sum(axis=-2)                # (B, N, H)
    node_feat = node_feat + params["in_deg_emb"][in_deg] + params["out_deg_emb"][out_deg]
    graph_tok = jnp.broadcast_to(params["graph_token"][None], (B, 1, HIDDEN))
    x = jnp.concatenate([graph_tok, node_feat], axis=1)               # (B, S, H)

    # ---- GraphAttnBias (non multi-hop path) ----
    gab = jnp.broadcast_to(attn_bias_in[:, None], (B, nh, S, S))
    spb = jnp.transpose(params["spatial_emb"][spatial_pos], (0, 3, 1, 2))   # (B, nh, N, N)
    gab = gab.at[:, :, 1:, 1:].add(spb)
    t = params["gtvd"].reshape(1, nh, 1)
    gab = gab.at[:, :, 1:, 0].add(t)
    gab = gab.at[:, :, 0, :].add(t)
    edge = jnp.transpose(params["edge_emb"][attn_edge_type].mean(axis=-2), (0, 3, 1, 2))
    gab = gab.at[:, :, 1:, 1:].add(edge)
    # final reset-add of the raw bias, matching the reference implementation
    gab = gab + attn_bias_in[:, None]                                 # (B, nh, S, S)

    # ---- fused encoder stack + final LN + head (single Pallas kernel) ----
    return run_graphormer_stack(x, gab, slab, layout, fold_batch=fold_batch)


# ----------------------------- main -------------------------------------------
if __name__ == "__main__":
    key = jax.random.PRNGKey(0)
    kp, kd = jax.random.split(key)
    params = init_params(kp)
    slab, layout = pack_params(params)
    fold_batch = _default_fold_batch()

    B, N, F_node, F_edge = 2, 7, 2, 2
    S = N + 1
    dkeys = jax.random.split(kd, 6)
    batched_data = {
        "x": jax.random.randint(dkeys[0], (B, N, F_node), 1, NUM_ATOMS),
        "in_degree": jax.random.randint(dkeys[1], (B, N), 1, NUM_IN_DEGREE),
        "out_degree": jax.random.randint(dkeys[2], (B, N), 1, NUM_OUT_DEGREE),
        "attn_bias": 0.01 * jax.random.normal(dkeys[3], (B, S, S), jnp.float32),
        "spatial_pos": jax.random.randint(dkeys[4], (B, N, N), 1, NUM_SPATIAL),
        "attn_edge_type": jax.random.randint(dkeys[5], (B, N, N, F_edge), 1, NUM_EDGES),
    }

    # One jit over glue + the fused Pallas kernel: one XLA dispatch per call.
    fwd = jax.jit(functools.partial(graphormer_forward, layout=layout,
                                    fold_batch=fold_batch))
    out = jax.block_until_ready(fwd(params, slab, batched_data))
    assert out.shape == (B, OUTPUT_DIM)
    assert bool(jnp.all(jnp.isfinite(out)))
    print("KERNEL_OK")
</pallas_src>

<mosaic_0001>
module attributes {stable_mosaic.version = 11 : i64} {
  func.func @graphormer_stack_kernel(%arg0: i32, %arg1: memref<2x8x32xf32, #tpu.memory_space<vmem>>, %arg2: memref<2x4x8x8xf32, #tpu.memory_space<vmem>>, %arg3: memref<376x128xf32, #tpu.memory_space<vmem>>, %arg4: memref<2x1x8xf32, #tpu.memory_space<vmem>>) attributes {dimension_semantics = [#tpu.dimension_semantics<parallel>], iteration_bounds = array<i64: 1>, scalar_prefetch = 0 : i64, scratch_operands = 0 : i64, tpu.core_type = #tpu.core_type<tc>, window_params = [{transform_indices = @transform_0, window_bounds = array<i64: 2, 8, 32>}, {transform_indices = @transform_1, window_bounds = array<i64: 2, 4, 8, 8>}, {pipeline_mode = #tpu.pipeline_mode<synchronous>, transform_indices = @transform_2, window_bounds = array<i64: 376, 128>}, {transform_indices = @transform_3, window_bounds = array<i64: 2, 1, 8>}]} {
    %c0 = arith.constant 0 : index
    %c0_0 = arith.constant 0 : index
    %c0_1 = arith.constant 0 : index
    %0 = vector.load %arg1[%c0, %c0_0, %c0_1] : memref<2x8x32xf32, #tpu.memory_space<vmem>>, vector<2x8x32xf32>
    %1 = vector.shape_cast %0 : vector<2x8x32xf32> to vector<16x32xf32>
    %c0_2 = arith.constant 0 : index
    %c0_3 = arith.constant 0 : index
    %c0_4 = arith.constant 0 : index
    %c0_5 = arith.constant 0 : index
    %2 = vector.load %arg2[%c0_2, %c0_3, %c0_4, %c0_5] : memref<2x4x8x8xf32, #tpu.memory_space<vmem>>, vector<2x4x8x8xf32>
    %c160 = arith.constant 160 : index
    %c0_6 = arith.constant 0 : index
    %3 = vector.load %arg3[%c160, %c0_6] : memref<376x128xf32, #tpu.memory_space<vmem>>, vector<8x128xf32>
    %4 = vector.extract_strided_slice %3 {offsets = [0, 0], sizes = [1, 32], strides = [1, 1]} : vector<8x128xf32> to vector<1x32xf32>
    %5 = vector.extract_strided_slice %3 {offsets = [1, 0], sizes = [1, 32], strides = [1, 1]} : vector<8x128xf32> to vector<1x32xf32>
    %6 = vector.extract_strided_slice %3 {offsets = [2, 0], sizes = [1, 32], strides = [1, 1]} : vector<8x128xf32> to vector<1x32xf32>
    %7 = vector.extract_strided_slice %3 {offsets = [3, 0], sizes = [1, 32], strides = [1, 1]} : vector<8x128xf32> to vector<1x32xf32>
    %8 = vector.extract_strided_slice %3 {offsets = [4, 0], sizes = [1, 32], strides = [1, 1]} : vector<8x128xf32> to vector<1x32xf32>
    %9 = vector.extract_strided_slice %3 {offsets = [5, 0], sizes = [1, 32], strides = [1, 1]} : vector<8x128xf32> to vector<1x32xf32>
    %10 = vector.extract_strided_slice %3 {offsets = [6, 0], sizes = [1, 96], strides = [1, 1]} : vector<8x128xf32> to vector<1x96xf32>
    %11 = vector.extract_strided_slice %3 {offsets = [7, 0], sizes = [1, 64], strides = [1, 1]} : vector<8x128xf32> to vector<1x64xf32>
    %cst = arith.constant dense<0.000000e+00> : vector<16xf32>
    %12 = vector.multi_reduction <add>, %1, %cst [1] : vector<16x32xf32> to vector<16xf32>
    %13 = vector.shape_cast %12 : vector<16xf32> to vector<16x1xf32>
    %cst_7 = arith.constant 3.200000e+01 : f32
    %14 = vector.broadcast %cst_7 : f32 to vector<16x1xf32>
    %15 = arith.divf %13, %14 : vector<16x1xf32>
    %16 = vector.broadcast %15 : vector<16x1xf32> to vector<16x32xf32>
    %17 = arith.subf %1, %16 : vector<16x32xf32>
    %18 = arith.mulf %17, %17 : vector<16x32xf32>
    %cst_8 = arith.constant dense<0.000000e+00> : vector<16xf32>
    %19 = vector.multi_reduction <add>, %18, %cst_8 [1] : vector<16x32xf32> to vector<16xf32>
    %20 = vector.shape_cast %19 : vector<16xf32> to vector<16x1xf32>
    %cst_9 = arith.constant 3.200000e+01 : f32
    %21 = vector.broadcast %cst_9 : f32 to vector<16x1xf32>
    %22 = arith.divf %20, %21 : vector<16x1xf32>
    %23 = vector.broadcast %15 : vector<16x1xf32> to vector<16x32xf32>
    %24 = arith.subf %1, %23 : vector<16x32xf32>
    %cst_10 = arith.constant 9.99999974E-6 : f32
    %25 = vector.broadcast %cst_10 : f32 to vector<16x1xf32>
    %26 = arith.addf %22, %25 : vector<16x1xf32>
    %27 = math.rsqrt %26 : vector<16x1xf32>
    %28 = vector.broadcast %27 : vector<16x1xf32> to vector<16x32xf32>
    %29 = arith.mulf %24, %28 : vector<16x32xf32>
    %30 = vector.broadcast %4 : vector<1x32xf32> to vector<16x32xf32>
    %31 = arith.mulf %29, %30 : vector<16x32xf32>
    %32 = vector.broadcast %5 : vector<1x32xf32> to vector<16x32xf32>
    %33 = arith.addf %31, %32 : vector<16x32xf32>
    %c0_11 = arith.constant 0 : index
    %c0_12 = arith.constant 0 : index
    %34 = vector.load %arg3[%c0_11, %c0_12] : memref<376x128xf32, #tpu.memory_space<vmem>>, vector<32x96xf32>
    %cst_13 = arith.constant dense<0.000000e+00> : vector<16x96xf32>
    %35 = tpu.matmul %33, %34, %cst_13 {dimension_numbers = #tpu.dot_dimension_numbers<[1], [0], [0], [1], [0, 0, 1, 1], [], []>} : vector<16x32xf32>, vector<32x96xf32>, vector<16x96xf32> -> vector<16x96xf32>
    %36 = vector.broadcast %10 : vector<1x96xf32> to vector<16x96xf32>
    %37 = arith.addf %35, %36 : vector<16x96xf32>
    %38 = vector.shape_cast %37 : vector<16x96xf32> to vector<2x8x96xf32>
    %39 = vector.extract_strided_slice %38 {offsets = [0, 0, 0], sizes = [2, 8, 8], strides = [1, 1, 1]} : vector<2x8x96xf32> to vector<2x8x8xf32>
    %40 = vector.extract_strided_slice %38 {offsets = [0, 0, 32], sizes = [2, 8, 8], strides = [1, 1, 1]} : vector<2x8x96xf32> to vector<2x8x8xf32>
    %41 = vector.extract_strided_slice %38 {offsets = [0, 0, 64], sizes = [2, 8, 8], strides = [1, 1, 1]} : vector<2x8x96xf32> to vector<2x8x8xf32>
    "tpu.trace_start"() <{level = 10 : i32, message = "bqd,bkd->bqk"}> : () -> ()
    %cst_14 = arith.constant dense<0.000000e+00> : vector<2x8x8xf32>
    %42 = tpu.matmul %39, %40, %cst_14 {dimension_numbers = #tpu.dot_dimension_numbers<[2], [2], [1], [1], [0, 0, 0, 1, 1, 1], [0], [0]>} : vector<2x8x8xf32>, vector<2x8x8xf32>, vector<2x8x8xf32> -> vector<2x8x8xf32>
    "tpu.trace_stop"() : () -> ()
    %43 = vector.extract_strided_slice %2 {offsets = [0, 0, 0, 0], sizes = [2, 1, 8, 8], strides = [1, 1, 1, 1]} : vector<2x4x8x8xf32> to vector<2x1x8x8xf32>
    %44 = vector.shape_cast %43 : vector<2x1x8x8xf32> to vector<2x8x8xf32>
    %45 = arith.addf %42, %44 : vector<2x8x8xf32>
    %cst_15 = arith.constant dense<0xFF800000> : vector<2x8xf32>
    %46 = vector.multi_reduction <maximumf>, %45, %cst_15 [2] : vector<2x8x8xf32> to vector<2x8xf32>
    %47 = vector.shape_cast %46 : vector<2x8xf32> to vector<2x8x1xf32>
    %48 = vector.broadcast %47 : vector<2x8x1xf32> to vector<2x8x8xf32>
    %49 = arith.subf %45, %48 : vector<2x8x8xf32>
    %50 = math.exp %49 : vector<2x8x8xf32>
    %cst_16 = arith.constant dense<0.000000e+00> : vector<2x8xf32>
    %51 = vector.multi_reduction <add>, %50, %cst_16 [2] : vector<2x8x8xf32> to vector<2x8xf32>
    %52 = vector.shape_cast %51 : vector<2x8xf32> to vector<2x8x1xf32>
    %53 = vector.broadcast %52 : vector<2x8x1xf32> to vector<2x8x8xf32>
    %54 = arith.divf %50, %53 : vector<2x8x8xf32>
    "tpu.trace_start"() <{level = 10 : i32, message = "bqk,bkd->bqd"}> : () -> ()
    %cst_17 = arith.constant dense<0.000000e+00> : vector<2x8x8xf32>
    %55 = tpu.matmul %54, %41, %cst_17 {dimension_numbers = #tpu.dot_dimension_numbers<[2], [1], [1], [2], [0, 0, 0, 1, 1, 2], [0], [0]>} : vector<2x8x8xf32>, vector<2x8x8xf32>, vector<2x8x8xf32> -> vector<2x8x8xf32>
    "tpu.trace_stop"() : () -> ()
    %56 = vector.extract_strided_slice %38 {offsets = [0, 0, 8], sizes = [2, 8, 8], strides = [1, 1, 1]} : vector<2x8x96xf32> to vector<2x8x8xf32>
    %57 = vector.extract_strided_slice %38 {offsets = [0, 0, 40], sizes = [2, 8, 8], strides = [1, 1, 1]} : vector<2x8x96xf32> to vector<2x8x8xf32>
    %58 = vector.extract_strided_slice %38 {offsets = [0, 0, 72], sizes = [2, 8, 8], strides = [1, 1, 1]} : vector<2x8x96xf32> to vector<2x8x8xf32>
    "tpu.trace_start"() <{level = 10 : i32, message = "bqd,bkd->bqk"}> : () -> ()
    %cst_18 = arith.constant dense<0.000000e+00> : vector<2x8x8xf32>
    %59 = tpu.matmul %56, %57, %cst_18 {dimension_numbers = #tpu.dot_dimension_numbers<[2], [2], [1], [1], [0, 0, 0, 1, 1, 1], [0], [0]>} : vector<2x8x8xf32>, vector<2x8x8xf32>, vector<2x8x8xf32> -> vector<2x8x8xf32>
    "tpu.trace_stop"() : () -> ()
    %60 = vector.extract_strided_slice %2 {offsets = [0, 1, 0, 0], sizes = [2, 1, 8, 8], strides = [1, 1, 1, 1]} : vector<2x4x8x8xf32> to vector<2x1x8x8xf32>
    %61 = vector.shape_cast %60 : vector<2x1x8x8xf32> to vector<2x8x8xf32>
    %62 = arith.addf %59, %61 : vector<2x8x8xf32>
    %cst_19 = arith.constant dense<0xFF800000> : vector<2x8xf32>
    %63 = vector.multi_reduction <maximumf>, %62, %cst_19 [2] : vector<2x8x8xf32> to vector<2x8xf32>
    %64 = vector.shape_cast %63 : vector<2x8xf32> to vector<2x8x1xf32>
    %65 = vector.broadcast %64 : vector<2x8x1xf32> to vector<2x8x8xf32>
    %66 = arith.subf %62, %65 : vector<2x8x8xf32>
    %67 = math.exp %66 : vector<2x8x8xf32>
    %cst_20 = arith.constant dense<0.000000e+00> : vector<2x8xf32>
    %68 = vector.multi_reduction <add>, %67, %cst_20 [2] : vector<2x8x8xf32> to vector<2x8xf32>
    %69 = vector.shape_cast %68 : vector<2x8xf32> to vector<2x8x1xf32>
    %70 = vector.broadcast %69 : vector<2x8x1xf32> to vector<2x8x8xf32>
    %71 = arith.divf %67, %70 : vector<2x8x8xf32>
    "tpu.trace_start"() <{level = 10 : i32, message = "bqk,bkd->bqd"}> : () -> ()
    %cst_21 = arith.constant dense<0.000000e+00> : vector<2x8x8xf32>
    %72 = tpu.matmul %71, %58, %cst_21 {dimension_numbers = #tpu.dot_dimension_numbers<[2], [1], [1], [2], [0, 0, 0, 1, 1, 2], [0], [0]>} : vector<2x8x8xf32>, vector<2x8x8xf32>, vector<2x8x8xf32> -> vector<2x8x8xf32>
    "tpu.trace_stop"() : () -> ()
    %73 = vector.extract_strided_slice %38 {offsets = [0, 0, 16], sizes = [2, 8, 8], strides = [1, 1, 1]} : vector<2x8x96xf32> to vector<2x8x8xf32>
    %74 = vector.extract_strided_slice %38 {offsets = [0, 0, 48], sizes = [2, 8, 8], strides = [1, 1, 1]} : vector<2x8x96xf32> to vector<2x8x8xf32>
    %75 = vector.extract_strided_slice %38 {offsets = [0, 0, 80], sizes = [2, 8, 8], strides = [1, 1, 1]} : vector<2x8x96xf32> to vector<2x8x8xf32>
    "tpu.trace_start"() <{level = 10 : i32, message = "bqd,bkd->bqk"}> : () -> ()
    %cst_22 = arith.constant dense<0.000000e+00> : vector<2x8x8xf32>
    %76 = tpu.matmul %73, %74, %cst_22 {dimension_numbers = #tpu.dot_dimension_numbers<[2], [2], [1], [1], [0, 0, 0, 1, 1, 1], [0], [0]>} : vector<2x8x8xf32>, vector<2x8x8xf32>, vector<2x8x8xf32> -> vector<2x8x8xf32>
    "tpu.trace_stop"() : () -> ()
    %77 = vector.extract_strided_slice %2 {offsets = [0, 2, 0, 0], sizes = [2, 1, 8, 8], strides = [1, 1, 1, 1]} : vector<2x4x8x8xf32> to vector<2x1x8x8xf32>
    %78 = vector.shape_cast %77 : vector<2x1x8x8xf32> to vector<2x8x8xf32>
    %79 = arith.addf %76, %78 : vector<2x8x8xf32>
    %cst_23 = arith.constant dense<0xFF800000> : vector<2x8xf32>
    %80 = vector.multi_reduction <maximumf>, %79, %cst_23 [2] : vector<2x8x8xf32> to vector<2x8xf32>
    %81 = vector.shape_cast %80 : vector<2x8xf32> to vector<2x8x1xf32>
    %82 = vector.broadcast %81 : vector<2x8x1xf32> to vector<2x8x8xf32>
    %83 = arith.subf %79, %82 : vector<2x8x8xf32>
    %84 = math.exp %83 : vector<2x8x8xf32>
    %cst_24 = arith.constant dense<0.000000e+00> : vector<2x8xf32>
    %85 = vector.multi_reduction <add>, %84, %cst_24 [2] : vector<2x8x8xf32> to vector<2x8xf32>
    %86 = vector.shape_cast %85 : vector<2x8xf32> to vector<2x8x1xf32>
    %87 = vector.broadcast %86 : vector<2x8x1xf32> to vector<2x8x8xf32>
    %88 = arith.divf %84, %87 : vector<2x8x8xf32>
    "tpu.trace_start"() <{level = 10 : i32, message = "bqk,bkd->bqd"}> : () -> ()
    %cst_25 = arith.constant dense<0.000000e+00> : vector<2x8x8xf32>
    %89 = tpu.matmul %88, %75, %cst_25 {dimension_numbers = #tpu.dot_dimension_numbers<[2], [1], [1], [2], [0, 0, 0, 1, 1, 2], [0], [0]>} : vector<2x8x8xf32>, vector<2x8x8xf32>, vector<2x8x8xf32> -> vector<2x8x8xf32>
    "tpu.trace_stop"() : () -> ()
    %90 = vector.extract_strided_slice %38 {offsets = [0, 0, 24], sizes = [2, 8, 8], strides = [1, 1, 1]} : vector<2x8x96xf32> to vector<2x8x8xf32>
    %91 = vector.extract_strided_slice %38 {offsets = [0, 0, 56], sizes = [2, 8, 8], strides = [1, 1, 1]} : vector<2x8x96xf32> to vector<2x8x8xf32>
    %92 = vector.extract_strided_slice %38 {offsets = [0, 0, 88], sizes = [2, 8, 8], strides = [1, 1, 1]} : vector<2x8x96xf32> to vector<2x8x8xf32>
    "tpu.trace_start"() <{level = 10 : i32, message = "bqd,bkd->bqk"}> : () -> ()
    %cst_26 = arith.constant dense<0.000000e+00> : vector<2x8x8xf32>
    %93 = tpu.matmul %90, %91, %cst_26 {dimension_numbers = #tpu.dot_dimension_numbers<[2], [2], [1], [1], [0, 0, 0, 1, 1, 1], [0], [0]>} : vector<2x8x8xf32>, vector<2x8x8xf32>, vector<2x8x8xf32> -> vector<2x8x8xf32>
    "tpu.trace_stop"() : () -> ()
    %94 = vector.extract_strided_slice %2 {offsets = [0, 3, 0, 0], sizes = [2, 1, 8, 8], strides = [1, 1, 1, 1]} : vector<2x4x8x8xf32> to vector<2x1x8x8xf32>
    %95 = vector.shape_cast %94 : vector<2x1x8x8xf32> to vector<2x8x8xf32>
    %96 = arith.addf %93, %95 : vector<2x8x8xf32>
    %cst_27 = arith.constant dense<0xFF800000> : vector<2x8xf32>
    %97 = vector.multi_reduction <maximumf>, %96, %cst_27 [2] : vector<2x8x8xf32> to vector<2x8xf32>
    %98 = vector.shape_cast %97 : vector<2x8xf32> to vector<2x8x1xf32>
    %99 = vector.broadcast %98 : vector<2x8x1xf32> to vector<2x8x8xf32>
    %100 = arith.subf %96, %99 : vector<2x8x8xf32>
    %101 = math.exp %100 : vector<2x8x8xf32>
    %cst_28 = arith.constant dense<0.000000e+00> : vector<2x8xf32>
    %102 = vector.multi_reduction <add>, %101, %cst_28 [2] : vector<2x8x8xf32> to vector<2x8xf32>
    %103 = vector.shape_cast %102 : vector<2x8xf32> to vector<2x8x1xf32>
    %104 = vector.broadcast %103 : vector<2x8x1xf32> to vector<2x8x8xf32>
    %105 = arith.divf %101, %104 : vector<2x8x8xf32>
    "tpu.trace_start"() <{level = 10 : i32, message = "bqk,bkd->bqd"}> : () -> ()
    %cst_29 = arith.constant dense<0.000000e+00> : vector<2x8x8xf32>
    %106 = tpu.matmul %105, %92, %cst_29 {dimension_numbers = #tpu.dot_dimension_numbers<[2], [1], [1], [2], [0, 0, 0, 1, 1, 2], [0], [0]>} : vector<2x8x8xf32>, vector<2x8x8xf32>, vector<2x8x8xf32> -> vector<2x8x8xf32>
    "tpu.trace_stop"() : () -> ()
    %107 = tpu.concatenate %55, %72, %89, %106 in 2 : vector<2x8x8xf32>, vector<2x8x8xf32>, vector<2x8x8xf32>, vector<2x8x8xf32> -> vector<2x8x32xf32>
    %108 = vector.shape_cast %107 : vector<2x8x32xf32> to vector<16x32xf32>
    %c32 = arith.constant 32 : index
    %c0_30 = arith.constant 0 : index
    %109 = vector.load %arg3[%c32, %c0_30] : memref<376x128xf32, #tpu.memory_space<vmem>>, vector<32x32xf32>
    %cst_31 = arith.constant dense<0.000000e+00> : vector<16x32xf32>
    %110 = tpu.matmul %108, %109, %cst_31 {dimension_numbers = #tpu.dot_dimension_numbers<[1], [0], [0], [1], [0, 0, 1, 1], [], []>} : vector<16x32xf32>, vector<32x32xf32>, vector<16x32xf32> -> vector<16x32xf32>
    %111 = arith.addf %1, %110 : vector<16x32xf32>
    %112 = vector.broadcast %8 : vector<1x32xf32> to vector<16x32xf32>
    %113 = arith.addf %111, %112 : vector<16x32xf32>
    %cst_32 = arith.constant dense<0.000000e+00> : vector<16xf32>
    %114 = vector.multi_reduction <add>, %113, %cst_32 [1] : vector<16x32xf32> to vector<16xf32>
    %115 = vector.shape_cast %114 : vector<16xf32> to vector<16x1xf32>
    %cst_33 = arith.constant 3.200000e+01 : f32
    %116 = vector.broadcast %cst_33 : f32 to vector<16x1xf32>
    %117 = arith.divf %115, %116 : vector<16x1xf32>
    %118 = vector.broadcast %117 : vector<16x1xf32> to vector<16x32xf32>
    %119 = arith.subf %113, %118 : vector<16x32xf32>
    %120 = arith.mulf %119, %119 : vector<16x32xf32>
    %cst_34 = arith.constant dense<0.000000e+00> : vector<16xf32>
    %121 = vector.multi_reduction <add>, %120, %cst_34 [1] : vector<16x32xf32> to vector<16xf32>
    %122 = vector.shape_cast %121 : vector<16xf32> to vector<16x1xf32>
    %cst_35 = arith.constant 3.200000e+01 : f32
    %123 = vector.broadcast %cst_35 : f32 to vector<16x1xf32>
    %124 = arith.divf %122, %123 : vector<16x1xf32>
    %125 = vector.broadcast %117 : vector<16x1xf32> to vector<16x32xf32>
    %126 = arith.subf %113, %125 : vector<16x32xf32>
    %cst_36 = arith.constant 9.99999974E-6 : f32
    %127 = vector.broadcast %cst_36 : f32 to vector<16x1xf32>
    %128 = arith.addf %124, %127 : vector<16x1xf32>
    %129 = math.rsqrt %128 : vector<16x1xf32>
    %130 = vector.broadcast %129 : vector<16x1xf32> to vector<16x32xf32>
    %131 = arith.mulf %126, %130 : vector<16x32xf32>
    %132 = vector.broadcast %6 : vector<1x32xf32> to vector<16x32xf32>
    %133 = arith.mulf %131, %132 : vector<16x32xf32>
    %134 = vector.broadcast %7 : vector<1x32xf32> to vector<16x32xf32>
    %135 = arith.addf %133, %134 : vector<16x32xf32>
    %c64 = arith.constant 64 : index
    %c0_37 = arith.constant 0 : index
    %136 = vector.load %arg3[%c64, %c0_37] : memref<376x128xf32, #tpu.memory_space<vmem>>, vector<32x64xf32>
    %c96 = arith.constant 96 : index
    %c0_38 = arith.constant 0 : index
    %137 = vector.load %arg3[%c96, %c0_38] : memref<376x128xf32, #tpu.memory_space<vmem>>, vector<64x32xf32>
    %cst_39 = arith.constant dense<0.000000e+00> : vector<16x64xf32>
    %138 = tpu.matmul %135, %136, %cst_39 {dimension_numbers = #tpu.dot_dimension_numbers<[1], [0], [0], [1], [0, 0, 1, 1], [], []>} : vector<16x32xf32>, vector<32x64xf32>, vector<16x64xf32> -> vector<16x64xf32>
    %139 = vector.broadcast %11 : vector<1x64xf32> to vector<16x64xf32>
    %140 = arith.addf %138, %139 : vector<16x64xf32>
    %cst_40 = arith.constant 5.000000e-01 : f32
    %141 = vector.broadcast %cst_40 : f32 to vector<16x64xf32>
    %142 = arith.mulf %141, %140 : vector<16x64xf32>
    %cst_41 = arith.constant 2.000000e+00 : f32
    %143 = math.sqrt %cst_41 : f32
    %144 = vector.broadcast %143 : f32 to vector<16x64xf32>
    %145 = arith.divf %140, %144 : vector<16x64xf32>
    %146 = math.erf %145 : vector<16x64xf32>
    %cst_42 = arith.constant 1.000000e+00 : f32
    %147 = vector.broadcast %cst_42 : f32 to vector<16x64xf32>
    %148 = arith.addf %147, %146 : vector<16x64xf32>
    %149 = arith.mulf %142, %148 : vector<16x64xf32>
    %cst_43 = arith.constant dense<0.000000e+00> : vector<16x32xf32>
    %150 = tpu.matmul %149, %137, %cst_43 {dimension_numbers = #tpu.dot_dimension_numbers<[1], [0], [0], [1], [0, 0, 1, 1], [], []>} : vector<16x64xf32>, vector<64x32xf32>, vector<16x32xf32> -> vector<16x32xf32>
    %151 = arith.addf %113, %150 : vector<16x32xf32>
    %152 = vector.broadcast %9 : vector<1x32xf32> to vector<16x32xf32>
    %153 = arith.addf %151, %152 : vector<16x32xf32>
    %c328 = arith.constant 328 : index
    %c0_44 = arith.constant 0 : index
    %154 = vector.load %arg3[%c328, %c0_44] : memref<376x128xf32, #tpu.memory_space<vmem>>, vector<8x128xf32>
    %155 = vector.extract_strided_slice %154 {offsets = [0, 0], sizes = [1, 32], strides = [1, 1]} : vector<8x128xf32> to vector<1x32xf32>
    %156 = vector.extract_strided_slice %154 {offsets = [1, 0], sizes = [1, 32], strides = [1, 1]} : vector<8x128xf32> to vector<1x32xf32>
    %157 = vector.extract_strided_slice %154 {offsets = [2, 0], sizes = [1, 32], strides = [1, 1]} : vector<8x128xf32> to vector<1x32xf32>
    %158 = vector.extract_strided_slice %154 {offsets = [3, 0], sizes = [1, 32], strides = [1, 1]} : vector<8x128xf32> to vector<1x32xf32>
    %159 = vector.extract_strided_slice %154 {offsets = [4, 0], sizes = [1, 32], strides = [1, 1]} : vector<8x128xf32> to vector<1x32xf32>
    %160 = vector.extract_strided_slice %154 {offsets = [5, 0], sizes = [1, 32], strides = [1, 1]} : vector<8x128xf32> to vector<1x32xf32>
    %161 = vector.extract_strided_slice %154 {offsets = [6, 0], sizes = [1, 96], strides = [1, 1]} : vector<8x128xf32> to vector<1x96xf32>
    %162 = vector.extract_strided_slice %154 {offsets = [7, 0], sizes = [1, 64], strides = [1, 1]} : vector<8x128xf32> to vector<1x64xf32>
    %cst_45 = arith.constant dense<0.000000e+00> : vector<16xf32>
    %163 = vector.multi_reduction <add>, %153, %cst_45 [1] : vector<16x32xf32> to vector<16xf32>
    %164 = vector.shape_cast %163 : vector<16xf32> to vector<16x1xf32>
    %cst_46 = arith.constant 3.200000e+01 : f32
    %165 = vector.broadcast %cst_46 : f32 to vector<16x1xf32>
    %166 = arith.divf %164, %165 : vector<16x1xf32>
    %167 = vector.broadcast %166 : vector<16x1xf32> to vector<16x32xf32>
    %168 = arith.subf %153, %167 : vector<16x32xf32>
    %169 = arith.mulf %168, %168 : vector<16x32xf32>
    %cst_47 = arith.constant dense<0.000000e+00> : vector<16xf32>
    %170 = vector.multi_reduction <add>, %169, %cst_47 [1] : vector<16x32xf32> to vector<16xf32>
    %171 = vector.shape_cast %170 : vector<16xf32> to vector<16x1xf32>
    %cst_48 = arith.constant 3.200000e+01 : f32
    %172 = vector.broadcast %cst_48 : f32 to vector<16x1xf32>
    %173 = arith.divf %171, %172 : vector<16x1xf32>
    %174 = vector.broadcast %166 : vector<16x1xf32> to vector<16x32xf32>
    %175 = arith.subf %153, %174 : vector<16x32xf32>
    %cst_49 = arith.constant 9.99999974E-6 : f32
    %176 = vector.broadcast %cst_49 : f32 to vector<16x1xf32>
    %177 = arith.addf %173, %176 : vector<16x1xf32>
    %178 = math.rsqrt %177 : vector<16x1xf32>
    %179 = vector.broadcast %178 : vector<16x1xf32> to vector<16x32xf32>
    %180 = arith.mulf %175, %179 : vector<16x32xf32>
    %181 = vector.broadcast %155 : vector<1x32xf32> to vector<16x32xf32>
    %182 = arith.mulf %180, %181 : vector<16x32xf32>
    %183 = vector.broadcast %156 : vector<1x32xf32> to vector<16x32xf32>
    %184 = arith.addf %182, %183 : vector<16x32xf32>
    %c168 = arith.constant 168 : index
    %c0_50 = arith.constant 0 : index
    %185 = vector.load %arg3[%c168, %c0_50] : memref<376x128xf32, #tpu.memory_space<vmem>>, vector<32x96xf32>
    %cst_51 = arith.constant dense<0.000000e+00> : vector<16x96xf32>
    %186 = tpu.matmul %184, %185, %cst_51 {dimension_numbers = #tpu.dot_dimension_numbers<[1], [0], [0], [1], [0, 0, 1, 1], [], []>} : vector<16x32xf32>, vector<32x96xf32>, vector<16x96xf32> -> vector<16x96xf32>
    %187 = vector.broadcast %161 : vector<1x96xf32> to vector<16x96xf32>
    %188 = arith.addf %186, %187 : vector<16x96xf32>
    %189 = vector.shape_cast %188 : vector<16x96xf32> to vector<2x8x96xf32>
    %190 = vector.extract_strided_slice %189 {offsets = [0, 0, 0], sizes = [2, 8, 8], strides = [1, 1, 1]} : vector<2x8x96xf32> to vector<2x8x8xf32>
    %191 = vector.extract_strided_slice %189 {offsets = [0, 0, 32], sizes = [2, 8, 8], strides = [1, 1, 1]} : vector<2x8x96xf32> to vector<2x8x8xf32>
    %192 = vector.extract_strided_slice %189 {offsets = [0, 0, 64], sizes = [2, 8, 8], strides = [1, 1, 1]} : vector<2x8x96xf32> to vector<2x8x8xf32>
    "tpu.trace_start"() <{level = 10 : i32, message = "bqd,bkd->bqk"}> : () -> ()
    %cst_52 = arith.constant dense<0.000000e+00> : vector<2x8x8xf32>
    %193 = tpu.matmul %190, %191, %cst_52 {dimension_numbers = #tpu.dot_dimension_numbers<[2], [2], [1], [1], [0, 0, 0, 1, 1, 1], [0], [0]>} : vector<2x8x8xf32>, vector<2x8x8xf32>, vector<2x8x8xf32> -> vector<2x8x8xf32>
    "tpu.trace_stop"() : () -> ()
    %194 = vector.extract_strided_slice %2 {offsets = [0, 0, 0, 0], sizes = [2, 1, 8, 8], strides = [1, 1, 1, 1]} : vector<2x4x8x8xf32> to vector<2x1x8x8xf32>
    %195 = vector.shape_cast %194 : vector<2x1x8x8xf32> to vector<2x8x8xf32>
    %196 = arith.addf %193, %195 : vector<2x8x8xf32>
    %cst_53 = arith.constant dense<0xFF800000> : vector<2x8xf32>
    %197 = vector.multi_reduction <maximumf>, %196, %cst_53 [2] : vector<2x8x8xf32> to vector<2x8xf32>
    %198 = vector.shape_cast %197 : vector<2x8xf32> to vector<2x8x1xf32>
    %199 = vector.broadcast %198 : vector<2x8x1xf32> to vector<2x8x8xf32>
    %200 = arith.subf %196, %199 : vector<2x8x8xf32>
    %201 = math.exp %200 : vector<2x8x8xf32>
    %cst_54 = arith.constant dense<0.000000e+00> : vector<2x8xf32>
    %202 = vector.multi_reduction <add>, %201, %cst_54 [2] : vector<2x8x8xf32> to vector<2x8xf32>
    %203 = vector.shape_cast %202 : vector<2x8xf32> to vector<2x8x1xf32>
    %204 = vector.broadcast %203 : vector<2x8x1xf32> to vector<2x8x8xf32>
    %205 = arith.divf %201, %204 : vector<2x8x8xf32>
    "tpu.trace_start"() <{level = 10 : i32, message = "bqk,bkd->bqd"}> : () -> ()
    %cst_55 = arith.constant dense<0.000000e+00> : vector<2x8x8xf32>
    %206 = tpu.matmul %205, %192, %cst_55 {dimension_numbers = #tpu.dot_dimension_numbers<[2], [1], [1], [2], [0, 0, 0, 1, 1, 2], [0], [0]>} : vector<2x8x8xf32>, vector<2x8x8xf32>, vector<2x8x8xf32> -> vector<2x8x8xf32>
    "tpu.trace_stop"() : () -> ()
    %207 = vector.extract_strided_slice %189 {offsets = [0, 0, 8], sizes = [2, 8, 8], strides = [1, 1, 1]} : vector<2x8x96xf32> to vector<2x8x8xf32>
    %208 = vector.extract_strided_slice %189 {offsets = [0, 0, 40], sizes = [2, 8, 8], strides = [1, 1, 1]} : vector<2x8x96xf32> to vector<2x8x8xf32>
    %209 = vector.extract_strided_slice %189 {offsets = [0, 0, 72], sizes = [2, 8, 8], strides = [1, 1, 1]} : vector<2x8x96xf32> to vector<2x8x8xf32>
    "tpu.trace_start"() <{level = 10 : i32, message = "bqd,bkd->bqk"}> : () -> ()
    %cst_56 = arith.constant dense<0.000000e+00> : vector<2x8x8xf32>
    %210 = tpu.matmul %207, %208, %cst_56 {dimension_numbers = #tpu.dot_dimension_numbers<[2], [2], [1], [1], [0, 0, 0, 1, 1, 1], [0], [0]>} : vector<2x8x8xf32>, vector<2x8x8xf32>, vector<2x8x8xf32> -> vector<2x8x8xf32>
    "tpu.trace_stop"() : () -> ()
    %211 = vector.extract_strided_slice %2 {offsets = [0, 1, 0, 0], sizes = [2, 1, 8, 8], strides = [1, 1, 1, 1]} : vector<2x4x8x8xf32> to vector<2x1x8x8xf32>
    %212 = vector.shape_cast %211 : vector<2x1x8x8xf32> to vector<2x8x8xf32>
    %213 = arith.addf %210, %212 : vector<2x8x8xf32>
    %cst_57 = arith.constant dense<0xFF800000> : vector<2x8xf32>
    %214 = vector.multi_reduction <maximumf>, %213, %cst_57 [2] : vector<2x8x8xf32> to vector<2x8xf32>
    %215 = vector.shape_cast %214 : vector<2x8xf32> to vector<2x8x1xf32>
    %216 = vector.broadcast %215 : vector<2x8x1xf32> to vector<2x8x8xf32>
    %217 = arith.subf %213, %216 : vector<2x8x8xf32>
    %218 = math.exp %217 : vector<2x8x8xf32>
    %cst_58 = arith.constant dense<0.000000e+00> : vector<2x8xf32>
    %219 = vector.multi_reduction <add>, %218, %cst_58 [2] : vector<2x8x8xf32> to vector<2x8xf32>
    %220 = vector.shape_cast %219 : vector<2x8xf32> to vector<2x8x1xf32>
    %221 = vector.broadcast %220 : vector<2x8x1xf32> to vector<2x8x8xf32>
    %222 = arith.divf %218, %221 : vector<2x8x8xf32>
    "tpu.trace_start"() <{level = 10 : i32, message = "bqk,bkd->bqd"}> : () -> ()
    %cst_59 = arith.constant dense<0.000000e+00> : vector<2x8x8xf32>
    %223 = tpu.matmul %222, %209, %cst_59 {dimension_numbers = #tpu.dot_dimension_numbers<[2], [1], [1], [2], [0, 0, 0, 1, 1, 2], [0], [0]>} : vector<2x8x8xf32>, vector<2x8x8xf32>, vector<2x8x8xf32> -> vector<2x8x8xf32>
    "tpu.trace_stop"() : () -> ()
    %224 = vector.extract_strided_slice %189 {offsets = [0, 0, 16], sizes = [2, 8, 8], strides = [1, 1, 1]} : vector<2x8x96xf32> to vector<2x8x8xf32>
    %225 = vector.extract_strided_slice %189 {offsets = [0, 0, 48], sizes = [2, 8, 8], strides = [1, 1, 1]} : vector<2x8x96xf32> to vector<2x8x8xf32>
    %226 = vector.extract_strided_slice %189 {offsets = [0, 0, 80], sizes = [2, 8, 8], strides = [1, 1, 1]} : vector<2x8x96xf32> to vector<2x8x8xf32>
    "tpu.trace_start"() <{level = 10 : i32, message = "bqd,bkd->bqk"}> : () -> ()
    %cst_60 = arith.constant dense<0.000000e+00> : vector<2x8x8xf32>
    %227 = tpu.matmul %224, %225, %cst_60 {dimension_numbers = #tpu.dot_dimension_numbers<[2], [2], [1], [1], [0, 0, 0, 1, 1, 1], [0], [0]>} : vector<2x8x8xf32>, vector<2x8x8xf32>, vector<2x8x8xf32> -> vector<2x8x8xf32>
    "tpu.trace_stop"() : () -> ()
    %228 = vector.extract_strided_slice %2 {offsets = [0, 2, 0, 0], sizes = [2, 1, 8, 8], strides = [1, 1, 1, 1]} : vector<2x4x8x8xf32> to vector<2x1x8x8xf32>
    %229 = vector.shape_cast %228 : vector<2x1x8x8xf32> to vector<2x8x8xf32>
    %230 = arith.addf %227, %229 : vector<2x8x8xf32>
    %cst_61 = arith.constant dense<0xFF800000> : vector<2x8xf32>
    %231 = vector.multi_reduction <maximumf>, %230, %cst_61 [2] : vector<2x8x8xf32> to vector<2x8xf32>
    %232 = vector.shape_cast %231 : vector<2x8xf32> to vector<2x8x1xf32>
    %233 = vector.broadcast %232 : vector<2x8x1xf32> to vector<2x8x8xf32>
    %234 = arith.subf %230, %233 : vector<2x8x8xf32>
    %235 = math.exp %234 : vector<2x8x8xf32>
    %cst_62 = arith.constant dense<0.000000e+00> : vector<2x8xf32>
    %236 = vector.multi_reduction <add>, %235, %cst_62 [2] : vector<2x8x8xf32> to vector<2x8xf32>
    %237 = vector.shape_cast %236 : vector<2x8xf32> to vector<2x8x1xf32>
    %238 = vector.broadcast %237 : vector<2x8x1xf32> to vector<2x8x8xf32>
    %239 = arith.divf %235, %238 : vector<2x8x8xf32>
    "tpu.trace_start"() <{level = 10 : i32, message = "bqk,bkd->bqd"}> : () -> ()
    %cst_63 = arith.constant dense<0.000000e+00> : vector<2x8x8xf32>
    %240 = tpu.matmul %239, %226, %cst_63 {dimension_numbers = #tpu.dot_dimension_numbers<[2], [1], [1], [2], [0, 0, 0, 1, 1, 2], [0], [0]>} : vector<2x8x8xf32>, vector<2x8x8xf32>, vector<2x8x8xf32> -> vector<2x8x8xf32>
    "tpu.trace_stop"() : () -> ()
    %241 = vector.extract_strided_slice %189 {offsets = [0, 0, 24], sizes = [2, 8, 8], strides = [1, 1, 1]} : vector<2x8x96xf32> to vector<2x8x8xf32>
    %242 = vector.extract_strided_slice %189 {offsets = [0, 0, 56], sizes = [2, 8, 8], strides = [1, 1, 1]} : vector<2x8x96xf32> to vector<2x8x8xf32>
    %243 = vector.extract_strided_slice %189 {offsets = [0, 0, 88], sizes = [2, 8, 8], strides = [1, 1, 1]} : vector<2x8x96xf32> to vector<2x8x8xf32>
    "tpu.trace_start"() <{level = 10 : i32, message = "bqd,bkd->bqk"}> : () -> ()
    %cst_64 = arith.constant dense<0.000000e+00> : vector<2x8x8xf32>
    %244 = tpu.matmul %241, %242, %cst_64 {dimension_numbers = #tpu.dot_dimension_numbers<[2], [2], [1], [1], [0, 0, 0, 1, 1, 1], [0], [0]>} : vector<2x8x8xf32>, vector<2x8x8xf32>, vector<2x8x8xf32> -> vector<2x8x8xf32>
    "tpu.trace_stop"() : () -> ()
    %245 = vector.extract_strided_slice %2 {offsets = [0, 3, 0, 0], sizes = [2, 1, 8, 8], strides = [1, 1, 1, 1]} : vector<2x4x8x8xf32> to vector<2x1x8x8xf32>
    %246 = vector.shape_cast %245 : vector<2x1x8x8xf32> to vector<2x8x8xf32>
    %247 = arith.addf %244, %246 : vector<2x8x8xf32>
    %cst_65 = arith.constant dense<0xFF800000> : vector<2x8xf32>
    %248 = vector.multi_reduction <maximumf>, %247, %cst_65 [2] : vector<2x8x8xf32> to vector<2x8xf32>
    %249 = vector.shape_cast %248 : vector<2x8xf32> to vector<2x8x1xf32>
    %250 = vector.broadcast %249 : vector<2x8x1xf32> to vector<2x8x8xf32>
    %251 = arith.subf %247, %250 : vector<2x8x8xf32>
    %252 = math.exp %251 : vector<2x8x8xf32>
    %cst_66 = arith.constant dense<0.000000e+00> : vector<2x8xf32>
    %253 = vector.multi_reduction <add>, %252, %cst_66 [2] : vector<2x8x8xf32> to vector<2x8xf32>
    %254 = vector.shape_cast %253 : vector<2x8xf32> to vector<2x8x1xf32>
    %255 = vector.broadcast %254 : vector<2x8x1xf32> to vector<2x8x8xf32>
    %256 = arith.divf %252, %255 : vector<2x8x8xf32>
    "tpu.trace_start"() <{level = 10 : i32, message = "bqk,bkd->bqd"}> : () -> ()
    %cst_67 = arith.constant dense<0.000000e+00> : vector<2x8x8xf32>
    %257 = tpu.matmul %256, %243, %cst_67 {dimension_numbers = #tpu.dot_dimension_numbers<[2], [1], [1], [2], [0, 0, 0, 1, 1, 2], [0], [0]>} : vector<2x8x8xf32>, vector<2x8x8xf32>, vector<2x8x8xf32> -> vector<2x8x8xf32>
    "tpu.trace_stop"() : () -> ()
    %258 = tpu.concatenate %206, %223, %240, %257 in 2 : vector<2x8x8xf32>, vector<2x8x8xf32>, vector<2x8x8xf32>, vector<2x8x8xf32> -> vector<2x8x32xf32>
    %259 = vector.shape_cast %258 : vector<2x8x32xf32> to vector<16x32xf32>
    %c200 = arith.constant 200 : index
    %c0_68 = arith.constant 0 : index
    %260 = vector.load %arg3[%c200, %c0_68] : memref<376x128xf32, #tpu.memory_space<vmem>>, vector<32x32xf32>
    %cst_69 = arith.constant dense<0.000000e+00> : vector<16x32xf32>
    %261 = tpu.matmul %259, %260, %cst_69 {dimension_numbers = #tpu.dot_dimension_numbers<[1], [0], [0], [1], [0, 0, 1, 1], [], []>} : vector<16x32xf32>, vector<32x32xf32>, vector<16x32xf32> -> vector<16x32xf32>
    %262 = arith.addf %153, %261 : vector<16x32xf32>
    %263 = vector.broadcast %159 : vector<1x32xf32> to vector<16x32xf32>
    %264 = arith.addf %262, %263 : vector<16x32xf32>
    %cst_70 = arith.constant dense<0.000000e+00> : vector<16xf32>
    %265 = vector.multi_reduction <add>, %264, %cst_70 [1] : vector<16x32xf32> to vector<16xf32>
    %266 = vector.shape_cast %265 : vector<16xf32> to vector<16x1xf32>
    %cst_71 = arith.constant 3.200000e+01 : f32
    %267 = vector.broadcast %cst_71 : f32 to vector<16x1xf32>
    %268 = arith.divf %266, %267 : vector<16x1xf32>
    %269 = vector.broadcast %268 : vector<16x1xf32> to vector<16x32xf32>
    %270 = arith.subf %264, %269 : vector<16x32xf32>
    %271 = arith.mulf %270, %270 : vector<16x32xf32>
    %cst_72 = arith.constant dense<0.000000e+00> : vector<16xf32>
    %272 = vector.multi_reduction <add>, %271, %cst_72 [1] : vector<16x32xf32> to vector<16xf32>
    %273 = vector.shape_cast %272 : vector<16xf32> to vector<16x1xf32>
    %cst_73 = arith.constant 3.200000e+01 : f32
    %274 = vector.broadcast %cst_73 : f32 to vector<16x1xf32>
    %275 = arith.divf %273, %274 : vector<16x1xf32>
    %276 = vector.broadcast %268 : vector<16x1xf32> to vector<16x32xf32>
    %277 = arith.subf %264, %276 : vector<16x32xf32>
    %cst_74 = arith.constant 9.99999974E-6 : f32
    %278 = vector.broadcast %cst_74 : f32 to vector<16x1xf32>
    %279 = arith.addf %275, %278 : vector<16x1xf32>
    %280 = math.rsqrt %279 : vector<16x1xf32>
    %281 = vector.broadcast %280 : vector<16x1xf32> to vector<16x32xf32>
    %282 = arith.mulf %277, %281 : vector<16x32xf32>
    %283 = vector.broadcast %157 : vector<1x32xf32> to vector<16x32xf32>
    %284 = arith.mulf %282, %283 : vector<16x32xf32>
    %285 = vector.broadcast %158 : vector<1x32xf32> to vector<16x32xf32>
    %286 = arith.addf %284, %285 : vector<16x32xf32>
    %c232 = arith.constant 232 : index
    %c0_75 = arith.constant 0 : index
    %287 = vector.load %arg3[%c232, %c0_75] : memref<376x128xf32, #tpu.memory_space<vmem>>, vector<32x64xf32>
    %c264 = arith.constant 264 : index
    %c0_76 = arith.constant 0 : index
    %288 = vector.load %arg3[%c264, %c0_76] : memref<376x128xf32, #tpu.memory_space<vmem>>, vector<64x32xf32>
    %cst_77 = arith.constant dense<0.000000e+00> : vector<16x64xf32>
    %289 = tpu.matmul %286, %287, %cst_77 {dimension_numbers = #tpu.dot_dimension_numbers<[1], [0], [0], [1], [0, 0, 1, 1], [], []>} : vector<16x32xf32>, vector<32x64xf32>, vector<16x64xf32> -> vector<16x64xf32>
    %290 = vector.broadcast %162 : vector<1x64xf32> to vector<16x64xf32>
    %291 = arith.addf %289, %290 : vector<16x64xf32>
    %cst_78 = arith.constant 5.000000e-01 : f32
    %292 = vector.broadcast %cst_78 : f32 to vector<16x64xf32>
    %293 = arith.mulf %292, %291 : vector<16x64xf32>
    %cst_79 = arith.constant 2.000000e+00 : f32
    %294 = math.sqrt %cst_79 : f32
    %295 = vector.broadcast %294 : f32 to vector<16x64xf32>
    %296 = arith.divf %291, %295 : vector<16x64xf32>
    %297 = math.erf %296 : vector<16x64xf32>
    %cst_80 = arith.constant 1.000000e+00 : f32
    %298 = vector.broadcast %cst_80 : f32 to vector<16x64xf32>
    %299 = arith.addf %298, %297 : vector<16x64xf32>
    %300 = arith.mulf %293, %299 : vector<16x64xf32>
    %cst_81 = arith.constant dense<0.000000e+00> : vector<16x32xf32>
    %301 = tpu.matmul %300, %288, %cst_81 {dimension_numbers = #tpu.dot_dimension_numbers<[1], [0], [0], [1], [0, 0, 1, 1], [], []>} : vector<16x64xf32>, vector<64x32xf32>, vector<16x32xf32> -> vector<16x32xf32>
    %302 = arith.addf %264, %301 : vector<16x32xf32>
    %303 = vector.broadcast %160 : vector<1x32xf32> to vector<16x32xf32>
    %304 = arith.addf %302, %303 : vector<16x32xf32>
    %c368 = arith.constant 368 : index
    %c0_82 = arith.constant 0 : index
    %305 = vector.load %arg3[%c368, %c0_82] : memref<376x128xf32, #tpu.memory_space<vmem>>, vector<8x128xf32>
    %c336 = arith.constant 336 : index
    %c0_83 = arith.constant 0 : index
    %306 = vector.load %arg3[%c336, %c0_83] : memref<376x128xf32, #tpu.memory_space<vmem>>, vector<32x8xf32>
    %307 = vector.shape_cast %304 : vector<16x32xf32> to vector<2x8x32xf32>
    %308 = vector.extract_strided_slice %307 {offsets = [0, 0, 0], sizes = [2, 1, 32], strides = [1, 1, 1]} : vector<2x8x32xf32> to vector<2x1x32xf32>
    %309 = vector.extract_strided_slice %305 {offsets = [0, 0], sizes = [1, 32], strides = [1, 1]} : vector<8x128xf32> to vector<1x32xf32>
    %310 = vector.extract_strided_slice %305 {offsets = [1, 0], sizes = [1, 32], strides = [1, 1]} : vector<8x128xf32> to vector<1x32xf32>
    %cst_84 = arith.constant dense<0.000000e+00> : vector<2x1xf32>
    %311 = vector.multi_reduction <add>, %308, %cst_84 [2] : vector<2x1x32xf32> to vector<2x1xf32>
    %312 = vector.shape_cast %311 : vector<2x1xf32> to vector<2x1x1xf32>
    %cst_85 = arith.constant 3.200000e+01 : f32
    %313 = vector.broadcast %cst_85 : f32 to vector<2x1x1xf32>
    %314 = arith.divf %312, %313 : vector<2x1x1xf32>
    %315 = vector.broadcast %314 : vector<2x1x1xf32> to vector<2x1x32xf32>
    %316 = arith.subf %308, %315 : vector<2x1x32xf32>
    %317 = arith.mulf %316, %316 : vector<2x1x32xf32>
    %cst_86 = arith.constant dense<0.000000e+00> : vector<2x1xf32>
    %318 = vector.multi_reduction <add>, %317, %cst_86 [2] : vector<2x1x32xf32> to vector<2x1xf32>
    %319 = vector.shape_cast %318 : vector<2x1xf32> to vector<2x1x1xf32>
    %cst_87 = arith.constant 3.200000e+01 : f32
    %320 = vector.broadcast %cst_87 : f32 to vector<2x1x1xf32>
    %321 = arith.divf %319, %320 : vector<2x1x1xf32>
    %322 = vector.broadcast %314 : vector<2x1x1xf32> to vector<2x1x32xf32>
    %323 = arith.subf %308, %322 : vector<2x1x32xf32>
    %cst_88 = arith.constant 9.99999974E-6 : f32
    %324 = vector.broadcast %cst_88 : f32 to vector<2x1x1xf32>
    %325 = arith.addf %321, %324 : vector<2x1x1xf32>
    %326 = math.rsqrt %325 : vector<2x1x1xf32>
    %327 = vector.broadcast %326 : vector<2x1x1xf32> to vector<2x1x32xf32>
    %328 = arith.mulf %323, %327 : vector<2x1x32xf32>
    %329 = vector.shape_cast %309 : vector<1x32xf32> to vector<1x1x32xf32>
    %330 = vector.broadcast %329 : vector<1x1x32xf32> to vector<2x1x32xf32>
    %331 = arith.mulf %328, %330 : vector<2x1x32xf32>
    %332 = vector.shape_cast %310 : vector<1x32xf32> to vector<1x1x32xf32>
    %333 = vector.broadcast %332 : vector<1x1x32xf32> to vector<2x1x32xf32>
    %334 = arith.addf %331, %333 : vector<2x1x32xf32>
    "tpu.trace_start"() <{level = 10 : i32, message = "bsh,ho->bso"}> : () -> ()
    %cst_89 = arith.constant dense<0.000000e+00> : vector<2x1x8xf32>
    %335 = tpu.matmul %334, %306, %cst_89 {dimension_numbers = #tpu.dot_dimension_numbers<[2], [0], [0, 1], [1], [0, 0, 0, 1, 1, 1], [], []>} : vector<2x1x32xf32>, vector<32x8xf32>, vector<2x1x8xf32> -> vector<2x1x8xf32>
    "tpu.trace_stop"() : () -> ()
    %336 = vector.extract_strided_slice %305 {offsets = [2, 0], sizes = [1, 8], strides = [1, 1]} : vector<8x128xf32> to vector<1x8xf32>
    %337 = vector.shape_cast %336 : vector<1x8xf32> to vector<1x1x8xf32>
    %338 = vector.broadcast %337 : vector<1x1x8xf32> to vector<2x1x8xf32>
    %339 = arith.addf %335, %338 : vector<2x1x8xf32>
    %c0_90 = arith.constant 0 : index
    %c0_91 = arith.constant 0 : index
    %c0_92 = arith.constant 0 : index
    %340 = vector.load %arg4[%c0_90, %c0_91, %c0_92] : memref<2x1x8xf32, #tpu.memory_space<vmem>>, vector<2x1x8xf32>
    tpu.vector_store %arg4[%c0_90, %c0_91, %c0_92], %339 {strides = array<i32>} : memref<2x1x8xf32, #tpu.memory_space<vmem>>, vector<2x1x8xf32>,
    return
  }
  func.func @transform_0(%arg0: i32) -> (i32, i32, i32) {
    %c0_i32 = arith.constant 0 : i32
    %c0_i32_0 = arith.constant 0 : i32
    %c0_i32_1 = arith.constant 0 : i32
    return %arg0, %c0_i32, %c0_i32_0 : i32, i32, i32
  }
  func.func @transform_1(%arg0: i32) -> (i32, i32, i32, i32) {
    %c0_i32 = arith.constant 0 : i32
    %c0_i32_0 = arith.constant 0 : i32
    %c0_i32_1 = arith.constant 0 : i32
    %c0_i32_2 = arith.constant 0 : i32
    return %arg0, %c0_i32, %c0_i32_0, %c0_i32_1 : i32, i32, i32, i32
  }
  func.func @transform_2(%arg0: i32) -> (i32, i32) {
    %c0_i32 = arith.constant 0 : i32
    %c0_i32_0 = arith.constant 0 : i32
    %c0_i32_1 = arith.constant 0 : i32
    return %c0_i32, %c0_i32_0 : i32, i32
  }
  func.func @transform_3(%arg0: i32) -> (i32, i32, i32) {
    %c0_i32 = arith.constant 0 : i32
    %c0_i32_0 = arith.constant 0 : i32
    %c0_i32_1 = arith.constant 0 : i32
    return %arg0, %c0_i32, %c0_i32_0 : i32, i32, i32
  }
}

</mosaic_0001>

<llo_original>
// kernel: graphormer_forward.1
$region0: #{graphormer_forward.1}
  #allocation0 [shape = 'u32[]', space=smem, size = 0x4, offset = 0x4, fixed_abs, tag = 'smem constant byte address 0x4 - core index']
  #allocation1 [shape = 'u32[144,128]{1,0:T(1,128)}', space=vmem, size = 0x12000, scoped, tag = 'internal scratch']
  %s0 = inlined_call_operand.vmem [shape: f32[2,8,32], index: 0, kind: input, shape index: {}]
  %s1 = inlined_call_operand.vmem [shape: f32[2,4,8,8], index: 1, kind: input, shape index: {}]
  %s2 = inlined_call_operand.vmem [shape: f32[376,128], index: 2, kind: input, shape index: {}]
  %s3 = inlined_call_operand.hbm [shape: f32[2,1,8], index: 3, kind: output, shape index: {}]
  %s4 = sld [smem:[#allocation0]]
  $region22: #{graphormer_forward.1} parent=0
    _
  %s6 = ssub.s32 1, %s4
  %s7 = scalar_select 0, %s6, %s4
  $region1: #{graphormer_forward.1} parent=0
    #allocation2 [shape = 'u8[1024]{0}', space=vmem, size = 0x400, scoped, tag = 'output window, operand 0, single buffered']
    #allocation3 [shape = 's32[1]{0}', space=sflag, size = 0x4, scoped, tag = 'scoped memory for graphormer_forward.1']
    %8 = vsyncpa [#allocation3], 0
    // Predicated region
    $region2: #{graphormer_forward.1} parent=1 // pred_check
      _
    $region3: #{graphormer_forward.1} parent=1 // pred_check_branch
      %10 = sbr.rel (0) target = $region5
    $region4: #{graphormer_forward.1} parent=1 // pred_region
      _
    $region5: #{graphormer_forward.1} parent=1 // pred_fallthru
      _
    // Predicated region
    $region6: #{graphormer_forward.1} parent=1 // pred_check
      _
    $region7: #{graphormer_forward.1} parent=1 // pred_check_branch
      %12 = sbr.rel (0) target = $region9
    $region8: #{graphormer_forward.1} parent=1 // pred_region
      _
    $region9: #{graphormer_forward.1} parent=1 // pred_fallthru
      _
    // Predicated region
    $region10: #{graphormer_forward.1} parent=1 // pred_check
      _
    $region11: #{graphormer_forward.1} parent=1 // pred_check_branch
      %14 = sbr.rel (0) target = $region13
    $region12: #{graphormer_forward.1} parent=1 // pred_region
      _
    $region13: #{graphormer_forward.1} parent=1 // pred_fallthru
      _
    %v15 = vld [vmem:[%s0] sm:$0xff]
    %v16 = vld [vmem:[%s0 + $0x8] sm:$0xff]
    %v17 = vld [vmem:[%s1] sm:$0xff]
    %v18 = vld [vmem:[%s1 + $0x8] sm:$0xff]
    %v19 = vld [vmem:[%s1 + $0x10] sm:$0xff]
    %v20 = vld [vmem:[%s1 + $0x18] sm:$0xff]
    %v21 = vld [vmem:[%s1 + $0x20] sm:$0xff]
    %v22 = vld [vmem:[%s1 + $0x28] sm:$0xff]
    %v23 = vld [vmem:[%s1 + $0x30] sm:$0xff]
    %v24 = vld [vmem:[%s1 + $0x38] sm:$0xff]
    %v25 = vld [vmem:[%s2 + $0xa0] sm:$0xff]
    %vm26 = vcmask 261120
    %v27 = vsel %vm26, %v15, 0.0
    %28 = vadd.xlane.f32.xlu0 %v27
    %v29 = vpop.xlane.xlu0 %28
    %v30 = vsel %vm26, %v16, 0.0
    %31 = vadd.xlane.f32.xlu0 %v30
    %v32 = vpop.xlane.xlu0 %31
    %v33 = vrcp.pop 32.0
    %v34 = vmul.f32 %v29, %v33
    %v35 = vmul.f32 %v32, %v33
    %v36 = vsub.f32 %v15, %v34
    %v37 = vsub.f32 %v16, %v35
    %v38 = vmul.f32 %v36, %v36
    %v39 = vmul.f32 %v37, %v37
    %v40 = vsel %vm26, %v38, 0.0
    %41 = vadd.xlane.f32.xlu0 %v40
    %v42 = vpop.xlane.xlu0 %41
    %v43 = vsel %vm26, %v39, 0.0
    %44 = vadd.xlane.f32.xlu0 %v43
    %v45 = vpop.xlane.xlu0 %44
    %v46 = vmul.f32 %v42, %v33
    %v47 = vmul.f32 %v45, %v33
    %v48 = vadd.f32 %v46, 1e-05
    %v49 = vadd.f32 %v47, 1e-05
    %v50 = vrsqrt.pop %v48
    %v51 = vrsqrt.pop %v49
    %v52 = vmul.f32 %v36, %v50
    %v53 = vmul.f32 %v37, %v51
    %v54 = vlaneseq
    %v55 = vshrl.u32 %v54, 7
    %v56 = vsub.s32 0, %v55
    %v57 = vrot.slane %v25, %v56
    %v58 = vmul.f32 %v52, %v57
    %v59 = vmul.f32 %v53, %v57
    %v60 = vlaneseq
    %v61 = vshrl.u32 %v60, 7
    %v62 = vsub.s32 1, %v61
    %v63 = vrot.slane %v25, %v62
    %v64 = vadd.f32 %v58, %v63
    %v65 = vadd.f32 %v59, %v63
    %v66 = vld [vmem:[%s2] sm:$0xff]
    %v67 = vld [vmem:[%s2 + $0x8] sm:$0xff]
    %v68 = vld [vmem:[%s2 + $0x10] sm:$0xff]
    %v69 = vld [vmem:[%s2 + $0x18] sm:$0xff]
    %v70 = vlaneseq
    %v71 = vshrl.u32 %v70, 7
    %v72 = vsub.s32 6, %v71
    %v73 = vrot.slane %v25, %v72
    %v75 = vsel %vm26, %v64, 0
    %v78 = vsel %vm26, %v65, 0
    %80 = vmatprep.subr.mxu0 0.0
    %81 = vmatpush1.msra.mxu0 %v66
    %82 = vmatprep.subr.mxu0 0.0
    %83 = vmatpush1.msra.mxu0 %v67
    %84 = vmatprep.subr.mxu0 0.0
    %85 = vmatpush1.msra.mxu0 %v68
    %86 = vmatprep.subr.mxu0 0.0
    %87 = vmatpush1.msra.mxu0 %v69
    %88 = vmatprep.subr.mxu0 0.0
    %89 = vmatpush1.msra.mxu0 0.0
    %90 = vmatprep.subr.mxu0 0.0
    %91 = vmatpush1.msra.mxu0 0.0
    %92 = vmatprep.subr.mxu0 0.0
    %93 = vmatpush1.msra.mxu0 0.0
    %94 = vmatprep.subr.mxu0 0.0
    %95 = vmatpush1.msra.mxu0 0.0
    %96 = vmatprep.subr.mxu0 0.0
    %97 = vmatpush1.msra.mxu0 0.0
    %98 = vmatprep.subr.mxu0 0.0
    %99 = vmatpush1.msra.mxu0 0.0
    %100 = vmatprep.subr.mxu0 0.0
    %101 = vmatpush1.msra.mxu0 0.0
    %102 = vmatprep.subr.mxu0 0.0
    %103 = vmatpush1.msra.mxu0 0.0
    %104 = vmatprep.subr.mxu0 0.0
    %105 = vmatpush1.msra.mxu0 0.0
    %106 = vmatprep.subr.mxu0 0.0
    %107 = vmatpush1.msra.mxu0 0.0
    %108 = vmatprep.subr.mxu0 0.0
    %109 = vmatpush1.msra.mxu0 0.0
    %110 = vmatprep.subr.mxu0 0.0
    %111 = vmatpush1.msra.mxu0 0.0
    %112 = vmatprep.subr.mxu0 0.0
    %113 = vmatpush1.msra.mxu0 0.0
    %114 = vmatprep.subr.mxu0 0.0
    %115 = vmatpush1.msra.mxu0 0.0
    %116 = vmatprep.subr.mxu0 0.0
    %117 = vmatpush1.msra.mxu0 0.0
    %118 = vmatprep.subr.mxu0 0.0
    %119 = vmatpush1.msra.mxu0 0.0
    %120 = vmatprep.subr.mxu0 0.0
    %121 = vmatpush1.msra.mxu0 0.0
    %122 = vmatprep.subr.mxu0 0.0
    %123 = vmatpush1.msra.mxu0 0.0
    %124 = vmatprep.subr.mxu0 0.0
    %125 = vmatpush1.msra.mxu0 0.0
    %126 = vmatprep.subr.mxu0 0.0
    %127 = vmatpush1.msra.mxu0 0.0
    %128 = vmatprep.subr.mxu0 0.0
    %129 = vmatpush1.msra.mxu0 0.0
    %130 = vmatprep.subr.mxu0 0.0
    %131 = vmatpush1.msra.mxu0 0.0
    %132 = vmatprep.subr.mxu0 0.0
    %133 = vmatpush1.msra.mxu0 0.0
    %134 = vmatprep.subr.mxu0 0.0
    %135 = vmatpush1.msra.mxu0 0.0
    %136 = vmatprep.subr.mxu0 0.0
    %137 = vmatpush1.msra.mxu0 0.0
    %138 = vmatprep.subr.mxu0 0.0
    %139 = vmatpush1.msra.mxu0 0.0
    %140 = vmatprep.subr.mxu0 0.0
    %141 = vmatpush1.msra.mxu0 0.0
    %142 = vmatprep.subr.mxu0 0.0
    %143 = vmatpush1.msra.mxu0 0.0
    %144 = vmatprep.mubr.f32.mxu0 0.0
    %145 = vmatmul.mubr.f32.gmra.mrb[0].mxu0 %v75
    %v146 = vpop.f32.mrb[0].mxu0
    %v147 = vadd.f32 %v73, %v146
    %v148 = vpop.f32.mrb[0].mxu0
    %149 = vmatprep.mubr.f32.mxu0 0.0
    %150 = vmatmul.mubr.f32.gmra.mrb[0].mxu0 %v78
    %v151 = vpop.f32.mrb[0].mxu0
    %v152 = vadd.f32 %v73, %v151
    %v153 = vpop.f32.mrb[0].mxu0
    %154 = vdwg.mxu0
    %156 = vrot.lane.b32.xlu0 %v147, 96
    %v157 = vpop.permute.xlu0 %156
    %vm158 = vcmask 64512
    %v159 = vsel %vm158, %v147, 0
    %v161 = vsel %vm158, %v157, 0
    %163 = vmatprep.subr.mxu0 0.0
    %164 = vmatpush1.xpose.msra.mxu0 %v161
    %165 = vmatprep.subr.mxu0 0.0
    %166 = vmatpush1.xpose.msra.mxu0 0.0
    %167 = vmatprep.subr.mxu0 0.0
    %168 = vmatpush1.xpose.msra.mxu0 0.0
    %169 = vmatprep.subr.mxu0 0.0
    %170 = vmatpush1.xpose.msra.mxu0 0.0
    %171 = vmatprep.subr.mxu0 0.0
    %172 = vmatpush1.xpose.msra.mxu0 0.0
    %173 = vmatprep.subr.mxu0 0.0
    %174 = vmatpush1.xpose.msra.mxu0 0.0
    %175 = vmatprep.subr.mxu0 0.0
    %176 = vmatpush1.xpose.msra.mxu0 0.0
    %177 = vmatprep.subr.mxu0 0.0
    %178 = vmatpush1.xpose.msra.mxu0 0.0
    %179 = vmatprep.subr.mxu0 0.0
    %180 = vmatpush1.xpose.msra.mxu0 0.0
    %181 = vmatprep.subr.mxu0 0.0
    %182 = vmatpush1.xpose.msra.mxu0 0.0
    %183 = vmatprep.subr.mxu0 0.0
    %184 = vmatpush1.xpose.msra.mxu0 0.0
    %185 = vmatprep.subr.mxu0 0.0
    %186 = vmatpush1.xpose.msra.mxu0 0.0
    %187 = vmatprep.subr.mxu0 0.0
    %188 = vmatpush1.xpose.msra.mxu0 0.0
    %189 = vmatprep.subr.mxu0 0.0
    %190 = vmatpush1.xpose.msra.mxu0 0.0
    %191 = vmatprep.subr.mxu0 0.0
    %192 = vmatpush1.xpose.msra.mxu0 0.0
    %193 = vmatprep.subr.mxu0 0.0
    %194 = vmatpush1.xpose.msra.mxu0 0.0
    %195 = vmatprep.subr.mxu0 0.0
    %196 = vmatpush1.xpose.msra.mxu0 0.0
    %197 = vmatprep.subr.mxu0 0.0
    %198 = vmatpush1.xpose.msra.mxu0 0.0
    %199 = vmatprep.subr.mxu0 0.0
    %200 = vmatpush1.xpose.msra.mxu0 0.0
    %201 = vmatprep.subr.mxu0 0.0
    %202 = vmatpush1.xpose.msra.mxu0 0.0
    %203 = vmatprep.subr.mxu0 0.0
    %204 = vmatpush1.xpose.msra.mxu0 0.0
    %205 = vmatprep.subr.mxu0 0.0
    %206 = vmatpush1.xpose.msra.mxu0 0.0
    %207 = vmatprep.subr.mxu0 0.0
    %208 = vmatpush1.xpose.msra.mxu0 0.0
    %209 = vmatprep.subr.mxu0 0.0
    %210 = vmatpush1.xpose.msra.mxu0 0.0
    %211 = vmatprep.subr.mxu0 0.0
    %212 = vmatpush1.xpose.msra.mxu0 0.0
    %213 = vmatprep.subr.mxu0 0.0
    %214 = vmatpush1.xpose.msra.mxu0 0.0
    %215 = vmatprep.subr.mxu0 0.0
    %216 = vmatpush1.xpose.msra.mxu0 0.0
    %217 = vmatprep.subr.mxu0 0.0
    %218 = vmatpush1.xpose.msra.mxu0 0.0
    %219 = vmatprep.subr.mxu0 0.0
    %220 = vmatpush1.xpose.msra.mxu0 0.0
    %221 = vmatprep.subr.mxu0 0.0
    %222 = vmatpush1.xpose.msra.mxu0 0.0
    %223 = vmatprep.subr.mxu0 0.0
    %224 = vmatpush1.xpose.msra.mxu0 0.0
    %225 = vmatprep.subr.mxu0 0.0
    %226 = vmatpush1.xpose.msra.mxu0 0.0
    %227 = vmatprep.mubr.f32.mxu0 0.0
    %228 = vmatmul.mubr.f32.gmra.mrb[0].mxu0 %v159
    %v229 = vpop.f32.mrb[0].mxu0
    %v230 = vadd.f32 %v17, %v229
    %v231 = vpop.f32.mrb[0].mxu0
    %232 = vdwg.mxu0
    %234 = vrot.lane.b32.xlu0 %v152, 96
    %v235 = vpop.permute.xlu0 %234
    %v236 = vsel %vm158, %v152, 0
    %v238 = vsel %vm158, %v235, 0
    %240 = vmatprep.subr.mxu0 0.0
    %241 = vmatpush1.xpose.msra.mxu0 %v238
    %242 = vmatprep.subr.mxu0 0.0
    %243 = vmatpush1.xpose.msra.mxu0 0.0
    %244 = vmatprep.subr.mxu0 0.0
    %245 = vmatpush1.xpose.msra.mxu0 0.0
    %246 = vmatprep.subr.mxu0 0.0
    %247 = vmatpush1.xpose.msra.mxu0 0.0
    %248 = vmatprep.subr.mxu0 0.0
    %249 = vmatpush1.xpose.msra.mxu0 0.0
    %250 = vmatprep.subr.mxu0 0.0
    %251 = vmatpush1.xpose.msra.mxu0 0.0
    %252 = vmatprep.subr.mxu0 0.0
    %253 = vmatpush1.xpose.msra.mxu0 0.0
    %254 = vmatprep.subr.mxu0 0.0
    %255 = vmatpush1.xpose.msra.mxu0 0.0
    %256 = vmatprep.subr.mxu0 0.0
    %257 = vmatpush1.xpose.msra.mxu0 0.0
    %258 = vmatprep.subr.mxu0 0.0
    %259 = vmatpush1.xpose.msra.mxu0 0.0
    %260 = vmatprep.subr.mxu0 0.0
    %261 = vmatpush1.xpose.msra.mxu0 0.0
    %262 = vmatprep.subr.mxu0 0.0
    %263 = vmatpush1.xpose.msra.mxu0 0.0
    %264 = vmatprep.subr.mxu0 0.0
    %265 = vmatpush1.xpose.msra.mxu0 0.0
    %266 = vmatprep.subr.mxu0 0.0
    %267 = vmatpush1.xpose.msra.mxu0 0.0
    %268 = vmatprep.subr.mxu0 0.0
    %269 = vmatpush1.xpose.msra.mxu0 0.0
    %270 = vmatprep.subr.mxu0 0.0
    %271 = vmatpush1.xpose.msra.mxu0 0.0
    %272 = vmatprep.subr.mxu0 0.0
    %273 = vmatpush1.xpose.msra.mxu0 0.0
    %274 = vmatprep.subr.mxu0 0.0
    %275 = vmatpush1.xpose.msra.mxu0 0.0
    %276 = vmatprep.subr.mxu0 0.0
    %277 = vmatpush1.xpose.msra.mxu0 0.0
    %278 = vmatprep.subr.mxu0 0.0
    %279 = vmatpush1.xpose.msra.mxu0 0.0
    %280 = vmatprep.subr.mxu0 0.0
    %281 = vmatpush1.xpose.msra.mxu0 0.0
    %282 = vmatprep.subr.mxu0 0.0
    %283 = vmatpush1.xpose.msra.mxu0 0.0
    %284 = vmatprep.subr.mxu0 0.0
    %285 = vmatpush1.xpose.msra.mxu0 0.0
    %286 = vmatprep.subr.mxu0 0.0
    %287 = vmatpush1.xpose.msra.mxu0 0.0
    %288 = vmatprep.subr.mxu0 0.0
    %289 = vmatpush1.xpose.msra.mxu0 0.0
    %290 = vmatprep.subr.mxu0 0.0
    %291 = vmatpush1.xpose.msra.mxu0 0.0
    %292 = vmatprep.subr.mxu0 0.0
    %293 = vmatpush1.xpose.msra.mxu0 0.0
    %294 = vmatprep.subr.mxu0 0.0
    %295 = vmatpush1.xpose.msra.mxu0 0.0
    %296 = vmatprep.subr.mxu0 0.0
    %297 = vmatpush1.xpose.msra.mxu0 0.0
    %298 = vmatprep.subr.mxu0 0.0
    %299 = vmatpush1.xpose.msra.mxu0 0.0
    %300 = vmatprep.subr.mxu0 0.0
    %301 = vmatpush1.xpose.msra.mxu0 0.0
    %302 = vmatprep.subr.mxu0 0.0
    %303 = vmatpush1.xpose.msra.mxu0 0.0
    %304 = vmatprep.mubr.f32.mxu0 0.0
    %305 = vmatmul.mubr.f32.gmra.mrb[0].mxu0 %v236
    %v306 = vpop.f32.mrb[0].mxu0
    %v307 = vadd.f32 %v21, %v306
    %v308 = vpop.f32.mrb[0].mxu0
    %309 = vdwg.mxu0
    %v310 = vsel %vm158, %v230, -inf
    %311 = vmax.xlane.f32.xlu0 %v310
    %v312 = vpop.xlane.xlu0 %311
    %v313 = vsel %vm158, %v307, -inf
    %314 = vmax.xlane.f32.xlu0 %v313
    %v315 = vpop.xlane.xlu0 %314
    %v316 = vsub.f32 %v230, %v312
    %v317 = vsub.f32 %v307, %v315
    %v318 = vmul.f32 %v316, 1.442695
    %v319 = vpow.pop %v318
    %v320 = vmul.f32 %v317, 1.442695
    %v321 = vpow.pop %v320
    %v322 = vsel %vm158, %v319, 0.0
    %323 = vadd.xlane.f32.xlu0 %v322
    %v324 = vpop.xlane.xlu0 %323
    %v325 = vsel %vm158, %v321, 0.0
    %326 = vadd.xlane.f32.xlu0 %v325
    %v327 = vpop.xlane.xlu0 %326
    %v328 = vrcp.pop %v324
    %v329 = vmul.f32 %v319, %v328
    %v330 = vrcp.pop %v327
    %v331 = vmul.f32 %v321, %v330
    %332 = vrot.lane.b32.xlu0 %v147, 64
    %v333 = vpop.permute.xlu0 %332
    %v336 = vsel %vm158, %v329, 0
    %338 = vmatprep.subr.mxu0 0.0
    %339 = vmatpush1.msra.mxu0 %v333
    %340 = vmatprep.subr.mxu0 0.0
    %341 = vmatpush1.msra.mxu0 0.0
    %342 = vmatprep.subr.mxu0 0.0
    %343 = vmatpush1.msra.mxu0 0.0
    %344 = vmatprep.subr.mxu0 0.0
    %345 = vmatpush1.msra.mxu0 0.0
    %346 = vmatprep.subr.mxu0 0.0
    %347 = vmatpush1.msra.mxu0 0.0
    %348 = vmatprep.subr.mxu0 0.0
    %349 = vmatpush1.msra.mxu0 0.0
    %350 = vmatprep.subr.mxu0 0.0
    %351 = vmatpush1.msra.mxu0 0.0
    %352 = vmatprep.subr.mxu0 0.0
    %353 = vmatpush1.msra.mxu0 0.0
    %354 = vmatprep.subr.mxu0 0.0
    %355 = vmatpush1.msra.mxu0 0.0
    %356 = vmatprep.subr.mxu0 0.0
    %357 = vmatpush1.msra.mxu0 0.0
    %358 = vmatprep.subr.mxu0 0.0
    %359 = vmatpush1.msra.mxu0 0.0
    %360 = vmatprep.subr.mxu0 0.0
    %361 = vmatpush1.msra.mxu0 0.0
    %362 = vmatprep.subr.mxu0 0.0
    %363 = vmatpush1.msra.mxu0 0.0
    %364 = vmatprep.subr.mxu0 0.0
    %365 = vmatpush1.msra.mxu0 0.0
    %366 = vmatprep.subr.mxu0 0.0
    %367 = vmatpush1.msra.mxu0 0.0
    %368 = vmatprep.subr.mxu0 0.0
    %369 = vmatpush1.msra.mxu0 0.0
    %370 = vmatprep.subr.mxu0 0.0
    %371 = vmatpush1.msra.mxu0 0.0
    %372 = vmatprep.subr.mxu0 0.0
    %373 = vmatpush1.msra.mxu0 0.0
    %374 = vmatprep.subr.mxu0 0.0
    %375 = vmatpush1.msra.mxu0 0.0
    %376 = vmatprep.subr.mxu0 0.0
    %377 = vmatpush1.msra.mxu0 0.0
    %378 = vmatprep.subr.mxu0 0.0
    %379 = vmatpush1.msra.mxu0 0.0
    %380 = vmatprep.subr.mxu0 0.0
    %381 = vmatpush1.msra.mxu0 0.0
    %382 = vmatprep.subr.mxu0 0.0
    %383 = vmatpush1.msra.mxu0 0.0
    %384 = vmatprep.subr.mxu0 0.0
    %385 = vmatpush1.msra.mxu0 0.0
    %386 = vmatprep.subr.mxu0 0.0
    %387 = vmatpush1.msra.mxu0 0.0
    %388 = vmatprep.subr.mxu0 0.0
    %389 = vmatpush1.msra.mxu0 0.0
    %390 = vmatprep.subr.mxu0 0.0
    %391 = vmatpush1.msra.mxu0 0.0
    %392 = vmatprep.subr.mxu0 0.0
    %393 = vmatpush1.msra.mxu0 0.0
    %394 = vmatprep.subr.mxu0 0.0
    %395 = vmatpush1.msra.mxu0 0.0
    %396 = vmatprep.subr.mxu0 0.0
    %397 = vmatpush1.msra.mxu0 0.0
    %398 = vmatprep.subr.mxu0 0.0
    %399 = vmatpush1.msra.mxu0 0.0
    %400 = vmatprep.subr.mxu0 0.0
    %401 = vmatpush1.msra.mxu0 0.0
    %402 = vmatprep.mubr.f32.mxu0 0.0
    %403 = vmatmul.mubr.f32.gmra.mrb[0].mxu0 %v336
    %v404 = vpop.f32.mrb[0].mxu0
    %v405 = vadd.f32 0.0, %v404
    %v406 = vpop.f32.mrb[0].mxu0
    %407 = vdwg.mxu0
    %408 = vrot.lane.b32.xlu0 %v152, 64
    %v409 = vpop.permute.xlu0 %408
    %v412 = vsel %vm158, %v331, 0
    %414 = vmatprep.subr.mxu0 0.0
    %415 = vmatpush1.msra.mxu0 %v409
    %416 = vmatprep.subr.mxu0 0.0
    %417 = vmatpush1.msra.mxu0 0.0
    %418 = vmatprep.subr.mxu0 0.0
    %419 = vmatpush1.msra.mxu0 0.0
    %420 = vmatprep.subr.mxu0 0.0
    %421 = vmatpush1.msra.mxu0 0.0
    %422 = vmatprep.subr.mxu0 0.0
    %423 = vmatpush1.msra.mxu0 0.0
    %424 = vmatprep.subr.mxu0 0.0
    %425 = vmatpush1.msra.mxu0 0.0
    %426 = vmatprep.subr.mxu0 0.0
    %427 = vmatpush1.msra.mxu0 0.0
    %428 = vmatprep.subr.mxu0 0.0
    %429 = vmatpush1.msra.mxu0 0.0
    %430 = vmatprep.subr.mxu0 0.0
    %431 = vmatpush1.msra.mxu0 0.0
    %432 = vmatprep.subr.mxu0 0.0
    %433 = vmatpush1.msra.mxu0 0.0
    %434 = vmatprep.subr.mxu0 0.0
    %435 = vmatpush1.msra.mxu0 0.0
    %436 = vmatprep.subr.mxu0 0.0
    %437 = vmatpush1.msra.mxu0 0.0
    %438 = vmatprep.subr.mxu0 0.0
    %439 = vmatpush1.msra.mxu0 0.0
    %440 = vmatprep.subr.mxu0 0.0
    %441 = vmatpush1.msra.mxu0 0.0
    %442 = vmatprep.subr.mxu0 0.0
    %443 = vmatpush1.msra.mxu0 0.0
    %444 = vmatprep.subr.mxu0 0.0
    %445 = vmatpush1.msra.mxu0 0.0
    %446 = vmatprep.subr.mxu0 0.0
    %447 = vmatpush1.msra.mxu0 0.0
    %448 = vmatprep.subr.mxu0 0.0
    %449 = vmatpush1.msra.mxu0 0.0
    %450 = vmatprep.subr.mxu0 0.0
    %451 = vmatpush1.msra.mxu0 0.0
    %452 = vmatprep.subr.mxu0 0.0
    %453 = vmatpush1.msra.mxu0 0.0
    %454 = vmatprep.subr.mxu0 0.0
    %455 = vmatpush1.msra.mxu0 0.0
    %456 = vmatprep.subr.mxu0 0.0
    %457 = vmatpush1.msra.mxu0 0.0
    %458 = vmatprep.subr.mxu0 0.0
    %459 = vmatpush1.msra.mxu0 0.0
    %460 = vmatprep.subr.mxu0 0.0
    %461 = vmatpush1.msra.mxu0 0.0
    %462 = vmatprep.subr.mxu0 0.0
    %463 = vmatpush1.msra.mxu0 0.0
    %464 = vmatprep.subr.mxu0 0.0
    %465 = vmatpush1.msra.mxu0 0.0
    %466 = vmatprep.subr.mxu0 0.0
    %467 = vmatpush1.msra.mxu0 0.0
    %468 = vmatprep.subr.mxu0 0.0
    %469 = vmatpush1.msra.mxu0 0.0
    %470 = vmatprep.subr.mxu0 0.0
    %471 = vmatpush1.msra.mxu0 0.0
    %472 = vmatprep.subr.mxu0 0.0
    %473 = vmatpush1.msra.mxu0 0.0
    %474 = vmatprep.subr.mxu0 0.0
    %475 = vmatpush1.msra.mxu0 0.0
    %476 = vmatprep.subr.mxu0 0.0
    %477 = vmatpush1.msra.mxu0 0.0
    %478 = vmatprep.mubr.f32.mxu0 0.0
    %479 = vmatmul.mubr.f32.gmra.mrb[0].mxu0 %v412
    %v480 = vpop.f32.mrb[0].mxu0
    %v481 = vadd.f32 0.0, %v480
    %v482 = vpop.f32.mrb[0].mxu0
    %483 = vdwg.mxu0
    %484 = vrot.lane.b32.xlu0 %v147, 120
    %v485 = vpop.permute.xlu0 %484
    %486 = vrot.lane.b32.xlu0 %v147, 88
    %v487 = vpop.permute.xlu0 %486
    %v488 = vsel %vm158, %v485, 0
    %v490 = vsel %vm158, %v487, 0
    %492 = vmatprep.subr.mxu0 0.0
    %493 = vmatpush1.xpose.msra.mxu0 %v490
    %494 = vmatprep.subr.mxu0 0.0
    %495 = vmatpush1.xpose.msra.mxu0 0.0
    %496 = vmatprep.subr.mxu0 0.0
    %497 = vmatpush1.xpose.msra.mxu0 0.0
    %498 = vmatprep.subr.mxu0 0.0
    %499 = vmatpush1.xpose.msra.mxu0 0.0
    %500 = vmatprep.subr.mxu0 0.0
    %501 = vmatpush1.xpose.msra.mxu0 0.0
    %502 = vmatprep.subr.mxu0 0.0
    %503 = vmatpush1.xpose.msra.mxu0 0.0
    %504 = vmatprep.subr.mxu0 0.0
    %505 = vmatpush1.xpose.msra.mxu0 0.0
    %506 = vmatprep.subr.mxu0 0.0
    %507 = vmatpush1.xpose.msra.mxu0 0.0
    %508 = vmatprep.subr.mxu0 0.0
    %509 = vmatpush1.xpose.msra.mxu0 0.0
    %510 = vmatprep.subr.mxu0 0.0
    %511 = vmatpush1.xpose.msra.mxu0 0.0
    %512 = vmatprep.subr.mxu0 0.0
    %513 = vmatpush1.xpose.msra.mxu0 0.0
    %514 = vmatprep.subr.mxu0 0.0
    %515 = vmatpush1.xpose.msra.mxu0 0.0
    %516 = vmatprep.subr.mxu0 0.0
    %517 = vmatpush1.xpose.msra.mxu0 0.0
    %518 = vmatprep.subr.mxu0 0.0
    %519 = vmatpush1.xpose.msra.mxu0 0.0
    %520 = vmatprep.subr.mxu0 0.0
    %521 = vmatpush1.xpose.msra.mxu0 0.0
    %522 = vmatprep.subr.mxu0 0.0
    %523 = vmatpush1.xpose.msra.mxu0 0.0
    %524 = vmatprep.subr.mxu0 0.0
    %525 = vmatpush1.xpose.msra.mxu0 0.0
    %526 = vmatprep.subr.mxu0 0.0
    %527 = vmatpush1.xpose.msra.mxu0 0.0
    %528 = vmatprep.subr.mxu0 0.0
    %529 = vmatpush1.xpose.msra.mxu0 0.0
    %530 = vmatprep.subr.mxu0 0.0
    %531 = vmatpush1.xpose.msra.mxu0 0.0
    %532 = vmatprep.subr.mxu0 0.0
    %533 = vmatpush1.xpose.msra.mxu0 0.0
    %534 = vmatprep.subr.mxu0 0.0
    %535 = vmatpush1.xpose.msra.mxu0 0.0
    %536 = vmatprep.subr.mxu0 0.0
    %537 = vmatpush1.xpose.msra.mxu0 0.0
    %538 = vmatprep.subr.mxu0 0.0
    %539 = vmatpush1.xpose.msra.mxu0 0.0
    %540 = vmatprep.subr.mxu0 0.0
    %541 = vmatpush1.xpose.msra.mxu0 0.0
    %542 = vmatprep.subr.mxu0 0.0
    %543 = vmatpush1.xpose.msra.mxu0 0.0
    %544 = vmatprep.subr.mxu0 0.0
    %545 = vmatpush1.xpose.msra.mxu0 0.0
    %546 = vmatprep.subr.mxu0 0.0
    %547 = vmatpush1.xpose.msra.mxu0 0.0
    %548 = vmatprep.subr.mxu0 0.0
    %549 = vmatpush1.xpose.msra.mxu0 0.0
    %550 = vmatprep.subr.mxu0 0.0
    %551 = vmatpush1.xpose.msra.mxu0 0.0
    %552 = vmatprep.subr.mxu0 0.0
    %553 = vmatpush1.xpose.msra.mxu0 0.0
    %554 = vmatprep.subr.mxu0 0.0
    %555 = vmatpush1.xpose.msra.mxu0 0.0
    %556 = vmatprep.mubr.f32.mxu0 0.0
    %557 = vmatmul.mubr.f32.gmra.mrb[0].mxu0 %v488
    %v558 = vpop.f32.mrb[0].mxu0
    %v559 = vadd.f32 %v18, %v558
    %v560 = vpop.f32.mrb[0].mxu0
    %561 = vdwg.mxu0
    %562 = vrot.lane.b32.xlu0 %v152, 120
    %v563 = vpop.permute.xlu0 %562
    %564 = vrot.lane.b32.xlu0 %v152, 88
    %v565 = vpop.permute.xlu0 %564
    %v566 = vsel %vm158, %v563, 0
    %v568 = vsel %vm158, %v565, 0
    %570 = vmatprep.subr.mxu0 0.0
    %571 = vmatpush1.xpose.msra.mxu0 %v568
    %572 = vmatprep.subr.mxu0 0.0
    %573 = vmatpush1.xpose.msra.mxu0 0.0
    %574 = vmatprep.subr.mxu0 0.0
    %575 = vmatpush1.xpose.msra.mxu0 0.0
    %576 = vmatprep.subr.mxu0 0.0
    %577 = vmatpush1.xpose.msra.mxu0 0.0
    %578 = vmatprep.subr.mxu0 0.0
    %579 = vmatpush1.xpose.msra.mxu0 0.0
    %580 = vmatprep.subr.mxu0 0.0
    %581 = vmatpush1.xpose.msra.mxu0 0.0
    %582 = vmatprep.subr.mxu0 0.0
    %583 = vmatpush1.xpose.msra.mxu0 0.0
    %584 = vmatprep.subr.mxu0 0.0
    %585 = vmatpush1.xpose.msra.mxu0 0.0
    %586 = vmatprep.subr.mxu0 0.0
    %587 = vmatpush1.xpose.msra.mxu0 0.0
    %588 = vmatprep.subr.mxu0 0.0
    %589 = vmatpush1.xpose.msra.mxu0 0.0
    %590 = vmatprep.subr.mxu0 0.0
    %591 = vmatpush1.xpose.msra.mxu0 0.0
    %592 = vmatprep.subr.mxu0 0.0
    %593 = vmatpush1.xpose.msra.mxu0 0.0
    %594 = vmatprep.subr.mxu0 0.0
    %595 = vmatpush1.xpose.msra.mxu0 0.0
    %596 = vmatprep.subr.mxu0 0.0
    %597 = vmatpush1.xpose.msra.mxu0 0.0
    %598 = vmatprep.subr.mxu0 0.0
    %599 = vmatpush1.xpose.msra.mxu0 0.0
    %600 = vmatprep.subr.mxu0 0.0
    %601 = vmatpush1.xpose.msra.mxu0 0.0
    %602 = vmatprep.subr.mxu0 0.0
    %603 = vmatpush1.xpose.msra.mxu0 0.0
    %604 = vmatprep.subr.mxu0 0.0
    %605 = vmatpush1.xpose.msra.mxu0 0.0
    %606 = vmatprep.subr.mxu0 0.0
    %607 = vmatpush1.xpose.msra.mxu0 0.0
    %608 = vmatprep.subr.mxu0 0.0
    %609 = vmatpush1.xpose.msra.mxu0 0.0
    %610 = vmatprep.subr.mxu0 0.0
    %611 = vmatpush1.xpose.msra.mxu0 0.0
    %612 = vmatprep.subr.mxu0 0.0
    %613 = vmatpush1.xpose.msra.mxu0 0.0
    %614 = vmatprep.subr.mxu0 0.0
    %615 = vmatpush1.xpose.msra.mxu0 0.0
    %616 = vmatprep.subr.mxu0 0.0
    %617 = vmatpush1.xpose.msra.mxu0 0.0
    %618 = vmatprep.subr.mxu0 0.0
    %619 = vmatpush1.xpose.msra.mxu0 0.0
    %620 = vmatprep.subr.mxu0 0.0
    %621 = vmatpush1.xpose.msra.mxu0 0.0
    %622 = vmatprep.subr.mxu0 0.0
    %623 = vmatpush1.xpose.msra.mxu0 0.0
    %624 = vmatprep.subr.mxu0 0.0
    %625 = vmatpush1.xpose.msra.mxu0 0.0
    %626 = vmatprep.subr.mxu0 0.0
    %627 = vmatpush1.xpose.msra.mxu0 0.0
    %628 = vmatprep.subr.mxu0 0.0
    %629 = vmatpush1.xpose.msra.mxu0 0.0
    %630 = vmatprep.subr.mxu0 0.0
    %631 = vmatpush1.xpose.msra.mxu0 0.0
    %632 = vmatprep.subr.mxu0 0.0
    %633 = vmatpush1.xpose.msra.mxu0 0.0
    %634 = vmatprep.mubr.f32.mxu0 0.0
    %635 = vmatmul.mubr.f32.gmra.mrb[0].mxu0 %v566
    %v636 = vpop.f32.mrb[0].mxu0
    %v637 = vadd.f32 %v22, %v636
    %v638 = vpop.f32.mrb[0].mxu0
    %639 = vdwg.mxu0
    %v640 = vsel %vm158, %v559, -inf
    %641 = vmax.xlane.f32.xlu0 %v640
    %v642 = vpop.xlane.xlu0 %641
    %v643 = vsel %vm158, %v637, -inf
    %644 = vmax.xlane.f32.xlu0 %v643
    %v645 = vpop.xlane.xlu0 %644
    %v646 = vsub.f32 %v559, %v642
    %v647 = vsub.f32 %v637, %v645
    %v648 = vmul.f32 %v646, 1.442695
    %v649 = vpow.pop %v648
    %v650 = vmul.f32 %v647, 1.442695
    %v651 = vpow.pop %v650
    %v652 = vsel %vm158, %v649, 0.0
    %653 = vadd.xlane.f32.xlu0 %v652
    %v654 = vpop.xlane.xlu0 %653
    %v655 = vsel %vm158, %v651, 0.0
    %656 = vadd.xlane.f32.xlu0 %v655
    %v657 = vpop.xlane.xlu0 %656
    %v658 = vrcp.pop %v654
    %v659 = vmul.f32 %v649, %v658
    %v660 = vrcp.pop %v657
    %v661 = vmul.f32 %v651, %v660
    %662 = vrot.lane.b32.xlu0 %v147, 56
    %v663 = vpop.permute.xlu0 %662
    %v666 = vsel %vm158, %v659, 0
    %668 = vmatprep.subr.mxu0 0.0
    %669 = vmatpush1.msra.mxu0 %v663
    %670 = vmatprep.subr.mxu0 0.0
    %671 = vmatpush1.msra.mxu0 0.0
    %672 = vmatprep.subr.mxu0 0.0
    %673 = vmatpush1.msra.mxu0 0.0
    %674 = vmatprep.subr.mxu0 0.0
    %675 = vmatpush1.msra.mxu0 0.0
    %676 = vmatprep.subr.mxu0 0.0
    %677 = vmatpush1.msra.mxu0 0.0
    %678 = vmatprep.subr.mxu0 0.0
    %679 = vmatpush1.msra.mxu0 0.0
    %680 = vmatprep.subr.mxu0 0.0
    %681 = vmatpush1.msra.mxu0 0.0
    %682 = vmatprep.subr.mxu0 0.0
    %683 = vmatpush1.msra.mxu0 0.0
    %684 = vmatprep.subr.mxu0 0.0
    %685 = vmatpush1.msra.mxu0 0.0
    %686 = vmatprep.subr.mxu0 0.0
    %687 = vmatpush1.msra.mxu0 0.0
    %688 = vmatprep.subr.mxu0 0.0
    %689 = vmatpush1.msra.mxu0 0.0
    %690 = vmatprep.subr.mxu0 0.0
    %691 = vmatpush1.msra.mxu0 0.0
    %692 = vmatprep.subr.mxu0 0.0
    %693 = vmatpush1.msra.mxu0 0.0
    %694 = vmatprep.subr.mxu0 0.0
    %695 = vmatpush1.msra.mxu0 0.0
    %696 = vmatprep.subr.mxu0 0.0
    %697 = vmatpush1.msra.mxu0 0.0
    %698 = vmatprep.subr.mxu0 0.0
    %699 = vmatpush1.msra.mxu0 0.0
    %700 = vmatprep.subr.mxu0 0.0
    %701 = vmatpush1.msra.mxu0 0.0
    %702 = vmatprep.subr.mxu0 0.0
    %703 = vmatpush1.msra.mxu0 0.0
    %704 = vmatprep.subr.mxu0 0.0
    %705 = vmatpush1.msra.mxu0 0.0
    %706 = vmatprep.subr.mxu0 0.0
    %707 = vmatpush1.msra.mxu0 0.0
    %708 = vmatprep.subr.mxu0 0.0
    %709 = vmatpush1.msra.mxu0 0.0
    %710 = vmatprep.subr.mxu0 0.0
    %711 = vmatpush1.msra.mxu0 0.0
    %712 = vmatprep.subr.mxu0 0.0
    %713 = vmatpush1.msra.mxu0 0.0
    %714 = vmatprep.subr.mxu0 0.0
    %715 = vmatpush1.msra.mxu0 0.0
    %716 = vmatprep.subr.mxu0 0.0
    %717 = vmatpush1.msra.mxu0 0.0
    %718 = vmatprep.subr.mxu0 0.0
    %719 = vmatpush1.msra.mxu0 0.0
    %720 = vmatprep.subr.mxu0 0.0
    %721 = vmatpush1.msra.mxu0 0.0
    %722 = vmatprep.subr.mxu0 0.0
    %723 = vmatpush1.msra.mxu0 0.0
    %724 = vmatprep.subr.mxu0 0.0
    %725 = vmatpush1.msra.mxu0 0.0
    %726 = vmatprep.subr.mxu0 0.0
    %727 = vmatpush1.msra.mxu0 0.0
    %728 = vmatprep.subr.mxu0 0.0
    %729 = vmatpush1.msra.mxu0 0.0
    %730 = vmatprep.subr.mxu0 0.0
    %731 = vmatpush1.msra.mxu0 0.0
    %732 = vmatprep.mubr.f32.mxu0 0.0
    %733 = vmatmul.mubr.f32.gmra.mrb[0].mxu0 %v666
    %v734 = vpop.f32.mrb[0].mxu0
    %v735 = vadd.f32 0.0, %v734
    %v736 = vpop.f32.mrb[0].mxu0
    %737 = vdwg.mxu0
    %738 = vrot.lane.b32.xlu0 %v152, 56
    %v739 = vpop.permute.xlu0 %738
    %v742 = vsel %vm158, %v661, 0
    %744 = vmatprep.subr.mxu0 0.0
    %745 = vmatpush1.msra.mxu0 %v739
    %746 = vmatprep.subr.mxu0 0.0
    %747 = vmatpush1.msra.mxu0 0.0
    %748 = vmatprep.subr.mxu0 0.0
    %749 = vmatpush1.msra.mxu0 0.0
    %750 = vmatprep.subr.mxu0 0.0
    %751 = vmatpush1.msra.mxu0 0.0
    %752 = vmatprep.subr.mxu0 0.0
    %753 = vmatpush1.msra.mxu0 0.0
    %754 = vmatprep.subr.mxu0 0.0
    %755 = vmatpush1.msra.mxu0 0.0
    %756 = vmatprep.subr.mxu0 0.0
    %757 = vmatpush1.msra.mxu0 0.0
    %758 = vmatprep.subr.mxu0 0.0
    %759 = vmatpush1.msra.mxu0 0.0
    %760 = vmatprep.subr.mxu0 0.0
    %761 = vmatpush1.msra.mxu0 0.0
    %762 = vmatprep.subr.mxu0 0.0
    %763 = vmatpush1.msra.mxu0 0.0
    %764 = vmatprep.subr.mxu0 0.0
    %765 = vmatpush1.msra.mxu0 0.0
    %766 = vmatprep.subr.mxu0 0.0
    %767 = vmatpush1.msra.mxu0 0.0
    %768 = vmatprep.subr.mxu0 0.0
    %769 = vmatpush1.msra.mxu0 0.0
    %770 = vmatprep.subr.mxu0 0.0
    %771 = vmatpush1.msra.mxu0 0.0
    %772 = vmatprep.subr.mxu0 0.0
    %773 = vmatpush1.msra.mxu0 0.0
    %774 = vmatprep.subr.mxu0 0.0
    %775 = vmatpush1.msra.mxu0 0.0
    %776 = vmatprep.subr.mxu0 0.0
    %777 = vmatpush1.msra.mxu0 0.0
    %778 = vmatprep.subr.mxu0 0.0
    %779 = vmatpush1.msra.mxu0 0.0
    %780 = vmatprep.subr.mxu0 0.0
    %781 = vmatpush1.msra.mxu0 0.0
    %782 = vmatprep.subr.mxu0 0.0
    %783 = vmatpush1.msra.mxu0 0.0
    %784 = vmatprep.subr.mxu0 0.0
    %785 = vmatpush1.msra.mxu0 0.0
    %786 = vmatprep.subr.mxu0 0.0
    %787 = vmatpush1.msra.mxu0 0.0
    %788 = vmatprep.subr.mxu0 0.0
    %789 = vmatpush1.msra.mxu0 0.0
    %790 = vmatprep.subr.mxu0 0.0
    %791 = vmatpush1.msra.mxu0 0.0
    %792 = vmatprep.subr.mxu0 0.0
    %793 = vmatpush1.msra.mxu0 0.0
    %794 = vmatprep.subr.mxu0 0.0
    %795 = vmatpush1.msra.mxu0 0.0
    %796 = vmatprep.subr.mxu0 0.0
    %797 = vmatpush1.msra.mxu0 0.0
    %798 = vmatprep.subr.mxu0 0.0
    %799 = vmatpush1.msra.mxu0 0.0
    %800 = vmatprep.subr.mxu0 0.0
    %801 = vmatpush1.msra.mxu0 0.0
    %802 = vmatprep.subr.mxu0 0.0
    %803 = vmatpush1.msra.mxu0 0.0
    %804 = vmatprep.subr.mxu0 0.0
    %805 = vmatpush1.msra.mxu0 0.0
    %806 = vmatprep.subr.mxu0 0.0
    %807 = vmatpush1.msra.mxu0 0.0
    %808 = vmatprep.mubr.f32.mxu0 0.0
    %809 = vmatmul.mubr.f32.gmra.mrb[0].mxu0 %v742
    %v810 = vpop.f32.mrb[0].mxu0
    %v811 = vadd.f32 0.0, %v810
    %v812 = vpop.f32.mrb[0].mxu0
    %813 = vdwg.mxu0
    %814 = vrot.lane.b32.xlu0 %v147, 112
    %v815 = vpop.permute.xlu0 %814
    %816 = vrot.lane.b32.xlu0 %v147, 80
    %v817 = vpop.permute.xlu0 %816
    %v818 = vsel %vm158, %v815, 0
    %v820 = vsel %vm158, %v817, 0
    %822 = vmatprep.subr.mxu0 0.0
    %823 = vmatpush1.xpose.msra.mxu0 %v820
    %824 = vmatprep.subr.mxu0 0.0
    %825 = vmatpush1.xpose.msra.mxu0 0.0
    %826 = vmatprep.subr.mxu0 0.0
    %827 = vmatpush1.xpose.msra.mxu0 0.0
    %828 = vmatprep.subr.mxu0 0.0
    %829 = vmatpush1.xpose.msra.mxu0 0.0
    %830 = vmatprep.subr.mxu0 0.0
    %831 = vmatpush1.xpose.msra.mxu0 0.0
    %832 = vmatprep.subr.mxu0 0.0
    %833 = vmatpush1.xpose.msra.mxu0 0.0
    %834 = vmatprep.subr.mxu0 0.0
    %835 = vmatpush1.xpose.msra.mxu0 0.0
    %836 = vmatprep.subr.mxu0 0.0
    %837 = vmatpush1.xpose.msra.mxu0 0.0
    %838 = vmatprep.subr.mxu0 0.0
    %839 = vmatpush1.xpose.msra.mxu0 0.0
    %840 = vmatprep.subr.mxu0 0.0
    %841 = vmatpush1.xpose.msra.mxu0 0.0
    %842 = vmatprep.subr.mxu0 0.0
    %843 = vmatpush1.xpose.msra.mxu0 0.0
    %844 = vmatprep.subr.mxu0 0.0
    %845 = vmatpush1.xpose.msra.mxu0 0.0
    %846 = vmatprep.subr.mxu0 0.0
    %847 = vmatpush1.xpose.msra.mxu0 0.0
    %848 = vmatprep.subr.mxu0 0.0
    %849 = vmatpush1.xpose.msra.mxu0 0.0
    %850 = vmatprep.subr.mxu0 0.0
    %851 = vmatpush1.xpose.msra.mxu0 0.0
    %852 = vmatprep.subr.mxu0 0.0
    %853 = vmatpush1.xpose.msra.mxu0 0.0
    %854 = vmatprep.subr.mxu0 0.0
    %855 = vmatpush1.xpose.msra.mxu0 0.0
    %856 = vmatprep.subr.mxu0 0.0
    %857 = vmatpush1.xpose.msra.mxu0 0.0
    %858 = vmatprep.subr.mxu0 0.0
    %859 = vmatpush1.xpose.msra.mxu0 0.0
    %860 = vmatprep.subr.mxu0 0.0
    %861 = vmatpush1.xpose.msra.mxu0 0.0
    %862 = vmatprep.subr.mxu0 0.0
    %863 = vmatpush1.xpose.msra.mxu0 0.0
    %864 = vmatprep.subr.mxu0 0.0
    %865 = vmatpush1.xpose.msra.mxu0 0.0
    %866 = vmatprep.subr.mxu0 0.0
    %867 = vmatpush1.xpose.msra.mxu0 0.0
    %868 = vmatprep.subr.mxu0 0.0
    %869 = vmatpush1.xpose.msra.mxu0 0.0
    %870 = vmatprep.subr.mxu0 0.0
    %871 = vmatpush1.xpose.msra.mxu0 0.0
    %872 = vmatprep.subr.mxu0 0.0
    %873 = vmatpush1.xpose.msra.mxu0 0.0
    %874 = vmatprep.subr.mxu0 0.0
    %875 = vmatpush1.xpose.msra.mxu0 0.0
    %876 = vmatprep.subr.mxu0 0.0
    %877 = vmatpush1.xpose.msra.mxu0 0.0
    %878 = vmatprep.subr.mxu0 0.0
    %879 = vmatpush1.xpose.msra.mxu0 0.0
    %880 = vmatprep.subr.mxu0 0.0
    %881 = vmatpush1.xpose.msra.mxu0 0.0
    %882 = vmatprep.subr.mxu0 0.0
    %883 = vmatpush1.xpose.msra.mxu0 0.0
    %884 = vmatprep.subr.mxu0 0.0
    %885 = vmatpush1.xpose.msra.mxu0 0.0
    %886 = vmatprep.mubr.f32.mxu0 0.0
    %887 = vmatmul.mubr.f32.gmra.mrb[0].mxu0 %v818
    %v888 = vpop.f32.mrb[0].mxu0
    %v889 = vadd.f32 %v19, %v888
    %v890 = vpop.f32.mrb[0].mxu0
    %891 = vdwg.mxu0
    %892 = vrot.lane.b32.xlu0 %v152, 112
    %v893 = vpop.permute.xlu0 %892
    %894 = vrot.lane.b32.xlu0 %v152, 80
    %v895 = vpop.permute.xlu0 %894
    %v896 = vsel %vm158, %v893, 0
    %v898 = vsel %vm158, %v895, 0
    %900 = vmatprep.subr.mxu0 0.0
    %901 = vmatpush1.xpose.msra.mxu0 %v898
    %902 = vmatprep.subr.mxu0 0.0
    %903 = vmatpush1.xpose.msra.mxu0 0.0
    %904 = vmatprep.subr.mxu0 0.0
    %905 = vmatpush1.xpose.msra.mxu0 0.0
    %906 = vmatprep.subr.mxu0 0.0
    %907 = vmatpush1.xpose.msra.mxu0 0.0
    %908 = vmatprep.subr.mxu0 0.0
    %909 = vmatpush1.xpose.msra.mxu0 0.0
    %910 = vmatprep.subr.mxu0 0.0
    %911 = vmatpush1.xpose.msra.mxu0 0.0
    %912 = vmatprep.subr.mxu0 0.0
    %913 = vmatpush1.xpose.msra.mxu0 0.0
    %914 = vmatprep.subr.mxu0 0.0
    %915 = vmatpush1.xpose.msra.mxu0 0.0
    %916 = vmatprep.subr.mxu0 0.0
    %917 = vmatpush1.xpose.msra.mxu0 0.0
    %918 = vmatprep.subr.mxu0 0.0
    %919 = vmatpush1.xpose.msra.mxu0 0.0
    %920 = vmatprep.subr.mxu0 0.0
    %921 = vmatpush1.xpose.msra.mxu0 0.0
    %922 = vmatprep.subr.mxu0 0.0
    %923 = vmatpush1.xpose.msra.mxu0 0.0
    %924 = vmatprep.subr.mxu0 0.0
    %925 = vmatpush1.xpose.msra.mxu0 0.0
    %926 = vmatprep.subr.mxu0 0.0
    %927 = vmatpush1.xpose.msra.mxu0 0.0
    %928 = vmatprep.subr.mxu0 0.0
    %929 = vmatpush1.xpose.msra.mxu0 0.0
    %930 = vmatprep.subr.mxu0 0.0
    %931 = vmatpush1.xpose.msra.mxu0 0.0
    %932 = vmatprep.subr.mxu0 0.0
    %933 = vmatpush1.xpose.msra.mxu0 0.0
    %934 = vmatprep.subr.mxu0 0.0
    %935 = vmatpush1.xpose.msra.mxu0 0.0
    %936 = vmatprep.subr.mxu0 0.0
    %937 = vmatpush1.xpose.msra.mxu0 0.0
    %938 = vmatprep.subr.mxu0 0.0
    %939 = vmatpush1.xpose.msra.mxu0 0.0
    %940 = vmatprep.subr.mxu0 0.0
    %941 = vmatpush1.xpose.msra.mxu0 0.0
    %942 = vmatprep.subr.mxu0 0.0
    %943 = vmatpush1.xpose.msra.mxu0 0.0
    %944 = vmatprep.subr.mxu0 0.0
    %945 = vmatpush1.xpose.msra.mxu0 0.0
    %946 = vmatprep.subr.mxu0 0.0
    %947 = vmatpush1.xpose.msra.mxu0 0.0
    %948 = vmatprep.subr.mxu0 0.0
    %949 = vmatpush1.xpose.msra.mxu0 0.0
    %950 = vmatprep.subr.mxu0 0.0
    %951 = vmatpush1.xpose.msra.mxu0 0.0
    %952 = vmatprep.subr.mxu0 0.0
    %953 = vmatpush1.xpose.msra.mxu0 0.0
    %954 = vmatprep.subr.mxu0 0.0
    %955 = vmatpush1.xpose.msra.mxu0 0.0
    %956 = vmatprep.subr.mxu0 0.0
    %957 = vmatpush1.xpose.msra.mxu0 0.0
    %958 = vmatprep.subr.mxu0 0.0
    %959 = vmatpush1.xpose.msra.mxu0 0.0
    %960 = vmatprep.subr.mxu0 0.0
    %961 = vmatpush1.xpose.msra.mxu0 0.0
    %962 = vmatprep.subr.mxu0 0.0
    %963 = vmatpush1.xpose.msra.mxu0 0.0
    %964 = vmatprep.mubr.f32.mxu0 0.0
    %965 = vmatmul.mubr.f32.gmra.mrb[0].mxu0 %v896
    %v966 = vpop.f32.mrb[0].mxu0
    %v967 = vadd.f32 %v23, %v966
    %v968 = vpop.f32.mrb[0].mxu0
    %969 = vdwg.mxu0
    %v970 = vsel %vm158, %v889, -inf
    %971 = vmax.xlane.f32.xlu0 %v970
    %v972 = vpop.xlane.xlu0 %971
    %v973 = vsel %vm158, %v967, -inf
    %974 = vmax.xlane.f32.xlu0 %v973
    %v975 = vpop.xlane.xlu0 %974
    %v976 = vsub.f32 %v889, %v972
    %v977 = vsub.f32 %v967, %v975
    %v978 = vmul.f32 %v976, 1.442695
    %v979 = vpow.pop %v978
    %v980 = vmul.f32 %v977, 1.442695
    %v981 = vpow.pop %v980
    %v982 = vsel %vm158, %v979, 0.0
    %983 = vadd.xlane.f32.xlu0 %v982
    %v984 = vpop.xlane.xlu0 %983
    %v985 = vsel %vm158, %v981, 0.0
    %986 = vadd.xlane.f32.xlu0 %v985
    %v987 = vpop.xlane.xlu0 %986
    %v988 = vrcp.pop %v984
    %v989 = vmul.f32 %v979, %v988
    %v990 = vrcp.pop %v987
    %v991 = vmul.f32 %v981, %v990
    %992 = vrot.lane.b32.xlu0 %v147, 48
    %v993 = vpop.permute.xlu0 %992
    %v996 = vsel %vm158, %v989, 0
    %998 = vmatprep.subr.mxu0 0.0
    %999 = vmatpush1.msra.mxu0 %v993
    %1000 = vmatprep.subr.mxu0 0.0
    %1001 = vmatpush1.msra.mxu0 0.0
    %1002 = vmatprep.subr.mxu0 0.0
    %1003 = vmatpush1.msra.mxu0 0.0
    %1004 = vmatprep.subr.mxu0 0.0
    %1005 = vmatpush1.msra.mxu0 0.0
    %1006 = vmatprep.subr.mxu0 0.0
    %1007 = vmatpush1.msra.mxu0 0.0
    %1008 = vmatprep.subr.mxu0 0.0
    %1009 = vmatpush1.msra.mxu0 0.0
    %1010 = vmatprep.subr.mxu0 0.0
    %1011 = vmatpush1.msra.mxu0 0.0
    %1012 = vmatprep.subr.mxu0 0.0
    %1013 = vmatpush1.msra.mxu0 0.0
    %1014 = vmatprep.subr.mxu0 0.0
    %1015 = vmatpush1.msra.mxu0 0.0
    %1016 = vmatprep.subr.mxu0 0.0
    %1017 = vmatpush1.msra.mxu0 0.0
    %1018 = vmatprep.subr.mxu0 0.0
    %1019 = vmatpush1.msra.mxu0 0.0
    %1020 = vmatprep.subr.mxu0 0.0
    %1021 = vmatpush1.msra.mxu0 0.0
    %1022 = vmatprep.subr.mxu0 0.0
    %1023 = vmatpush1.msra.mxu0 0.0
    %1024 = vmatprep.subr.mxu0 0.0
    %1025 = vmatpush1.msra.mxu0 0.0
    %1026 = vmatprep.subr.mxu0 0.0
    %1027 = vmatpush1.msra.mxu0 0.0
    %1028 = vmatprep.subr.mxu0 0.0
    %1029 = vmatpush1.msra.mxu0 0.0
    %1030 = vmatprep.subr.mxu0 0.0
    %1031 = vmatpush1.msra.mxu0 0.0
    %1032 = vmatprep.subr.mxu0 0.0
    %1033 = vmatpush1.msra.mxu0 0.0
    %1034 = vmatprep.subr.mxu0 0.0
    %1035 = vmatpush1.msra.mxu0 0.0
    %1036 = vmatprep.subr.mxu0 0.0
    %1037 = vmatpush1.msra.mxu0 0.0
    %1038 = vmatprep.subr.mxu0 0.0
    %1039 = vmatpush1.msra.mxu0 0.0
    %1040 = vmatprep.subr.mxu0 0.0
    %1041 = vmatpush1.msra.mxu0 0.0
    %1042 = vmatprep.subr.mxu0 0.0
    %1043 = vmatpush1.msra.mxu0 0.0
    %1044 = vmatprep.subr.mxu0 0.0
    %1045 = vmatpush1.msra.mxu0 0.0
    %1046 = vmatprep.subr.mxu0 0.0
    %1047 = vmatpush1.msra.mxu0 0.0
    %1048 = vmatprep.subr.mxu0 0.0
    %1049 = vmatpush1.msra.mxu0 0.0
    %1050 = vmatprep.subr.mxu0 0.0
    %1051 = vmatpush1.msra.mxu0 0.0
    %1052 = vmatprep.subr.mxu0 0.0
    %1053 = vmatpush1.msra.mxu0 0.0
    %1054 = vmatprep.subr.mxu0 0.0
    %1055 = vmatpush1.msra.mxu0 0.0
    %1056 = vmatprep.subr.mxu0 0.0
    %1057 = vmatpush1.msra.mxu0 0.0
    %1058 = vmatprep.subr.mxu0 0.0
    %1059 = vmatpush1.msra.mxu0 0.0
    %1060 = vmatprep.subr.mxu0 0.0
    %1061 = vmatpush1.msra.mxu0 0.0
    %1062 = vmatprep.mubr.f32.mxu0 0.0
    %1063 = vmatmul.mubr.f32.gmra.mrb[0].mxu0 %v996
    %v1064 = vpop.f32.mrb[0].mxu0
    %v1065 = vadd.f32 0.0, %v1064
    %v1066 = vpop.f32.mrb[0].mxu0
    %1067 = vdwg.mxu0
    %1068 = vrot.lane.b32.xlu0 %v152, 48
    %v1069 = vpop.permute.xlu0 %1068
    %v1072 = vsel %vm158, %v991, 0
    %1074 = vmatprep.subr.mxu0 0.0
    %1075 = vmatpush1.msra.mxu0 %v1069
    %1076 = vmatprep.subr.mxu0 0.0
    %1077 = vmatpush1.msra.mxu0 0.0
    %1078 = vmatprep.subr.mxu0 0.0
    %1079 = vmatpush1.msra.mxu0 0.0
    %1080 = vmatprep.subr.mxu0 0.0
    %1081 = vmatpush1.msra.mxu0 0.0
    %1082 = vmatprep.subr.mxu0 0.0
    %1083 = vmatpush1.msra.mxu0 0.0
    %1084 = vmatprep.subr.mxu0 0.0
    %1085 = vmatpush1.msra.mxu0 0.0
    %1086 = vmatprep.subr.mxu0 0.0
    %1087 = vmatpush1.msra.mxu0 0.0
    %1088 = vmatprep.subr.mxu0 0.0
    %1089 = vmatpush1.msra.mxu0 0.0
    %1090 = vmatprep.subr.mxu0 0.0
    %1091 = vmatpush1.msra.mxu0 0.0
    %1092 = vmatprep.subr.mxu0 0.0
    %1093 = vmatpush1.msra.mxu0 0.0
    %1094 = vmatprep.subr.mxu0 0.0
    %1095 = vmatpush1.msra.mxu0 0.0
    %1096 = vmatprep.subr.mxu0 0.0
    %1097 = vmatpush1.msra.mxu0 0.0
    %1098 = vmatprep.subr.mxu0 0.0
    %1099 = vmatpush1.msra.mxu0 0.0
    %1100 = vmatprep.subr.mxu0 0.0
    %1101 = vmatpush1.msra.mxu0 0.0
    %1102 = vmatprep.subr.mxu0 0.0
    %1103 = vmatpush1.msra.mxu0 0.0
    %1104 = vmatprep.subr.mxu0 0.0
    %1105 = vmatpush1.msra.mxu0 0.0
    %1106 = vmatprep.subr.mxu0 0.0
    %1107 = vmatpush1.msra.mxu0 0.0
    %1108 = vmatprep.subr.mxu0 0.0
    %1109 = vmatpush1.msra.mxu0 0.0
    %1110 = vmatprep.subr.mxu0 0.0
    %1111 = vmatpush1.msra.mxu0 0.0
    %1112 = vmatprep.subr.mxu0 0.0
    %1113 = vmatpush1.msra.mxu0 0.0
    %1114 = vmatprep.subr.mxu0 0.0
    %1115 = vmatpush1.msra.mxu0 0.0
    %1116 = vmatprep.subr.mxu0 0.0
    %1117 = vmatpush1.msra.mxu0 0.0
    %1118 = vmatprep.subr.mxu0 0.0
    %1119 = vmatpush1.msra.mxu0 0.0
    %1120 = vmatprep.subr.mxu0 0.0
    %1121 = vmatpush1.msra.mxu0 0.0
    %1122 = vmatprep.subr.mxu0 0.0
    %1123 = vmatpush1.msra.mxu0 0.0
    %1124 = vmatprep.subr.mxu0 0.0
    %1125 = vmatpush1.msra.mxu0 0.0
    %1126 = vmatprep.subr.mxu0 0.0
    %1127 = vmatpush1.msra.mxu0 0.0
    %1128 = vmatprep.subr.mxu0 0.0
    %1129 = vmatpush1.msra.mxu0 0.0
    %1130 = vmatprep.subr.mxu0 0.0
    %1131 = vmatpush1.msra.mxu0 0.0
    %1132 = vmatprep.subr.mxu0 0.0
    %1133 = vmatpush1.msra.mxu0 0.0
    %1134 = vmatprep.subr.mxu0 0.0
    %1135 = vmatpush1.msra.mxu0 0.0
    %1136 = vmatprep.subr.mxu0 0.0
    %1137 = vmatpush1.msra.mxu0 0.0
    %1138 = vmatprep.mubr.f32.mxu0 0.0
    %1139 = vmatmul.mubr.f32.gmra.mrb[0].mxu0 %v1072
    %v1140 = vpop.f32.mrb[0].mxu0
    %v1141 = vadd.f32 0.0, %v1140
    %v1142 = vpop.f32.mrb[0].mxu0
    %1143 = vdwg.mxu0
    %1144 = vrot.lane.b32.xlu0 %v147, 104
    %v1145 = vpop.permute.xlu0 %1144
    %1146 = vrot.lane.b32.xlu0 %v147, 72
    %v1147 = vpop.permute.xlu0 %1146
    %v1148 = vsel %vm158, %v1145, 0
    %v1150 = vsel %vm158, %v1147, 0
    %1152 = vmatprep.subr.mxu0 0.0
    %1153 = vmatpush1.xpose.msra.mxu0 %v1150
    %1154 = vmatprep.subr.mxu0 0.0
    %1155 = vmatpush1.xpose.msra.mxu0 0.0
    %1156 = vmatprep.subr.mxu0 0.0
    %1157 = vmatpush1.xpose.msra.mxu0 0.0
    %1158 = vmatprep.subr.mxu0 0.0
    %1159 = vmatpush1.xpose.msra.mxu0 0.0
    %1160 = vmatprep.subr.mxu0 0.0
    %1161 = vmatpush1.xpose.msra.mxu0 0.0
    %1162 = vmatprep.subr.mxu0 0.0
    %1163 = vmatpush1.xpose.msra.mxu0 0.0
    %1164 = vmatprep.subr.mxu0 0.0
    %1165 = vmatpush1.xpose.msra.mxu0 0.0
    %1166 = vmatprep.subr.mxu0 0.0
    %1167 = vmatpush1.xpose.msra.mxu0 0.0
    %1168 = vmatprep.subr.mxu0 0.0
    %1169 = vmatpush1.xpose.msra.mxu0 0.0
    %1170 = vmatprep.subr.mxu0 0.0
    %1171 = vmatpush1.xpose.msra.mxu0 0.0
    %1172 = vmatprep.subr.mxu0 0.0
    %1173 = vmatpush1.xpose.msra.mxu0 0.0
    %1174 = vmatprep.subr.mxu0 0.0
    %1175 = vmatpush1.xpose.msra.mxu0 0.0
    %1176 = vmatprep.subr.mxu0 0.0
    %1177 = vmatpush1.xpose.msra.mxu0 0.0
    %1178 = vmatprep.subr.mxu0 0.0
    %1179 = vmatpush1.xpose.msra.mxu0 0.0
    %1180 = vmatprep.subr.mxu0 0.0
    %1181 = vmatpush1.xpose.msra.mxu0 0.0
    %1182 = vmatprep.subr.mxu0 0.0
    %1183 = vmatpush1.xpose.msra.mxu0 0.0
    %1184 = vmatprep.subr.mxu0 0.0
    %1185 = vmatpush1.xpose.msra.mxu0 0.0
    %1186 = vmatprep.subr.mxu0 0.0
    %1187 = vmatpush1.xpose.msra.mxu0 0.0
    %1188 = vmatprep.subr.mxu0 0.0
    %1189 = vmatpush1.xpose.msra.mxu0 0.0
    %1190 = vmatprep.subr.mxu0 0.0
    %1191 = vmatpush1.xpose.msra.mxu0 0.0
    %1192 = vmatprep.subr.mxu0 0.0
    %1193 = vmatpush1.xpose.msra.mxu0 0.0
    %1194 = vmatprep.subr.mxu0 0.0
    %1195 = vmatpush1.xpose.msra.mxu0 0.0
    %1196 = vmatprep.subr.mxu0 0.0
    %1197 = vmatpush1.xpose.msra.mxu0 0.0
    %1198 = vmatprep.subr.mxu0 0.0
    %1199 = vmatpush1.xpose.msra.mxu0 0.0
    %1200 = vmatprep.subr.mxu0 0.0
    %1201 = vmatpush1.xpose.msra.mxu0 0.0
    %1202 = vmatprep.subr.mxu0 0.0
    %1203 = vmatpush1.xpose.msra.mxu0 0.0
    %1204 = vmatprep.subr.mxu0 0.0
    %1205 = vmatpush1.xpose.msra.mxu0 0.0
    %1206 = vmatprep.subr.mxu0 0.0
    %1207 = vmatpush1.xpose.msra.mxu0 0.0
    %1208 = vmatprep.subr.mxu0 0.0
    %1209 = vmatpush1.xpose.msra.mxu0 0.0
    %1210 = vmatprep.subr.mxu0 0.0
    %1211 = vmatpush1.xpose.msra.mxu0 0.0
    %1212 = vmatprep.subr.mxu0 0.0
    %1213 = vmatpush1.xpose.msra.mxu0 0.0
    %1214 = vmatprep.subr.mxu0 0.0
    %1215 = vmatpush1.xpose.msra.mxu0 0.0
    %1216 = vmatprep.mubr.f32.mxu0 0.0
    %1217 = vmatmul.mubr.f32.gmra.mrb[0].mxu0 %v1148
    %v1218 = vpop.f32.mrb[0].mxu0
    %v1219 = vadd.f32 %v20, %v1218
    %v1220 = vpop.f32.mrb[0].mxu0
    %1221 = vdwg.mxu0
    %1222 = vrot.lane.b32.xlu0 %v152, 104
    %v1223 = vpop.permute.xlu0 %1222
    %1224 = vrot.lane.b32.xlu0 %v152, 72
    %v1225 = vpop.permute.xlu0 %1224
    %v1226 = vsel %vm158, %v1223, 0
    %v1228 = vsel %vm158, %v1225, 0
    %1230 = vmatprep.subr.mxu0 0.0
    %1231 = vmatpush1.xpose.msra.mxu0 %v1228
    %1232 = vmatprep.subr.mxu0 0.0
    %1233 = vmatpush1.xpose.msra.mxu0 0.0
    %1234 = vmatprep.subr.mxu0 0.0
    %1235 = vmatpush1.xpose.msra.mxu0 0.0
    %1236 = vmatprep.subr.mxu0 0.0
    %1237 = vmatpush1.xpose.msra.mxu0 0.0
    %1238 = vmatprep.subr.mxu0 0.0
    %1239 = vmatpush1.xpose.msra.mxu0 0.0
    %1240 = vmatprep.subr.mxu0 0.0
    %1241 = vmatpush1.xpose.msra.mxu0 0.0
    %1242 = vmatprep.subr.mxu0 0.0
    %1243 = vmatpush1.xpose.msra.mxu0 0.0
    %1244 = vmatprep.subr.mxu0 0.0
    %1245 = vmatpush1.xpose.msra.mxu0 0.0
    %1246 = vmatprep.subr.mxu0 0.0
    %1247 = vmatpush1.xpose.msra.mxu0 0.0
    %1248 = vmatprep.subr.mxu0 0.0
    %1249 = vmatpush1.xpose.msra.mxu0 0.0
    %1250 = vmatprep.subr.mxu0 0.0
    %1251 = vmatpush1.xpose.msra.mxu0 0.0
    %1252 = vmatprep.subr.mxu0 0.0
    %1253 = vmatpush1.xpose.msra.mxu0 0.0
    %1254 = vmatprep.subr.mxu0 0.0
    %1255 = vmatpush1.xpose.msra.mxu0 0.0
    %1256 = vmatprep.subr.mxu0 0.0
    %1257 = vmatpush1.xpose.msra.mxu0 0.0
    %1258 = vmatprep.subr.mxu0 0.0
    %1259 = vmatpush1.xpose.msra.mxu0 0.0
    %1260 = vmatprep.subr.mxu0 0.0
    %1261 = vmatpush1.xpose.msra.mxu0 0.0
    %1262 = vmatprep.subr.mxu0 0.0
    %1263 = vmatpush1.xpose.msra.mxu0 0.0
    %1264 = vmatprep.subr.mxu0 0.0
    %1265 = vmatpush1.xpose.msra.mxu0 0.0
    %1266 = vmatprep.subr.mxu0 0.0
    %1267 = vmatpush1.xpose.msra.mxu0 0.0
    %1268 = vmatprep.subr.mxu0 0.0
    %1269 = vmatpush1.xpose.msra.mxu0 0.0
    %1270 = vmatprep.subr.mxu0 0.0
    %1271 = vmatpush1.xpose.msra.mxu0 0.0
    %1272 = vmatprep.subr.mxu0 0.0
    %1273 = vmatpush1.xpose.msra.mxu0 0.0
    %1274 = vmatprep.subr.mxu0 0.0
    %1275 = vmatpush1.xpose.msra.mxu0 0.0
    %1276 = vmatprep.subr.mxu0 0.0
    %1277 = vmatpush1.xpose.msra.mxu0 0.0
    %1278 = vmatprep.subr.mxu0 0.0
    %1279 = vmatpush1.xpose.msra.mxu0 0.0
    %1280 = vmatprep.subr.mxu0 0.0
    %1281 = vmatpush1.xpose.msra.mxu0 0.0
    %1282 = vmatprep.subr.mxu0 0.0
    %1283 = vmatpush1.xpose.msra.mxu0 0.0
    %1284 = vmatprep.subr.mxu0 0.0
    %1285 = vmatpush1.xpose.msra.mxu0 0.0
    %1286 = vmatprep.subr.mxu0 0.0
    %1287 = vmatpush1.xpose.msra.mxu0 0.0
    %1288 = vmatprep.subr.mxu0 0.0
    %1289 = vmatpush1.xpose.msra.mxu0 0.0
    %1290 = vmatprep.subr.mxu0 0.0
    %1291 = vmatpush1.xpose.msra.mxu0 0.0
    %1292 = vmatprep.subr.mxu0 0.0
    %1293 = vmatpush1.xpose.msra.mxu0 0.0
    %1294 = vmatprep.mubr.f32.mxu0 0.0
    %1295 = vmatmul.mubr.f32.gmra.mrb[0].mxu0 %v1226
    %v1296 = vpop.f32.mrb[0].mxu0
    %v1297 = vadd.f32 %v24, %v1296
    %v1298 = vpop.f32.mrb[0].mxu0
    %1299 = vdwg.mxu0
    %v1300 = vsel %vm158, %v1219, -inf
    %1301 = vmax.xlane.f32.xlu0 %v1300
    %v1302 = vpop.xlane.xlu0 %1301
    %v1303 = vsel %vm158, %v1297, -inf
    %1304 = vmax.xlane.f32.xlu0 %v1303
    %v1305 = vpop.xlane.xlu0 %1304
    %v1306 = vsub.f32 %v1219, %v1302
    %v1307 = vsub.f32 %v1297, %v1305
    %v1308 = vmul.f32 %v1306, 1.442695
    %v1309 = vpow.pop %v1308
    %v1310 = vmul.f32 %v1307, 1.442695
    %v1311 = vpow.pop %v1310
    %v1312 = vsel %vm158, %v1309, 0.0
    %1313 = vadd.xlane.f32.xlu0 %v1312
    %v1314 = vpop.xlane.xlu0 %1313
    %v1315 = vsel %vm158, %v1311, 0.0
    %1316 = vadd.xlane.f32.xlu0 %v1315
    %v1317 = vpop.xlane.xlu0 %1316
    %v1318 = vrcp.pop %v1314
    %v1319 = vmul.f32 %v1309, %v1318
    %v1320 = vrcp.pop %v1317
    %v1321 = vmul.f32 %v1311, %v1320
    %1322 = vrot.lane.b32.xlu0 %v147, 40
    %v1323 = vpop.permute.xlu0 %1322
    %v1326 = vsel %vm158, %v1319, 0
    %1328 = vmatprep.subr.mxu0 0.0
    %1329 = vmatpush1.msra.mxu0 %v1323
    %1330 = vmatprep.subr.mxu0 0.0
    %1331 = vmatpush1.msra.mxu0 0.0
    %1332 = vmatprep.subr.mxu0 0.0
    %1333 = vmatpush1.msra.mxu0 0.0
    %1334 = vmatprep.subr.mxu0 0.0
    %1335 = vmatpush1.msra.mxu0 0.0
    %1336 = vmatprep.subr.mxu0 0.0
    %1337 = vmatpush1.msra.mxu0 0.0
    %1338 = vmatprep.subr.mxu0 0.0
    %1339 = vmatpush1.msra.mxu0 0.0
    %1340 = vmatprep.subr.mxu0 0.0
    %1341 = vmatpush1.msra.mxu0 0.0
    %1342 = vmatprep.subr.mxu0 0.0
    %1343 = vmatpush1.msra.mxu0 0.0
    %1344 = vmatprep.subr.mxu0 0.0
    %1345 = vmatpush1.msra.mxu0 0.0
    %1346 = vmatprep.subr.mxu0 0.0
    %1347 = vmatpush1.msra.mxu0 0.0
    %1348 = vmatprep.subr.mxu0 0.0
    %1349 = vmatpush1.msra.mxu0 0.0
    %1350 = vmatprep.subr.mxu0 0.0
    %1351 = vmatpush1.msra.mxu0 0.0
    %1352 = vmatprep.subr.mxu0 0.0
    %1353 = vmatpush1.msra.mxu0 0.0
    %1354 = vmatprep.subr.mxu0 0.0
    %1355 = vmatpush1.msra.mxu0 0.0
    %1356 = vmatprep.subr.mxu0 0.0
    %1357 = vmatpush1.msra.mxu0 0.0
    %1358 = vmatprep.subr.mxu0 0.0
    %1359 = vmatpush1.msra.mxu0 0.0
    %1360 = vmatprep.subr.mxu0 0.0
    %1361 = vmatpush1.msra.mxu0 0.0
    %1362 = vmatprep.subr.mxu0 0.0
    %1363 = vmatpush1.msra.mxu0 0.0
    %1364 = vmatprep.subr.mxu0 0.0
    %1365 = vmatpush1.msra.mxu0 0.0
    %1366 = vmatprep.subr.mxu0 0.0
    %1367 = vmatpush1.msra.mxu0 0.0
    %1368 = vmatprep.subr.mxu0 0.0
    %1369 = vmatpush1.msra.mxu0 0.0
    %1370 = vmatprep.subr.mxu0 0.0
    %1371 = vmatpush1.msra.mxu0 0.0
    %1372 = vmatprep.subr.mxu0 0.0
    %1373 = vmatpush1.msra.mxu0 0.0
    %1374 = vmatprep.subr.mxu0 0.0
    %1375 = vmatpush1.msra.mxu0 0.0
    %1376 = vmatprep.subr.mxu0 0.0
    %1377 = vmatpush1.msra.mxu0 0.0
    %1378 = vmatprep.subr.mxu0 0.0
    %1379 = vmatpush1.msra.mxu0 0.0
    %1380 = vmatprep.subr.mxu0 0.0
    %1381 = vmatpush1.msra.mxu0 0.0
    %1382 = vmatprep.subr.mxu0 0.0
    %1383 = vmatpush1.msra.mxu0 0.0
    %1384 = vmatprep.subr.mxu0 0.0
    %1385 = vmatpush1.msra.mxu0 0.0
    %1386 = vmatprep.subr.mxu0 0.0
    %1387 = vmatpush1.msra.mxu0 0.0
    %1388 = vmatprep.subr.mxu0 0.0
    %1389 = vmatpush1.msra.mxu0 0.0
    %1390 = vmatprep.subr.mxu0 0.0
    %1391 = vmatpush1.msra.mxu0 0.0
    %1392 = vmatprep.mubr.f32.mxu0 0.0
    %1393 = vmatmul.mubr.f32.gmra.mrb[0].mxu0 %v1326
    %v1394 = vpop.f32.mrb[0].mxu0
    %v1395 = vadd.f32 0.0, %v1394
    %v1396 = vpop.f32.mrb[0].mxu0
    %1397 = vdwg.mxu0
    %1398 = vrot.lane.b32.xlu0 %v152, 40
    %v1399 = vpop.permute.xlu0 %1398
    %v1402 = vsel %vm158, %v1321, 0
    %1404 = vmatprep.subr.mxu0 0.0
    %1405 = vmatpush1.msra.mxu0 %v1399
    %1406 = vmatprep.subr.mxu0 0.0
    %1407 = vmatpush1.msra.mxu0 0.0
    %1408 = vmatprep.subr.mxu0 0.0
    %1409 = vmatpush1.msra.mxu0 0.0
    %1410 = vmatprep.subr.mxu0 0.0
    %1411 = vmatpush1.msra.mxu0 0.0
    %1412 = vmatprep.subr.mxu0 0.0
    %1413 = vmatpush1.msra.mxu0 0.0
    %1414 = vmatprep.subr.mxu0 0.0
    %1415 = vmatpush1.msra.mxu0 0.0
    %1416 = vmatprep.subr.mxu0 0.0
    %1417 = vmatpush1.msra.mxu0 0.0
    %1418 = vmatprep.subr.mxu0 0.0
    %1419 = vmatpush1.msra.mxu0 0.0
    %1420 = vmatprep.subr.mxu0 0.0
    %1421 = vmatpush1.msra.mxu0 0.0
    %1422 = vmatprep.subr.mxu0 0.0
    %1423 = vmatpush1.msra.mxu0 0.0
    %1424 = vmatprep.subr.mxu0 0.0
    %1425 = vmatpush1.msra.mxu0 0.0
    %1426 = vmatprep.subr.mxu0 0.0
    %1427 = vmatpush1.msra.mxu0 0.0
    %1428 = vmatprep.subr.mxu0 0.0
    %1429 = vmatpush1.msra.mxu0 0.0
    %1430 = vmatprep.subr.mxu0 0.0
    %1431 = vmatpush1.msra.mxu0 0.0
    %1432 = vmatprep.subr.mxu0 0.0
    %1433 = vmatpush1.msra.mxu0 0.0
    %1434 = vmatprep.subr.mxu0 0.0
    %1435 = vmatpush1.msra.mxu0 0.0
    %1436 = vmatprep.subr.mxu0 0.0
    %1437 = vmatpush1.msra.mxu0 0.0
    %1438 = vmatprep.subr.mxu0 0.0
    %1439 = vmatpush1.msra.mxu0 0.0
    %1440 = vmatprep.subr.mxu0 0.0
    %1441 = vmatpush1.msra.mxu0 0.0
    %1442 = vmatprep.subr.mxu0 0.0
    %1443 = vmatpush1.msra.mxu0 0.0
    %1444 = vmatprep.subr.mxu0 0.0
    %1445 = vmatpush1.msra.mxu0 0.0
    %1446 = vmatprep.subr.mxu0 0.0
    %1447 = vmatpush1.msra.mxu0 0.0
    %1448 = vmatprep.subr.mxu0 0.0
    %1449 = vmatpush1.msra.mxu0 0.0
    %1450 = vmatprep.subr.mxu0 0.0
    %1451 = vmatpush1.msra.mxu0 0.0
    %1452 = vmatprep.subr.mxu0 0.0
    %1453 = vmatpush1.msra.mxu0 0.0
    %1454 = vmatprep.subr.mxu0 0.0
    %1455 = vmatpush1.msra.mxu0 0.0
    %1456 = vmatprep.subr.mxu0 0.0
    %1457 = vmatpush1.msra.mxu0 0.0
    %1458 = vmatprep.subr.mxu0 0.0
    %1459 = vmatpush1.msra.mxu0 0.0
    %1460 = vmatprep.subr.mxu0 0.0
    %1461 = vmatpush1.msra.mxu0 0.0
    %1462 = vmatprep.subr.mxu0 0.0
    %1463 = vmatpush1.msra.mxu0 0.0
    %1464 = vmatprep.subr.mxu0 0.0
    %1465 = vmatpush1.msra.mxu0 0.0
    %1466 = vmatprep.subr.mxu0 0.0
    %1467 = vmatpush1.msra.mxu0 0.0
    %1468 = vmatprep.mubr.f32.mxu0 0.0
    %1469 = vmatmul.mubr.f32.gmra.mrb[0].mxu0 %v1402
    %v1470 = vpop.f32.mrb[0].mxu0
    %v1471 = vadd.f32 0.0, %v1470
    %v1472 = vpop.f32.mrb[0].mxu0
    %1473 = vdwg.mxu0
    %1476 = vrot.lane.b32.xlu0 %v735, 8
    %v1477 = vpop.permute.xlu0 %1476
    %1478 = vrot.lane.b32.xlu0 %v811, 8
    %v1479 = vpop.permute.xlu0 %1478
    %1484 = vrot.lane.b32.xlu0 %v1065, 16
    %v1485 = vpop.permute.xlu0 %1484
    %1486 = vrot.lane.b32.xlu0 %v1141, 16
    %v1487 = vpop.permute.xlu0 %1486
    %1492 = vrot.lane.b32.xlu0 %v1395, 24
    %v1493 = vpop.permute.xlu0 %1492
    %1494 = vrot.lane.b32.xlu0 %v1471, 24
    %v1495 = vpop.permute.xlu0 %1494
    %v1498 = vsel %vm158, %v405, %v1477
    %v1499 = vsel %vm158, %v481, %v1479
    %vm1500 = vcmask 130048
    %v1501 = vsel %vm1500, %v1498, %v1485
    %v1502 = vsel %vm1500, %v1499, %v1487
    %vm1503 = vcmask 195584
    %v1504 = vsel %vm1503, %v1501, %v1493
    %v1505 = vsel %vm1503, %v1502, %v1495
    %v1506 = vld [vmem:[%s2 + $0x20] sm:$0xff]
    %v1507 = vld [vmem:[%s2 + $0x28] sm:$0xff]
    %v1508 = vld [vmem:[%s2 + $0x30] sm:$0xff]
    %v1509 = vld [vmem:[%s2 + $0x38] sm:$0xff]
    %v1511 = vsel %vm26, %v1504, 0
    %v1514 = vsel %vm26, %v1505, 0
    %1516 = vmatprep.subr.mxu0 0.0
    %1517 = vmatpush1.msra.mxu0 %v1506
    %1518 = vmatprep.subr.mxu0 0.0
    %1519 = vmatpush1.msra.mxu0 %v1507
    %1520 = vmatprep.subr.mxu0 0.0
    %1521 = vmatpush1.msra.mxu0 %v1508
    %1522 = vmatprep.subr.mxu0 0.0
    %1523 = vmatpush1.msra.mxu0 %v1509
    %1524 = vmatprep.subr.mxu0 0.0
    %1525 = vmatpush1.msra.mxu0 0.0
    %1526 = vmatprep.subr.mxu0 0.0
    %1527 = vmatpush1.msra.mxu0 0.0
    %1528 = vmatprep.subr.mxu0 0.0
    %1529 = vmatpush1.msra.mxu0 0.0
    %1530 = vmatprep.subr.mxu0 0.0
    %1531 = vmatpush1.msra.mxu0 0.0
    %1532 = vmatprep.subr.mxu0 0.0
    %1533 = vmatpush1.msra.mxu0 0.0
    %1534 = vmatprep.subr.mxu0 0.0
    %1535 = vmatpush1.msra.mxu0 0.0
    %1536 = vmatprep.subr.mxu0 0.0
    %1537 = vmatpush1.msra.mxu0 0.0
    %1538 = vmatprep.subr.mxu0 0.0
    %1539 = vmatpush1.msra.mxu0 0.0
    %1540 = vmatprep.subr.mxu0 0.0
    %1541 = vmatpush1.msra.mxu0 0.0
    %1542 = vmatprep.subr.mxu0 0.0
    %1543 = vmatpush1.msra.mxu0 0.0
    %1544 = vmatprep.subr.mxu0 0.0
    %1545 = vmatpush1.msra.mxu0 0.0
    %1546 = vmatprep.subr.mxu0 0.0
    %1547 = vmatpush1.msra.mxu0 0.0
    %1548 = vmatprep.subr.mxu0 0.0
    %1549 = vmatpush1.msra.mxu0 0.0
    %1550 = vmatprep.subr.mxu0 0.0
    %1551 = vmatpush1.msra.mxu0 0.0
    %1552 = vmatprep.subr.mxu0 0.0
    %1553 = vmatpush1.msra.mxu0 0.0
    %1554 = vmatprep.subr.mxu0 0.0
    %1555 = vmatpush1.msra.mxu0 0.0
    %1556 = vmatprep.subr.mxu0 0.0
    %1557 = vmatpush1.msra.mxu0 0.0
    %1558 = vmatprep.subr.mxu0 0.0
    %1559 = vmatpush1.msra.mxu0 0.0
    %1560 = vmatprep.subr.mxu0 0.0
    %1561 = vmatpush1.msra.mxu0 0.0
    %1562 = vmatprep.subr.mxu0 0.0
    %1563 = vmatpush1.msra.mxu0 0.0
    %1564 = vmatprep.subr.mxu0 0.0
    %1565 = vmatpush1.msra.mxu0 0.0
    %1566 = vmatprep.subr.mxu0 0.0
    %1567 = vmatpush1.msra.mxu0 0.0
    %1568 = vmatprep.subr.mxu0 0.0
    %1569 = vmatpush1.msra.mxu0 0.0
    %1570 = vmatprep.subr.mxu0 0.0
    %1571 = vmatpush1.msra.mxu0 0.0
    %1572 = vmatprep.subr.mxu0 0.0
    %1573 = vmatpush1.msra.mxu0 0.0
    %1574 = vmatprep.subr.mxu0 0.0
    %1575 = vmatpush1.msra.mxu0 0.0
    %1576 = vmatprep.subr.mxu0 0.0
    %1577 = vmatpush1.msra.mxu0 0.0
    %1578 = vmatprep.subr.mxu0 0.0
    %1579 = vmatpush1.msra.mxu0 0.0
    %1580 = vmatprep.mubr.f32.mxu0 0.0
    %1581 = vmatmul.mubr.f32.gmra.mrb[0].mxu0 %v1511
    %v1582 = vpop.f32.mrb[0].mxu0
    %v1583 = vadd.f32 0.0, %v1582
    %v1584 = vpop.f32.mrb[0].mxu0
    %1585 = vmatprep.mubr.f32.mxu0 0.0
    %1586 = vmatmul.mubr.f32.gmra.mrb[0].mxu0 %v1514
    %v1587 = vpop.f32.mrb[0].mxu0
    %v1588 = vadd.f32 0.0, %v1587
    %v1589 = vpop.f32.mrb[0].mxu0
    %1590 = vdwg.mxu0
    %v1591 = vadd.f32 %v15, %v1583
    %v1592 = vadd.f32 %v16, %v1588
    %v1593 = vlaneseq
    %v1594 = vshrl.u32 %v1593, 7
    %v1595 = vsub.s32 4, %v1594
    %v1596 = vrot.slane %v25, %v1595
    %v1597 = vadd.f32 %v1591, %v1596
    %v1598 = vadd.f32 %v1592, %v1596
    %v1599 = vsel %vm26, %v1597, 0.0
    %1600 = vadd.xlane.f32.xlu0 %v1599
    %v1601 = vpop.xlane.xlu0 %1600
    %v1602 = vsel %vm26, %v1598, 0.0
    %1603 = vadd.xlane.f32.xlu0 %v1602
    %v1604 = vpop.xlane.xlu0 %1603
    %v1605 = vmul.f32 %v1601, %v33
    %v1606 = vmul.f32 %v1604, %v33
    %v1607 = vsub.f32 %v1597, %v1605
    %v1608 = vsub.f32 %v1598, %v1606
    %v1609 = vmul.f32 %v1607, %v1607
    %v1610 = vmul.f32 %v1608, %v1608
    %v1611 = vsel %vm26, %v1609, 0.0
    %1612 = vadd.xlane.f32.xlu0 %v1611
    %v1613 = vpop.xlane.xlu0 %1612
    %v1614 = vsel %vm26, %v1610, 0.0
    %1615 = vadd.xlane.f32.xlu0 %v1614
    %v1616 = vpop.xlane.xlu0 %1615
    %v1617 = vmul.f32 %v1613, %v33
    %v1618 = vmul.f32 %v1616, %v33
    %v1619 = vadd.f32 %v1617, 1e-05
    %v1620 = vadd.f32 %v1618, 1e-05
    %v1621 = vrsqrt.pop %v1619
    %v1622 = vrsqrt.pop %v1620
    %v1623 = vmul.f32 %v1607, %v1621
    %v1624 = vmul.f32 %v1608, %v1622
    %v1625 = vlaneseq
    %v1626 = vshrl.u32 %v1625, 7
    %v1627 = vsub.s32 2, %v1626
    %v1628 = vrot.slane %v25, %v1627
    %v1629 = vmul.f32 %v1623, %v1628
    %v1630 = vmul.f32 %v1624, %v1628
    %v1631 = vlaneseq
    %v1632 = vshrl.u32 %v1631, 7
    %v1633 = vsub.s32 3, %v1632
    %v1634 = vrot.slane %v25, %v1633
    %v1635 = vadd.f32 %v1629, %v1634
    %v1636 = vadd.f32 %v1630, %v1634
    %v1637 = vld [vmem:[%s2 + $0x40] sm:$0xff]
    %v1638 = vld [vmem:[%s2 + $0x48] sm:$0xff]
    %v1639 = vld [vmem:[%s2 + $0x50] sm:$0xff]
    %v1640 = vld [vmem:[%s2 + $0x58] sm:$0xff]
    %v1641 = vld [vmem:[%s2 + $0x60] sm:$0xff]
    %v1642 = vld [vmem:[%s2 + $0x68] sm:$0xff]
    %v1643 = vld [vmem:[%s2 + $0x70] sm:$0xff]
    %v1644 = vld [vmem:[%s2 + $0x78] sm:$0xff]
    %v1645 = vld [vmem:[%s2 + $0x80] sm:$0xff]
    %v1646 = vld [vmem:[%s2 + $0x88] sm:$0xff]
    %v1647 = vld [vmem:[%s2 + $0x90] sm:$0xff]
    %v1648 = vld [vmem:[%s2 + $0x98] sm:$0xff]
    %v1649 = vlaneseq
    %v1650 = vshrl.u32 %v1649, 7
    %v1651 = vsub.s32 7, %v1650
    %v1652 = vrot.slane %v25, %v1651
    %v1654 = vsel %vm26, %v1635, 0
    %v1657 = vsel %vm26, %v1636, 0
    %1659 = vmatprep.subr.mxu0 0.0
    %1660 = vmatpush1.msra.mxu0 %v1637
    %1661 = vmatprep.subr.mxu0 0.0
    %1662 = vmatpush1.msra.mxu0 %v1638
    %1663 = vmatprep.subr.mxu0 0.0
    %1664 = vmatpush1.msra.mxu0 %v1639
    %1665 = vmatprep.subr.mxu0 0.0
    %1666 = vmatpush1.msra.mxu0 %v1640
    %1667 = vmatprep.subr.mxu0 0.0
    %1668 = vmatpush1.msra.mxu0 0.0
    %1669 = vmatprep.subr.mxu0 0.0
    %1670 = vmatpush1.msra.mxu0 0.0
    %1671 = vmatprep.subr.mxu0 0.0
    %1672 = vmatpush1.msra.mxu0 0.0
    %1673 = vmatprep.subr.mxu0 0.0
    %1674 = vmatpush1.msra.mxu0 0.0
    %1675 = vmatprep.subr.mxu0 0.0
    %1676 = vmatpush1.msra.mxu0 0.0
    %1677 = vmatprep.subr.mxu0 0.0
    %1678 = vmatpush1.msra.mxu0 0.0
    %1679 = vmatprep.subr.mxu0 0.0
    %1680 = vmatpush1.msra.mxu0 0.0
    %1681 = vmatprep.subr.mxu0 0.0
    %1682 = vmatpush1.msra.mxu0 0.0
    %1683 = vmatprep.subr.mxu0 0.0
    %1684 = vmatpush1.msra.mxu0 0.0
    %1685 = vmatprep.subr.mxu0 0.0
    %1686 = vmatpush1.msra.mxu0 0.0
    %1687 = vmatprep.subr.mxu0 0.0
    %1688 = vmatpush1.msra.mxu0 0.0
    %1689 = vmatprep.subr.mxu0 0.0
    %1690 = vmatpush1.msra.mxu0 0.0
    %1691 = vmatprep.subr.mxu0 0.0
    %1692 = vmatpush1.msra.mxu0 0.0
    %1693 = vmatprep.subr.mxu0 0.0
    %1694 = vmatpush1.msra.mxu0 0.0
    %1695 = vmatprep.subr.mxu0 0.0
    %1696 = vmatpush1.msra.mxu0 0.0
    %1697 = vmatprep.subr.mxu0 0.0
    %1698 = vmatpush1.msra.mxu0 0.0
    %1699 = vmatprep.subr.mxu0 0.0
    %1700 = vmatpush1.msra.mxu0 0.0
    %1701 = vmatprep.subr.mxu0 0.0
    %1702 = vmatpush1.msra.mxu0 0.0
    %1703 = vmatprep.subr.mxu0 0.0
    %1704 = vmatpush1.msra.mxu0 0.0
    %1705 = vmatprep.subr.mxu0 0.0
    %1706 = vmatpush1.msra.mxu0 0.0
    %1707 = vmatprep.subr.mxu0 0.0
    %1708 = vmatpush1.msra.mxu0 0.0
    %1709 = vmatprep.subr.mxu0 0.0
    %1710 = vmatpush1.msra.mxu0 0.0
    %1711 = vmatprep.subr.mxu0 0.0
    %1712 = vmatpush1.msra.mxu0 0.0
    %1713 = vmatprep.subr.mxu0 0.0
    %1714 = vmatpush1.msra.mxu0 0.0
    %1715 = vmatprep.subr.mxu0 0.0
    %1716 = vmatpush1.msra.mxu0 0.0
    %1717 = vmatprep.subr.mxu0 0.0
    %1718 = vmatpush1.msra.mxu0 0.0
    %1719 = vmatprep.subr.mxu0 0.0
    %1720 = vmatpush1.msra.mxu0 0.0
    %1721 = vmatprep.subr.mxu0 0.0
    %1722 = vmatpush1.msra.mxu0 0.0
    %1723 = vmatprep.mubr.f32.mxu0 0.0
    %1724 = vmatmul.mubr.f32.gmra.mrb[0].mxu0 %v1654
    %v1725 = vpop.f32.mrb[0].mxu0
    %v1726 = vadd.f32 %v1652, %v1725
    %v1727 = vpop.f32.mrb[0].mxu0
    %1728 = vmatprep.mubr.f32.mxu0 0.0
    %1729 = vmatmul.mubr.f32.gmra.mrb[0].mxu0 %v1657
    %v1730 = vpop.f32.mrb[0].mxu0
    %v1731 = vadd.f32 %v1652, %v1730
    %v1732 = vpop.f32.mrb[0].mxu0
    %1733 = vdwg.mxu0
    %v1734 = vmul.f32 %v1726, 0.5
    %v1735 = vmul.f32 %v1731, 0.5
    %v1736 = vrcp.pop 1.4142135
    %v1737 = vmul.f32 %v1726, %v1736
    %v1738 = vmul.f32 %v1731, %v1736
    %v1739 = verf.f32.pop %v1737
    %v1740 = verf.f32.pop %v1738
    %v1741 = vadd.f32 %v1739, 1.0
    %v1742 = vadd.f32 %v1740, 1.0
    %v1743 = vmul.f32 %v1734, %v1741
    %v1744 = vmul.f32 %v1735, %v1742
    %vm1745 = vcmask 523264
    %v1747 = vsel %vm1745, %v1743, 0
    %v1750 = vsel %vm1745, %v1744, 0
    %1752 = vmatprep.subr.mxu0 0.0
    %1753 = vmatpush1.msra.mxu0 %v1641
    %1754 = vmatprep.subr.mxu0 0.0
    %1755 = vmatpush1.msra.mxu0 %v1642
    %1756 = vmatprep.subr.mxu0 0.0
    %1757 = vmatpush1.msra.mxu0 %v1643
    %1758 = vmatprep.subr.mxu0 0.0
    %1759 = vmatpush1.msra.mxu0 %v1644
    %1760 = vmatprep.subr.mxu0 0.0
    %1761 = vmatpush1.msra.mxu0 %v1645
    %1762 = vmatprep.subr.mxu0 0.0
    %1763 = vmatpush1.msra.mxu0 %v1646
    %1764 = vmatprep.subr.mxu0 0.0
    %1765 = vmatpush1.msra.mxu0 %v1647
    %1766 = vmatprep.subr.mxu0 0.0
    %1767 = vmatpush1.msra.mxu0 %v1648
    %1768 = vmatprep.subr.mxu0 0.0
    %1769 = vmatpush1.msra.mxu0 0.0
    %1770 = vmatprep.subr.mxu0 0.0
    %1771 = vmatpush1.msra.mxu0 0.0
    %1772 = vmatprep.subr.mxu0 0.0
    %1773 = vmatpush1.msra.mxu0 0.0
    %1774 = vmatprep.subr.mxu0 0.0
    %1775 = vmatpush1.msra.mxu0 0.0
    %1776 = vmatprep.subr.mxu0 0.0
    %1777 = vmatpush1.msra.mxu0 0.0
    %1778 = vmatprep.subr.mxu0 0.0
    %1779 = vmatpush1.msra.mxu0 0.0
    %1780 = vmatprep.subr.mxu0 0.0
    %1781 = vmatpush1.msra.mxu0 0.0
    %1782 = vmatprep.subr.mxu0 0.0
    %1783 = vmatpush1.msra.mxu0 0.0
    %1784 = vmatprep.subr.mxu0 0.0
    %1785 = vmatpush1.msra.mxu0 0.0
    %1786 = vmatprep.subr.mxu0 0.0
    %1787 = vmatpush1.msra.mxu0 0.0
    %1788 = vmatprep.subr.mxu0 0.0
    %1789 = vmatpush1.msra.mxu0 0.0
    %1790 = vmatprep.subr.mxu0 0.0
    %1791 = vmatpush1.msra.mxu0 0.0
    %1792 = vmatprep.subr.mxu0 0.0
    %1793 = vmatpush1.msra.mxu0 0.0
    %1794 = vmatprep.subr.mxu0 0.0
    %1795 = vmatpush1.msra.mxu0 0.0
    %1796 = vmatprep.subr.mxu0 0.0
    %1797 = vmatpush1.msra.mxu0 0.0
    %1798 = vmatprep.subr.mxu0 0.0
    %1799 = vmatpush1.msra.mxu0 0.0
    %1800 = vmatprep.subr.mxu0 0.0
    %1801 = vmatpush1.msra.mxu0 0.0
    %1802 = vmatprep.subr.mxu0 0.0
    %1803 = vmatpush1.msra.mxu0 0.0
    %1804 = vmatprep.subr.mxu0 0.0
    %1805 = vmatpush1.msra.mxu0 0.0
    %1806 = vmatprep.subr.mxu0 0.0
    %1807 = vmatpush1.msra.mxu0 0.0
    %1808 = vmatprep.subr.mxu0 0.0
    %1809 = vmatpush1.msra.mxu0 0.0
    %1810 = vmatprep.subr.mxu0 0.0
    %1811 = vmatpush1.msra.mxu0 0.0
    %1812 = vmatprep.subr.mxu0 0.0
    %1813 = vmatpush1.msra.mxu0 0.0
    %1814 = vmatprep.subr.mxu0 0.0
    %1815 = vmatpush1.msra.mxu0 0.0
    %1816 = vmatprep.mubr.f32.mxu0 0.0
    %1817 = vmatmul.mubr.f32.gmra.mrb[0].mxu0 %v1747
    %v1818 = vpop.f32.mrb[0].mxu0
    %v1819 = vadd.f32 0.0, %v1818
    %v1820 = vpop.f32.mrb[0].mxu0
    %1821 = vmatprep.mubr.f32.mxu0 0.0
    %1822 = vmatmul.mubr.f32.gmra.mrb[0].mxu0 %v1750
    %v1823 = vpop.f32.mrb[0].mxu0
    %v1824 = vadd.f32 0.0, %v1823
    %v1825 = vpop.f32.mrb[0].mxu0
    %1826 = vdwg.mxu0
    %v1827 = vadd.f32 %v1597, %v1819
    %v1828 = vadd.f32 %v1598, %v1824
    %v1829 = vlaneseq
    %v1830 = vshrl.u32 %v1829, 7
    %v1831 = vsub.s32 5, %v1830
    %v1832 = vrot.slane %v25, %v1831
    %v1833 = vadd.f32 %v1827, %v1832
    %v1834 = vadd.f32 %v1828, %v1832
    %v1835 = vld [vmem:[%s2 + $0x148] sm:$0xff]
    %v1836 = vsel %vm26, %v1833, 0.0
    %1837 = vadd.xlane.f32.xlu0 %v1836
    %v1838 = vpop.xlane.xlu0 %1837
    %v1839 = vsel %vm26, %v1834, 0.0
    %1840 = vadd.xlane.f32.xlu0 %v1839
    %v1841 = vpop.xlane.xlu0 %1840
    %v1842 = vmul.f32 %v1838, %v33
    %v1843 = vmul.f32 %v1841, %v33
    %v1844 = vsub.f32 %v1833, %v1842
    %v1845 = vsub.f32 %v1834, %v1843
    %v1846 = vmul.f32 %v1844, %v1844
    %v1847 = vmul.f32 %v1845, %v1845
    %v1848 = vsel %vm26, %v1846, 0.0
    %1849 = vadd.xlane.f32.xlu0 %v1848
    %v1850 = vpop.xlane.xlu0 %1849
    %v1851 = vsel %vm26, %v1847, 0.0
    %1852 = vadd.xlane.f32.xlu0 %v1851
    %v1853 = vpop.xlane.xlu0 %1852
    %v1854 = vmul.f32 %v1850, %v33
    %v1855 = vmul.f32 %v1853, %v33
    %v1856 = vadd.f32 %v1854, 1e-05
    %v1857 = vadd.f32 %v1855, 1e-05
    %v1858 = vrsqrt.pop %v1856
    %v1859 = vrsqrt.pop %v1857
    %v1860 = vmul.f32 %v1844, %v1858
    %v1861 = vmul.f32 %v1845, %v1859
    %v1862 = vlaneseq
    %v1863 = vshrl.u32 %v1862, 7
    %v1864 = vsub.s32 0, %v1863
    %v1865 = vrot.slane %v1835, %v1864
    %v1866 = vmul.f32 %v1860, %v1865
    %v1867 = vmul.f32 %v1861, %v1865
    %v1868 = vlaneseq
    %v1869 = vshrl.u32 %v1868, 7
    %v1870 = vsub.s32 1, %v1869
    %v1871 = vrot.slane %v1835, %v1870
    %v1872 = vadd.f32 %v1866, %v1871
    %v1873 = vadd.f32 %v1867, %v1871
    %v1874 = vld [vmem:[%s2 + $0xa8] sm:$0xff]
    %v1875 = vld [vmem:[%s2 + $0xb0] sm:$0xff]
    %v1876 = vld [vmem:[%s2 + $0xb8] sm:$0xff]
    %v1877 = vld [vmem:[%s2 + $0xc0] sm:$0xff]
    %v1878 = vlaneseq
    %v1879 = vshrl.u32 %v1878, 7
    %v1880 = vsub.s32 6, %v1879
    %v1881 = vrot.slane %v1835, %v1880
    %v1883 = vsel %vm26, %v1872, 0
    %v1886 = vsel %vm26, %v1873, 0
    %1888 = vmatprep.subr.mxu0 0.0
    %1889 = vmatpush1.msra.mxu0 %v1874
    %1890 = vmatprep.subr.mxu0 0.0
    %1891 = vmatpush1.msra.mxu0 %v1875
    %1892 = vmatprep.subr.mxu0 0.0
    %1893 = vmatpush1.msra.mxu0 %v1876
    %1894 = vmatprep.subr.mxu0 0.0
    %1895 = vmatpush1.msra.mxu0 %v1877
    %1896 = vmatprep.subr.mxu0 0.0
    %1897 = vmatpush1.msra.mxu0 0.0
    %1898 = vmatprep.subr.mxu0 0.0
    %1899 = vmatpush1.msra.mxu0 0.0
    %1900 = vmatprep.subr.mxu0 0.0
    %1901 = vmatpush1.msra.mxu0 0.0
    %1902 = vmatprep.subr.mxu0 0.0
    %1903 = vmatpush1.msra.mxu0 0.0
    %1904 = vmatprep.subr.mxu0 0.0
    %1905 = vmatpush1.msra.mxu0 0.0
    %1906 = vmatprep.subr.mxu0 0.0
    %1907 = vmatpush1.msra.mxu0 0.0
    %1908 = vmatprep.subr.mxu0 0.0
    %1909 = vmatpush1.msra.mxu0 0.0
    %1910 = vmatprep.subr.mxu0 0.0
    %1911 = vmatpush1.msra.mxu0 0.0
    %1912 = vmatprep.subr.mxu0 0.0
    %1913 = vmatpush1.msra.mxu0 0.0
    %1914 = vmatprep.subr.mxu0 0.0
    %1915 = vmatpush1.msra.mxu0 0.0
    %1916 = vmatprep.subr.mxu0 0.0
    %1917 = vmatpush1.msra.mxu0 0.0
    %1918 = vmatprep.subr.mxu0 0.0
    %1919 = vmatpush1.msra.mxu0 0.0
    %1920 = vmatprep.subr.mxu0 0.0
    %1921 = vmatpush1.msra.mxu0 0.0
    %1922 = vmatprep.subr.mxu0 0.0
    %1923 = vmatpush1.msra.mxu0 0.0
    %1924 = vmatprep.subr.mxu0 0.0
    %1925 = vmatpush1.msra.mxu0 0.0
    %1926 = vmatprep.subr.mxu0 0.0
    %1927 = vmatpush1.msra.mxu0 0.0
    %1928 = vmatprep.subr.mxu0 0.0
    %1929 = vmatpush1.msra.mxu0 0.0
    %1930 = vmatprep.subr.mxu0 0.0
    %1931 = vmatpush1.msra.mxu0 0.0
    %1932 = vmatprep.subr.mxu0 0.0
    %1933 = vmatpush1.msra.mxu0 0.0
    %1934 = vmatprep.subr.mxu0 0.0
    %1935 = vmatpush1.msra.mxu0 0.0
    %1936 = vmatprep.subr.mxu0 0.0
    %1937 = vmatpush1.msra.mxu0 0.0
    %1938 = vmatprep.subr.mxu0 0.0
    %1939 = vmatpush1.msra.mxu0 0.0
    %1940 = vmatprep.subr.mxu0 0.0
    %1941 = vmatpush1.msra.mxu0 0.0
    %1942 = vmatprep.subr.mxu0 0.0
    %1943 = vmatpush1.msra.mxu0 0.0
    %1944 = vmatprep.subr.mxu0 0.0
    %1945 = vmatpush1.msra.mxu0 0.0
    %1946 = vmatprep.subr.mxu0 0.0
    %1947 = vmatpush1.msra.mxu0 0.0
    %1948 = vmatprep.subr.mxu0 0.0
    %1949 = vmatpush1.msra.mxu0 0.0
    %1950 = vmatprep.subr.mxu0 0.0
    %1951 = vmatpush1.msra.mxu0 0.0
    %1952 = vmatprep.mubr.f32.mxu0 0.0
    %1953 = vmatmul.mubr.f32.gmra.mrb[0].mxu0 %v1883
    %v1954 = vpop.f32.mrb[0].mxu0
    %v1955 = vadd.f32 %v1881, %v1954
    %v1956 = vpop.f32.mrb[0].mxu0
    %1957 = vmatprep.mubr.f32.mxu0 0.0
    %1958 = vmatmul.mubr.f32.gmra.mrb[0].mxu0 %v1886
    %v1959 = vpop.f32.mrb[0].mxu0
    %v1960 = vadd.f32 %v1881, %v1959
    %v1961 = vpop.f32.mrb[0].mxu0
    %1962 = vdwg.mxu0
    %1964 = vrot.lane.b32.xlu0 %v1955, 96
    %v1965 = vpop.permute.xlu0 %1964
    %v1966 = vsel %vm158, %v1955, 0
    %v1968 = vsel %vm158, %v1965, 0
    %1970 = vmatprep.subr.mxu0 0.0
    %1971 = vmatpush1.xpose.msra.mxu0 %v1968
    %1972 = vmatprep.subr.mxu0 0.0
    %1973 = vmatpush1.xpose.msra.mxu0 0.0
    %1974 = vmatprep.subr.mxu0 0.0
    %1975 = vmatpush1.xpose.msra.mxu0 0.0
    %1976 = vmatprep.subr.mxu0 0.0
    %1977 = vmatpush1.xpose.msra.mxu0 0.0
    %1978 = vmatprep.subr.mxu0 0.0
    %1979 = vmatpush1.xpose.msra.mxu0 0.0
    %1980 = vmatprep.subr.mxu0 0.0
    %1981 = vmatpush1.xpose.msra.mxu0 0.0
    %1982 = vmatprep.subr.mxu0 0.0
    %1983 = vmatpush1.xpose.msra.mxu0 0.0
    %1984 = vmatprep.subr.mxu0 0.0
    %1985 = vmatpush1.xpose.msra.mxu0 0.0
    %1986 = vmatprep.subr.mxu0 0.0
    %1987 = vmatpush1.xpose.msra.mxu0 0.0
    %1988 = vmatprep.subr.mxu0 0.0
    %1989 = vmatpush1.xpose.msra.mxu0 0.0
    %1990 = vmatprep.subr.mxu0 0.0
    %1991 = vmatpush1.xpose.msra.mxu0 0.0
    %1992 = vmatprep.subr.mxu0 0.0
    %1993 = vmatpush1.xpose.msra.mxu0 0.0
    %1994 = vmatprep.subr.mxu0 0.0
    %1995 = vmatpush1.xpose.msra.mxu0 0.0
    %1996 = vmatprep.subr.mxu0 0.0
    %1997 = vmatpush1.xpose.msra.mxu0 0.0
    %1998 = vmatprep.subr.mxu0 0.0
    %1999 = vmatpush1.xpose.msra.mxu0 0.0
    %2000 = vmatprep.subr.mxu0 0.0
    %2001 = vmatpush1.xpose.msra.mxu0 0.0
    %2002 = vmatprep.subr.mxu0 0.0
    %2003 = vmatpush1.xpose.msra.mxu0 0.0
    %2004 = vmatprep.subr.mxu0 0.0
    %2005 = vmatpush1.xpose.msra.mxu0 0.0
    %2006 = vmatprep.subr.mxu0 0.0
    %2007 = vmatpush1.xpose.msra.mxu0 0.0
    %2008 = vmatprep.subr.mxu0 0.0
    %2009 = vmatpush1.xpose.msra.mxu0 0.0
    %2010 = vmatprep.subr.mxu0 0.0
    %2011 = vmatpush1.xpose.msra.mxu0 0.0
    %2012 = vmatprep.subr.mxu0 0.0
    %2013 = vmatpush1.xpose.msra.mxu0 0.0
    %2014 = vmatprep.subr.mxu0 0.0
    %2015 = vmatpush1.xpose.msra.mxu0 0.0
    %2016 = vmatprep.subr.mxu0 0.0
    %2017 = vmatpush1.xpose.msra.mxu0 0.0
    %2018 = vmatprep.subr.mxu0 0.0
    %2019 = vmatpush1.xpose.msra.mxu0 0.0
    %2020 = vmatprep.subr.mxu0 0.0
    %2021 = vmatpush1.xpose.msra.mxu0 0.0
    %2022 = vmatprep.subr.mxu0 0.0
    %2023 = vmatpush1.xpose.msra.mxu0 0.0
    %2024 = vmatprep.subr.mxu0 0.0
    %2025 = vmatpush1.xpose.msra.mxu0 0.0
    %2026 = vmatprep.subr.mxu0 0.0
    %2027 = vmatpush1.xpose.msra.mxu0 0.0
    %2028 = vmatprep.subr.mxu0 0.0
    %2029 = vmatpush1.xpose.msra.mxu0 0.0
    %2030 = vmatprep.subr.mxu0 0.0
    %2031 = vmatpush1.xpose.msra.mxu0 0.0
    %2032 = vmatprep.subr.mxu0 0.0
    %2033 = vmatpush1.xpose.msra.mxu0 0.0
    %2034 = vmatprep.mubr.f32.mxu0 0.0
    %2035 = vmatmul.mubr.f32.gmra.mrb[0].mxu0 %v1966
    %v2036 = vpop.f32.mrb[0].mxu0
    %v2037 = vadd.f32 %v17, %v2036
    %v2038 = vpop.f32.mrb[0].mxu0
    %2039 = vdwg.mxu0
    %2041 = vrot.lane.b32.xlu0 %v1960, 96
    %v2042 = vpop.permute.xlu0 %2041
    %v2043 = vsel %vm158, %v1960, 0
    %v2045 = vsel %vm158, %v2042, 0
    %2047 = vmatprep.subr.mxu0 0.0
    %2048 = vmatpush1.xpose.msra.mxu0 %v2045
    %2049 = vmatprep.subr.mxu0 0.0
    %2050 = vmatpush1.xpose.msra.mxu0 0.0
    %2051 = vmatprep.subr.mxu0 0.0
    %2052 = vmatpush1.xpose.msra.mxu0 0.0
    %2053 = vmatprep.subr.mxu0 0.0
    %2054 = vmatpush1.xpose.msra.mxu0 0.0
    %2055 = vmatprep.subr.mxu0 0.0
    %2056 = vmatpush1.xpose.msra.mxu0 0.0
    %2057 = vmatprep.subr.mxu0 0.0
    %2058 = vmatpush1.xpose.msra.mxu0 0.0
    %2059 = vmatprep.subr.mxu0 0.0
    %2060 = vmatpush1.xpose.msra.mxu0 0.0
    %2061 = vmatprep.subr.mxu0 0.0
    %2062 = vmatpush1.xpose.msra.mxu0 0.0
    %2063 = vmatprep.subr.mxu0 0.0
    %2064 = vmatpush1.xpose.msra.mxu0 0.0
    %2065 = vmatprep.subr.mxu0 0.0
    %2066 = vmatpush1.xpose.msra.mxu0 0.0
    %2067 = vmatprep.subr.mxu0 0.0
    %2068 = vmatpush1.xpose.msra.mxu0 0.0
    %2069 = vmatprep.subr.mxu0 0.0
    %2070 = vmatpush1.xpose.msra.mxu0 0.0
    %2071 = vmatprep.subr.mxu0 0.0
    %2072 = vmatpush1.xpose.msra.mxu0 0.0
    %2073 = vmatprep.subr.mxu0 0.0
    %2074 = vmatpush1.xpose.msra.mxu0 0.0
    %2075 = vmatprep.subr.mxu0 0.0
    %2076 = vmatpush1.xpose.msra.mxu0 0.0
    %2077 = vmatprep.subr.mxu0 0.0
    %2078 = vmatpush1.xpose.msra.mxu0 0.0
    %2079 = vmatprep.subr.mxu0 0.0
    %2080 = vmatpush1.xpose.msra.mxu0 0.0
    %2081 = vmatprep.subr.mxu0 0.0
    %2082 = vmatpush1.xpose.msra.mxu0 0.0
    %2083 = vmatprep.subr.mxu0 0.0
    %2084 = vmatpush1.xpose.msra.mxu0 0.0
    %2085 = vmatprep.subr.mxu0 0.0
    %2086 = vmatpush1.xpose.msra.mxu0 0.0
    %2087 = vmatprep.subr.mxu0 0.0
    %2088 = vmatpush1.xpose.msra.mxu0 0.0
    %2089 = vmatprep.subr.mxu0 0.0
    %2090 = vmatpush1.xpose.msra.mxu0 0.0
    %2091 = vmatprep.subr.mxu0 0.0
    %2092 = vmatpush1.xpose.msra.mxu0 0.0
    %2093 = vmatprep.subr.mxu0 0.0
    %2094 = vmatpush1.xpose.msra.mxu0 0.0
    %2095 = vmatprep.subr.mxu0 0.0
    %2096 = vmatpush1.xpose.msra.mxu0 0.0
    %2097 = vmatprep.subr.mxu0 0.0
    %2098 = vmatpush1.xpose.msra.mxu0 0.0
    %2099 = vmatprep.subr.mxu0 0.0
    %2100 = vmatpush1.xpose.msra.mxu0 0.0
    %2101 = vmatprep.subr.mxu0 0.0
    %2102 = vmatpush1.xpose.msra.mxu0 0.0
    %2103 = vmatprep.subr.mxu0 0.0
    %2104 = vmatpush1.xpose.msra.mxu0 0.0
    %2105 = vmatprep.subr.mxu0 0.0
    %2106 = vmatpush1.xpose.msra.mxu0 0.0
    %2107 = vmatprep.subr.mxu0 0.0
    %2108 = vmatpush1.xpose.msra.mxu0 0.0
    %2109 = vmatprep.subr.mxu0 0.0
    %2110 = vmatpush1.xpose.msra.mxu0 0.0
    %2111 = vmatprep.mubr.f32.mxu0 0.0
    %2112 = vmatmul.mubr.f32.gmra.mrb[0].mxu0 %v2043
    %v2113 = vpop.f32.mrb[0].mxu0
    %v2114 = vadd.f32 %v21, %v2113
    %v2115 = vpop.f32.mrb[0].mxu0
    %2116 = vdwg.mxu0
    %v2117 = vsel %vm158, %v2037, -inf
    %2118 = vmax.xlane.f32.xlu0 %v2117
    %v2119 = vpop.xlane.xlu0 %2118
    %v2120 = vsel %vm158, %v2114, -inf
    %2121 = vmax.xlane.f32.xlu0 %v2120
    %v2122 = vpop.xlane.xlu0 %2121
    %v2123 = vsub.f32 %v2037, %v2119
    %v2124 = vsub.f32 %v2114, %v2122
    %v2125 = vmul.f32 %v2123, 1.442695
    %v2126 = vpow.pop %v2125
    %v2127 = vmul.f32 %v2124, 1.442695
    %v2128 = vpow.pop %v2127
    %v2129 = vsel %vm158, %v2126, 0.0
    %2130 = vadd.xlane.f32.xlu0 %v2129
    %v2131 = vpop.xlane.xlu0 %2130
    %v2132 = vsel %vm158, %v2128, 0.0
    %2133 = vadd.xlane.f32.xlu0 %v2132
    %v2134 = vpop.xlane.xlu0 %2133
    %v2135 = vrcp.pop %v2131
    %v2136 = vmul.f32 %v2126, %v2135
    %v2137 = vrcp.pop %v2134
    %v2138 = vmul.f32 %v2128, %v2137
    %2139 = vrot.lane.b32.xlu0 %v1955, 64
    %v2140 = vpop.permute.xlu0 %2139
    %v2143 = vsel %vm158, %v2136, 0
    %2145 = vmatprep.subr.mxu0 0.0
    %2146 = vmatpush1.msra.mxu0 %v2140
    %2147 = vmatprep.subr.mxu0 0.0
    %2148 = vmatpush1.msra.mxu0 0.0
    %2149 = vmatprep.subr.mxu0 0.0
    %2150 = vmatpush1.msra.mxu0 0.0
    %2151 = vmatprep.subr.mxu0 0.0
    %2152 = vmatpush1.msra.mxu0 0.0
    %2153 = vmatprep.subr.mxu0 0.0
    %2154 = vmatpush1.msra.mxu0 0.0
    %2155 = vmatprep.subr.mxu0 0.0
    %2156 = vmatpush1.msra.mxu0 0.0
    %2157 = vmatprep.subr.mxu0 0.0
    %2158 = vmatpush1.msra.mxu0 0.0
    %2159 = vmatprep.subr.mxu0 0.0
    %2160 = vmatpush1.msra.mxu0 0.0
    %2161 = vmatprep.subr.mxu0 0.0
    %2162 = vmatpush1.msra.mxu0 0.0
    %2163 = vmatprep.subr.mxu0 0.0
    %2164 = vmatpush1.msra.mxu0 0.0
    %2165 = vmatprep.subr.mxu0 0.0
    %2166 = vmatpush1.msra.mxu0 0.0
    %2167 = vmatprep.subr.mxu0 0.0
    %2168 = vmatpush1.msra.mxu0 0.0
    %2169 = vmatprep.subr.mxu0 0.0
    %2170 = vmatpush1.msra.mxu0 0.0
    %2171 = vmatprep.subr.mxu0 0.0
    %2172 = vmatpush1.msra.mxu0 0.0
    %2173 = vmatprep.subr.mxu0 0.0
    %2174 = vmatpush1.msra.mxu0 0.0
    %2175 = vmatprep.subr.mxu0 0.0
    %2176 = vmatpush1.msra.mxu0 0.0
    %2177 = vmatprep.subr.mxu0 0.0
    %2178 = vmatpush1.msra.mxu0 0.0
    %2179 = vmatprep.subr.mxu0 0.0
    %2180 = vmatpush1.msra.mxu0 0.0
    %2181 = vmatprep.subr.mxu0 0.0
    %2182 = vmatpush1.msra.mxu0 0.0
    %2183 = vmatprep.subr.mxu0 0.0
    %2184 = vmatpush1.msra.mxu0 0.0
    %2185 = vmatprep.subr.mxu0 0.0
    %2186 = vmatpush1.msra.mxu0 0.0
    %2187 = vmatprep.subr.mxu0 0.0
    %2188 = vmatpush1.msra.mxu0 0.0
    %2189 = vmatprep.subr.mxu0 0.0
    %2190 = vmatpush1.msra.mxu0 0.0
    %2191 = vmatprep.subr.mxu0 0.0
    %2192 = vmatpush1.msra.mxu0 0.0
    %2193 = vmatprep.subr.mxu0 0.0
    %2194 = vmatpush1.msra.mxu0 0.0
    %2195 = vmatprep.subr.mxu0 0.0
    %2196 = vmatpush1.msra.mxu0 0.0
    %2197 = vmatprep.subr.mxu0 0.0
    %2198 = vmatpush1.msra.mxu0 0.0
    %2199 = vmatprep.subr.mxu0 0.0
    %2200 = vmatpush1.msra.mxu0 0.0
    %2201 = vmatprep.subr.mxu0 0.0
    %2202 = vmatpush1.msra.mxu0 0.0
    %2203 = vmatprep.subr.mxu0 0.0
    %2204 = vmatpush1.msra.mxu0 0.0
    %2205 = vmatprep.subr.mxu0 0.0
    %2206 = vmatpush1.msra.mxu0 0.0
    %2207 = vmatprep.subr.mxu0 0.0
    %2208 = vmatpush1.msra.mxu0 0.0
    %2209 = vmatprep.mubr.f32.mxu0 0.0
    %2210 = vmatmul.mubr.f32.gmra.mrb[0].mxu0 %v2143
    %v2211 = vpop.f32.mrb[0].mxu0
    %v2212 = vadd.f32 0.0, %v2211
    %v2213 = vpop.f32.mrb[0].mxu0
    %2214 = vdwg.mxu0
    %2215 = vrot.lane.b32.xlu0 %v1960, 64
    %v2216 = vpop.permute.xlu0 %2215
    %v2219 = vsel %vm158, %v2138, 0
    %2221 = vmatprep.subr.mxu0 0.0
    %2222 = vmatpush1.msra.mxu0 %v2216
    %2223 = vmatprep.subr.mxu0 0.0
    %2224 = vmatpush1.msra.mxu0 0.0
    %2225 = vmatprep.subr.mxu0 0.0
    %2226 = vmatpush1.msra.mxu0 0.0
    %2227 = vmatprep.subr.mxu0 0.0
    %2228 = vmatpush1.msra.mxu0 0.0
    %2229 = vmatprep.subr.mxu0 0.0
    %2230 = vmatpush1.msra.mxu0 0.0
    %2231 = vmatprep.subr.mxu0 0.0
    %2232 = vmatpush1.msra.mxu0 0.0
    %2233 = vmatprep.subr.mxu0 0.0
    %2234 = vmatpush1.msra.mxu0 0.0
    %2235 = vmatprep.subr.mxu0 0.0
    %2236 = vmatpush1.msra.mxu0 0.0
    %2237 = vmatprep.subr.mxu0 0.0
    %2238 = vmatpush1.msra.mxu0 0.0
    %2239 = vmatprep.subr.mxu0 0.0
    %2240 = vmatpush1.msra.mxu0 0.0
    %2241 = vmatprep.subr.mxu0 0.0
    %2242 = vmatpush1.msra.mxu0 0.0
    %2243 = vmatprep.subr.mxu0 0.0
    %2244 = vmatpush1.msra.mxu0 0.0
    %2245 = vmatprep.subr.mxu0 0.0
    %2246 = vmatpush1.msra.mxu0 0.0
    %2247 = vmatprep.subr.mxu0 0.0
    %2248 = vmatpush1.msra.mxu0 0.0
    %2249 = vmatprep.subr.mxu0 0.0
    %2250 = vmatpush1.msra.mxu0 0.0
    %2251 = vmatprep.subr.mxu0 0.0
    %2252 = vmatpush1.msra.mxu0 0.0
    %2253 = vmatprep.subr.mxu0 0.0
    %2254 = vmatpush1.msra.mxu0 0.0
    %2255 = vmatprep.subr.mxu0 0.0
    %2256 = vmatpush1.msra.mxu0 0.0
    %2257 = vmatprep.subr.mxu0 0.0
    %2258 = vmatpush1.msra.mxu0 0.0
    %2259 = vmatprep.subr.mxu0 0.0
    %2260 = vmatpush1.msra.mxu0 0.0
    %2261 = vmatprep.subr.mxu0 0.0
    %2262 = vmatpush1.msra.mxu0 0.0
    %2263 = vmatprep.subr.mxu0 0.0
    %2264 = vmatpush1.msra.mxu0 0.0
    %2265 = vmatprep.subr.mxu0 0.0
    %2266 = vmatpush1.msra.mxu0 0.0
    %2267 = vmatprep.subr.mxu0 0.0
    %2268 = vmatpush1.msra.mxu0 0.0
    %2269 = vmatprep.subr.mxu0 0.0
    %2270 = vmatpush1.msra.mxu0 0.0
    %2271 = vmatprep.subr.mxu0 0.0
    %2272 = vmatpush1.msra.mxu0 0.0
    %2273 = vmatprep.subr.mxu0 0.0
    %2274 = vmatpush1.msra.mxu0 0.0
    %2275 = vmatprep.subr.mxu0 0.0
    %2276 = vmatpush1.msra.mxu0 0.0
    %2277 = vmatprep.subr.mxu0 0.0
    %2278 = vmatpush1.msra.mxu0 0.0
    %2279 = vmatprep.subr.mxu0 0.0
    %2280 = vmatpush1.msra.mxu0 0.0
    %2281 = vmatprep.subr.mxu0 0.0
    %2282 = vmatpush1.msra.mxu0 0.0
    %2283 = vmatprep.subr.mxu0 0.0
    %2284 = vmatpush1.msra.mxu0 0.0
    %2285 = vmatprep.mubr.f32.mxu0 0.0
    %2286 = vmatmul.mubr.f32.gmra.mrb[0].mxu0 %v2219
    %v2287 = vpop.f32.mrb[0].mxu0
    %v2288 = vadd.f32 0.0, %v2287
    %v2289 = vpop.f32.mrb[0].mxu0
    %2290 = vdwg.mxu0
    %2291 = vrot.lane.b32.xlu0 %v1955, 120
    %v2292 = vpop.permute.xlu0 %2291
    %2293 = vrot.lane.b32.xlu0 %v1955, 88
    %v2294 = vpop.permute.xlu0 %2293
    %v2295 = vsel %vm158, %v2292, 0
    %v2297 = vsel %vm158, %v2294, 0
    %2299 = vmatprep.subr.mxu0 0.0
    %2300 = vmatpush1.xpose.msra.mxu0 %v2297
    %2301 = vmatprep.subr.mxu0 0.0
    %2302 = vmatpush1.xpose.msra.mxu0 0.0
    %2303 = vmatprep.subr.mxu0 0.0
    %2304 = vmatpush1.xpose.msra.mxu0 0.0
    %2305 = vmatprep.subr.mxu0 0.0
    %2306 = vmatpush1.xpose.msra.mxu0 0.0
    %2307 = vmatprep.subr.mxu0 0.0
    %2308 = vmatpush1.xpose.msra.mxu0 0.0
    %2309 = vmatprep.subr.mxu0 0.0
    %2310 = vmatpush1.xpose.msra.mxu0 0.0
    %2311 = vmatprep.subr.mxu0 0.0
    %2312 = vmatpush1.xpose.msra.mxu0 0.0
    %2313 = vmatprep.subr.mxu0 0.0
    %2314 = vmatpush1.xpose.msra.mxu0 0.0
    %2315 = vmatprep.subr.mxu0 0.0
    %2316 = vmatpush1.xpose.msra.mxu0 0.0
    %2317 = vmatprep.subr.mxu0 0.0
    %2318 = vmatpush1.xpose.msra.mxu0 0.0
    %2319 = vmatprep.subr.mxu0 0.0
    %2320 = vmatpush1.xpose.msra.mxu0 0.0
    %2321 = vmatprep.subr.mxu0 0.0
    %2322 = vmatpush1.xpose.msra.mxu0 0.0
    %2323 = vmatprep.subr.mxu0 0.0
    %2324 = vmatpush1.xpose.msra.mxu0 0.0
    %2325 = vmatprep.subr.mxu0 0.0
    %2326 = vmatpush1.xpose.msra.mxu0 0.0
    %2327 = vmatprep.subr.mxu0 0.0
    %2328 = vmatpush1.xpose.msra.mxu0 0.0
    %2329 = vmatprep.subr.mxu0 0.0
    %2330 = vmatpush1.xpose.msra.mxu0 0.0
    %2331 = vmatprep.subr.mxu0 0.0
    %2332 = vmatpush1.xpose.msra.mxu0 0.0
    %2333 = vmatprep.subr.mxu0 0.0
    %2334 = vmatpush1.xpose.msra.mxu0 0.0
    %2335 = vmatprep.subr.mxu0 0.0
    %2336 = vmatpush1.xpose.msra.mxu0 0.0
    %2337 = vmatprep.subr.mxu0 0.0
    %2338 = vmatpush1.xpose.msra.mxu0 0.0
    %2339 = vmatprep.subr.mxu0 0.0
    %2340 = vmatpush1.xpose.msra.mxu0 0.0
    %2341 = vmatprep.subr.mxu0 0.0
    %2342 = vmatpush1.xpose.msra.mxu0 0.0
    %2343 = vmatprep.subr.mxu0 0.0
    %2344 = vmatpush1.xpose.msra.mxu0 0.0
    %2345 = vmatprep.subr.mxu0 0.0
    %2346 = vmatpush1.xpose.msra.mxu0 0.0
    %2347 = vmatprep.subr.mxu0 0.0
    %2348 = vmatpush1.xpose.msra.mxu0 0.0
    %2349 = vmatprep.subr.mxu0 0.0
    %2350 = vmatpush1.xpose.msra.mxu0 0.0
    %2351 = vmatprep.subr.mxu0 0.0
    %2352 = vmatpush1.xpose.msra.mxu0 0.0
    %2353 = vmatprep.subr.mxu0 0.0
    %2354 = vmatpush1.xpose.msra.mxu0 0.0
    %2355 = vmatprep.subr.mxu0 0.0
    %2356 = vmatpush1.xpose.msra.mxu0 0.0
    %2357 = vmatprep.subr.mxu0 0.0
    %2358 = vmatpush1.xpose.msra.mxu0 0.0
    %2359 = vmatprep.subr.mxu0 0.0
    %2360 = vmatpush1.xpose.msra.mxu0 0.0
    %2361 = vmatprep.subr.mxu0 0.0
    %2362 = vmatpush1.xpose.msra.mxu0 0.0
    %2363 = vmatprep.mubr.f32.mxu0 0.0
    %2364 = vmatmul.mubr.f32.gmra.mrb[0].mxu0 %v2295
    %v2365 = vpop.f32.mrb[0].mxu0
    %v2366 = vadd.f32 %v18, %v2365
    %v2367 = vpop.f32.mrb[0].mxu0
    %2368 = vdwg.mxu0
    %2369 = vrot.lane.b32.xlu0 %v1960, 120
    %v2370 = vpop.permute.xlu0 %2369
    %2371 = vrot.lane.b32.xlu0 %v1960, 88
    %v2372 = vpop.permute.xlu0 %2371
    %v2373 = vsel %vm158, %v2370, 0
    %v2375 = vsel %vm158, %v2372, 0
    %2377 = vmatprep.subr.mxu0 0.0
    %2378 = vmatpush1.xpose.msra.mxu0 %v2375
    %2379 = vmatprep.subr.mxu0 0.0
    %2380 = vmatpush1.xpose.msra.mxu0 0.0
    %2381 = vmatprep.subr.mxu0 0.0
    %2382 = vmatpush1.xpose.msra.mxu0 0.0
    %2383 = vmatprep.subr.mxu0 0.0
    %2384 = vmatpush1.xpose.msra.mxu0 0.0
    %2385 = vmatprep.subr.mxu0 0.0
    %2386 = vmatpush1.xpose.msra.mxu0 0.0
    %2387 = vmatprep.subr.mxu0 0.0
    %2388 = vmatpush1.xpose.msra.mxu0 0.0
    %2389 = vmatprep.subr.mxu0 0.0
    %2390 = vmatpush1.xpose.msra.mxu0 0.0
    %2391 = vmatprep.subr.mxu0 0.0
    %2392 = vmatpush1.xpose.msra.mxu0 0.0
    %2393 = vmatprep.subr.mxu0 0.0
    %2394 = vmatpush1.xpose.msra.mxu0 0.0
    %2395 = vmatprep.subr.mxu0 0.0
    %2396 = vmatpush1.xpose.msra.mxu0 0.0
    %2397 = vmatprep.subr.mxu0 0.0
    %2398 = vmatpush1.xpose.msra.mxu0 0.0
    %2399 = vmatprep.subr.mxu0 0.0
    %2400 = vmatpush1.xpose.msra.mxu0 0.0
    %2401 = vmatprep.subr.mxu0 0.0
    %2402 = vmatpush1.xpose.msra.mxu0 0.0
    %2403 = vmatprep.subr.mxu0 0.0
    %2404 = vmatpush1.xpose.msra.mxu0 0.0
    %2405 = vmatprep.subr.mxu0 0.0
    %2406 = vmatpush1.xpose.msra.mxu0 0.0
    %2407 = vmatprep.subr.mxu0 0.0
    %2408 = vmatpush1.xpose.msra.mxu0 0.0
    %2409 = vmatprep.subr.mxu0 0.0
    %2410 = vmatpush1.xpose.msra.mxu0 0.0
    %2411 = vmatprep.subr.mxu0 0.0
    %2412 = vmatpush1.xpose.msra.mxu0 0.0
    %2413 = vmatprep.subr.mxu0 0.0
    %2414 = vmatpush1.xpose.msra.mxu0 0.0
    %2415 = vmatprep.subr.mxu0 0.0
    %2416 = vmatpush1.xpose.msra.mxu0 0.0
    %2417 = vmatprep.subr.mxu0 0.0
    %2418 = vmatpush1.xpose.msra.mxu0 0.0
    %2419 = vmatprep.subr.mxu0 0.0
    %2420 = vmatpush1.xpose.msra.mxu0 0.0
    %2421 = vmatprep.subr.mxu0 0.0
    %2422 = vmatpush1.xpose.msra.mxu0 0.0
    %2423 = vmatprep.subr.mxu0 0.0
    %2424 = vmatpush1.xpose.msra.mxu0 0.0
    %2425 = vmatprep.subr.mxu0 0.0
    %2426 = vmatpush1.xpose.msra.mxu0 0.0
    %2427 = vmatprep.subr.mxu0 0.0
    %2428 = vmatpush1.xpose.msra.mxu0 0.0
    %2429 = vmatprep.subr.mxu0 0.0
    %2430 = vmatpush1.xpose.msra.mxu0 0.0
    %2431 = vmatprep.subr.mxu0 0.0
    %2432 = vmatpush1.xpose.msra.mxu0 0.0
    %2433 = vmatprep.subr.mxu0 0.0
    %2434 = vmatpush1.xpose.msra.mxu0 0.0
    %2435 = vmatprep.subr.mxu0 0.0
    %2436 = vmatpush1.xpose.msra.mxu0 0.0
    %2437 = vmatprep.subr.mxu0 0.0
    %2438 = vmatpush1.xpose.msra.mxu0 0.0
    %2439 = vmatprep.subr.mxu0 0.0
    %2440 = vmatpush1.xpose.msra.mxu0 0.0
    %2441 = vmatprep.mubr.f32.mxu0 0.0
    %2442 = vmatmul.mubr.f32.gmra.mrb[0].mxu0 %v2373
    %v2443 = vpop.f32.mrb[0].mxu0
    %v2444 = vadd.f32 %v22, %v2443
    %v2445 = vpop.f32.mrb[0].mxu0
    %2446 = vdwg.mxu0
    %v2447 = vsel %vm158, %v2366, -inf
    %2448 = vmax.xlane.f32.xlu0 %v2447
    %v2449 = vpop.xlane.xlu0 %2448
    %v2450 = vsel %vm158, %v2444, -inf
    %2451 = vmax.xlane.f32.xlu0 %v2450
    %v2452 = vpop.xlane.xlu0 %2451
    %v2453 = vsub.f32 %v2366, %v2449
    %v2454 = vsub.f32 %v2444, %v2452
    %v2455 = vmul.f32 %v2453, 1.442695
    %v2456 = vpow.pop %v2455
    %v2457 = vmul.f32 %v2454, 1.442695
    %v2458 = vpow.pop %v2457
    %v2459 = vsel %vm158, %v2456, 0.0
    %2460 = vadd.xlane.f32.xlu0 %v2459
    %v2461 = vpop.xlane.xlu0 %2460
    %v2462 = vsel %vm158, %v2458, 0.0
    %2463 = vadd.xlane.f32.xlu0 %v2462
    %v2464 = vpop.xlane.xlu0 %2463
    %v2465 = vrcp.pop %v2461
    %v2466 = vmul.f32 %v2456, %v2465
    %v2467 = vrcp.pop %v2464
    %v2468 = vmul.f32 %v2458, %v2467
    %2469 = vrot.lane.b32.xlu0 %v1955, 56
    %v2470 = vpop.permute.xlu0 %2469
    %v2473 = vsel %vm158, %v2466, 0
    %2475 = vmatprep.subr.mxu0 0.0
    %2476 = vmatpush1.msra.mxu0 %v2470
    %2477 = vmatprep.subr.mxu0 0.0
    %2478 = vmatpush1.msra.mxu0 0.0
    %2479 = vmatprep.subr.mxu0 0.0
    %2480 = vmatpush1.msra.mxu0 0.0
    %2481 = vmatprep.subr.mxu0 0.0
    %2482 = vmatpush1.msra.mxu0 0.0
    %2483 = vmatprep.subr.mxu0 0.0
    %2484 = vmatpush1.msra.mxu0 0.0
    %2485 = vmatprep.subr.mxu0 0.0
    %2486 = vmatpush1.msra.mxu0 0.0
    %2487 = vmatprep.subr.mxu0 0.0
    %2488 = vmatpush1.msra.mxu0 0.0
    %2489 = vmatprep.subr.mxu0 0.0
    %2490 = vmatpush1.msra.mxu0 0.0
    %2491 = vmatprep.subr.mxu0 0.0
    %2492 = vmatpush1.msra.mxu0 0.0
    %2493 = vmatprep.subr.mxu0 0.0
    %2494 = vmatpush1.msra.mxu0 0.0
    %2495 = vmatprep.subr.mxu0 0.0
    %2496 = vmatpush1.msra.mxu0 0.0
    %2497 = vmatprep.subr.mxu0 0.0
    %2498 = vmatpush1.msra.mxu0 0.0
    %2499 = vmatprep.subr.mxu0 0.0
    %2500 = vmatpush1.msra.mxu0 0.0
    %2501 = vmatprep.subr.mxu0 0.0
    %2502 = vmatpush1.msra.mxu0 0.0
    %2503 = vmatprep.subr.mxu0 0.0
    %2504 = vmatpush1.msra.mxu0 0.0
    %2505 = vmatprep.subr.mxu0 0.0
    %2506 = vmatpush1.msra.mxu0 0.0
    %2507 = vmatprep.subr.mxu0 0.0
    %2508 = vmatpush1.msra.mxu0 0.0
    %2509 = vmatprep.subr.mxu0 0.0
    %2510 = vmatpush1.msra.mxu0 0.0
    %2511 = vmatprep.subr.mxu0 0.0
    %2512 = vmatpush1.msra.mxu0 0.0
    %2513 = vmatprep.subr.mxu0 0.0
    %2514 = vmatpush1.msra.mxu0 0.0
    %2515 = vmatprep.subr.mxu0 0.0
    %2516 = vmatpush1.msra.mxu0 0.0
    %2517 = vmatprep.subr.mxu0 0.0
    %2518 = vmatpush1.msra.mxu0 0.0
    %2519 = vmatprep.subr.mxu0 0.0
    %2520 = vmatpush1.msra.mxu0 0.0
    %2521 = vmatprep.subr.mxu0 0.0
    %2522 = vmatpush1.msra.mxu0 0.0
    %2523 = vmatprep.subr.mxu0 0.0
    %2524 = vmatpush1.msra.mxu0 0.0
    %2525 = vmatprep.subr.mxu0 0.0
    %2526 = vmatpush1.msra.mxu0 0.0
    %2527 = vmatprep.subr.mxu0 0.0
    %2528 = vmatpush1.msra.mxu0 0.0
    %2529 = vmatprep.subr.mxu0 0.0
    %2530 = vmatpush1.msra.mxu0 0.0
    %2531 = vmatprep.subr.mxu0 0.0
    %2532 = vmatpush1.msra.mxu0 0.0
    %2533 = vmatprep.subr.mxu0 0.0
    %2534 = vmatpush1.msra.mxu0 0.0
    %2535 = vmatprep.subr.mxu0 0.0
    %2536 = vmatpush1.msra.mxu0 0.0
    %2537 = vmatprep.subr.mxu0 0.0
    %2538 = vmatpush1.msra.mxu0 0.0
    %2539 = vmatprep.mubr.f32.mxu0 0.0
    %2540 = vmatmul.mubr.f32.gmra.mrb[0].mxu0 %v2473
    %v2541 = vpop.f32.mrb[0].mxu0
    %v2542 = vadd.f32 0.0, %v2541
    %v2543 = vpop.f32.mrb[0].mxu0
    %2544 = vdwg.mxu0
    %2545 = vrot.lane.b32.xlu0 %v1960, 56
    %v2546 = vpop.permute.xlu0 %2545
    %v2549 = vsel %vm158, %v2468, 0
    %2551 = vmatprep.subr.mxu0 0.0
    %2552 = vmatpush1.msra.mxu0 %v2546
    %2553 = vmatprep.subr.mxu0 0.0
    %2554 = vmatpush1.msra.mxu0 0.0
    %2555 = vmatprep.subr.mxu0 0.0
    %2556 = vmatpush1.msra.mxu0 0.0
    %2557 = vmatprep.subr.mxu0 0.0
    %2558 = vmatpush1.msra.mxu0 0.0
    %2559 = vmatprep.subr.mxu0 0.0
    %2560 = vmatpush1.msra.mxu0 0.0
    %2561 = vmatprep.subr.mxu0 0.0
    %2562 = vmatpush1.msra.mxu0 0.0
    %2563 = vmatprep.subr.mxu0 0.0
    %2564 = vmatpush1.msra.mxu0 0.0
    %2565 = vmatprep.subr.mxu0 0.0
    %2566 = vmatpush1.msra.mxu0 0.0
    %2567 = vmatprep.subr.mxu0 0.0
    %2568 = vmatpush1.msra.mxu0 0.0
    %2569 = vmatprep.subr.mxu0 0.0
    %2570 = vmatpush1.msra.mxu0 0.0
    %2571 = vmatprep.subr.mxu0 0.0
    %2572 = vmatpush1.msra.mxu0 0.0
    %2573 = vmatprep.subr.mxu0 0.0
    %2574 = vmatpush1.msra.mxu0 0.0
    %2575 = vmatprep.subr.mxu0 0.0
    %2576 = vmatpush1.msra.mxu0 0.0
    %2577 = vmatprep.subr.mxu0 0.0
    %2578 = vmatpush1.msra.mxu0 0.0
    %2579 = vmatprep.subr.mxu0 0.0
    %2580 = vmatpush1.msra.mxu0 0.0
    %2581 = vmatprep.subr.mxu0 0.0
    %2582 = vmatpush1.msra.mxu0 0.0
    %2583 = vmatprep.subr.mxu0 0.0
    %2584 = vmatpush1.msra.mxu0 0.0
    %2585 = vmatprep.subr.mxu0 0.0
    %2586 = vmatpush1.msra.mxu0 0.0
    %2587 = vmatprep.subr.mxu0 0.0
    %2588 = vmatpush1.msra.mxu0 0.0
    %2589 = vmatprep.subr.mxu0 0.0
    %2590 = vmatpush1.msra.mxu0 0.0
    %2591 = vmatprep.subr.mxu0 0.0
    %2592 = vmatpush1.msra.mxu0 0.0
    %2593 = vmatprep.subr.mxu0 0.0
    %2594 = vmatpush1.msra.mxu0 0.0
    %2595 = vmatprep.subr.mxu0 0.0
    %2596 = vmatpush1.msra.mxu0 0.0
    %2597 = vmatprep.subr.mxu0 0.0
    %2598 = vmatpush1.msra.mxu0 0.0
    %2599 = vmatprep.subr.mxu0 0.0
    %2600 = vmatpush1.msra.mxu0 0.0
    %2601 = vmatprep.subr.mxu0 0.0
    %2602 = vmatpush1.msra.mxu0 0.0
    %2603 = vmatprep.subr.mxu0 0.0
    %2604 = vmatpush1.msra.mxu0 0.0
    %2605 = vmatprep.subr.mxu0 0.0
    %2606 = vmatpush1.msra.mxu0 0.0
    %2607 = vmatprep.subr.mxu0 0.0
    %2608 = vmatpush1.msra.mxu0 0.0
    %2609 = vmatprep.subr.mxu0 0.0
    %2610 = vmatpush1.msra.mxu0 0.0
    %2611 = vmatprep.subr.mxu0 0.0
    %2612 = vmatpush1.msra.mxu0 0.0
    %2613 = vmatprep.subr.mxu0 0.0
    %2614 = vmatpush1.msra.mxu0 0.0
    %2615 = vmatprep.mubr.f32.mxu0 0.0
    %2616 = vmatmul.mubr.f32.gmra.mrb[0].mxu0 %v2549
    %v2617 = vpop.f32.mrb[0].mxu0
    %v2618 = vadd.f32 0.0, %v2617
    %v2619 = vpop.f32.mrb[0].mxu0
    %2620 = vdwg.mxu0
    %2621 = vrot.lane.b32.xlu0 %v1955, 112
    %v2622 = vpop.permute.xlu0 %2621
    %2623 = vrot.lane.b32.xlu0 %v1955, 80
    %v2624 = vpop.permute.xlu0 %2623
    %v2625 = vsel %vm158, %v2622, 0
    %v2627 = vsel %vm158, %v2624, 0
    %2629 = vmatprep.subr.mxu0 0.0
    %2630 = vmatpush1.xpose.msra.mxu0 %v2627
    %2631 = vmatprep.subr.mxu0 0.0
    %2632 = vmatpush1.xpose.msra.mxu0 0.0
    %2633 = vmatprep.subr.mxu0 0.0
    %2634 = vmatpush1.xpose.msra.mxu0 0.0
    %2635 = vmatprep.subr.mxu0 0.0
    %2636 = vmatpush1.xpose.msra.mxu0 0.0
    %2637 = vmatprep.subr.mxu0 0.0
    %2638 = vmatpush1.xpose.msra.mxu0 0.0
    %2639 = vmatprep.subr.mxu0 0.0
    %2640 = vmatpush1.xpose.msra.mxu0 0.0
    %2641 = vmatprep.subr.mxu0 0.0
    %2642 = vmatpush1.xpose.msra.mxu0 0.0
    %2643 = vmatprep.subr.mxu0 0.0
    %2644 = vmatpush1.xpose.msra.mxu0 0.0
    %2645 = vmatprep.subr.mxu0 0.0
    %2646 = vmatpush1.xpose.msra.mxu0 0.0
    %2647 = vmatprep.subr.mxu0 0.0
    %2648 = vmatpush1.xpose.msra.mxu0 0.0
    %2649 = vmatprep.subr.mxu0 0.0
    %2650 = vmatpush1.xpose.msra.mxu0 0.0
    %2651 = vmatprep.subr.mxu0 0.0
    %2652 = vmatpush1.xpose.msra.mxu0 0.0
    %2653 = vmatprep.subr.mxu0 0.0
    %2654 = vmatpush1.xpose.msra.mxu0 0.0
    %2655 = vmatprep.subr.mxu0 0.0
    %2656 = vmatpush1.xpose.msra.mxu0 0.0
    %2657 = vmatprep.subr.mxu0 0.0
    %2658 = vmatpush1.xpose.msra.mxu0 0.0
    %2659 = vmatprep.subr.mxu0 0.0
    %2660 = vmatpush1.xpose.msra.mxu0 0.0
    %2661 = vmatprep.subr.mxu0 0.0
    %2662 = vmatpush1.xpose.msra.mxu0 0.0
    %2663 = vmatprep.subr.mxu0 0.0
    %2664 = vmatpush1.xpose.msra.mxu0 0.0
    %2665 = vmatprep.subr.mxu0 0.0
    %2666 = vmatpush1.xpose.msra.mxu0 0.0
    %2667 = vmatprep.subr.mxu0 0.0
    %2668 = vmatpush1.xpose.msra.mxu0 0.0
    %2669 = vmatprep.subr.mxu0 0.0
    %2670 = vmatpush1.xpose.msra.mxu0 0.0
    %2671 = vmatprep.subr.mxu0 0.0
    %2672 = vmatpush1.xpose.msra.mxu0 0.0
    %2673 = vmatprep.subr.mxu0 0.0
    %2674 = vmatpush1.xpose.msra.mxu0 0.0
    %2675 = vmatprep.subr.mxu0 0.0
    %2676 = vmatpush1.xpose.msra.mxu0 0.0
    %2677 = vmatprep.subr.mxu0 0.0
    %2678 = vmatpush1.xpose.msra.mxu0 0.0
    %2679 = vmatprep.subr.mxu0 0.0
    %2680 = vmatpush1.xpose.msra.mxu0 0.0
    %2681 = vmatprep.subr.mxu0 0.0
    %2682 = vmatpush1.xpose.msra.mxu0 0.0
    %2683 = vmatprep.subr.mxu0 0.0
    %2684 = vmatpush1.xpose.msra.mxu0 0.0
    %2685 = vmatprep.subr.mxu0 0.0
    %2686 = vmatpush1.xpose.msra.mxu0 0.0
    %2687 = vmatprep.subr.mxu0 0.0
    %2688 = vmatpush1.xpose.msra.mxu0 0.0
    %2689 = vmatprep.subr.mxu0 0.0
    %2690 = vmatpush1.xpose.msra.mxu0 0.0
    %2691 = vmatprep.subr.mxu0 0.0
    %2692 = vmatpush1.xpose.msra.mxu0 0.0
    %2693 = vmatprep.mubr.f32.mxu0 0.0
    %2694 = vmatmul.mubr.f32.gmra.mrb[0].mxu0 %v2625
    %v2695 = vpop.f32.mrb[0].mxu0
    %v2696 = vadd.f32 %v19, %v2695
    %v2697 = vpop.f32.mrb[0].mxu0
    %2698 = vdwg.mxu0
    %2699 = vrot.lane.b32.xlu0 %v1960, 112
    %v2700 = vpop.permute.xlu0 %2699
    %2701 = vrot.lane.b32.xlu0 %v1960, 80
    %v2702 = vpop.permute.xlu0 %2701
    %v2703 = vsel %vm158, %v2700, 0
    %v2705 = vsel %vm158, %v2702, 0
    %2707 = vmatprep.subr.mxu0 0.0
    %2708 = vmatpush1.xpose.msra.mxu0 %v2705
    %2709 = vmatprep.subr.mxu0 0.0
    %2710 = vmatpush1.xpose.msra.mxu0 0.0
    %2711 = vmatprep.subr.mxu0 0.0
    %2712 = vmatpush1.xpose.msra.mxu0 0.0
    %2713 = vmatprep.subr.mxu0 0.0
    %2714 = vmatpush1.xpose.msra.mxu0 0.0
    %2715 = vmatprep.subr.mxu0 0.0
    %2716 = vmatpush1.xpose.msra.mxu0 0.0
    %2717 = vmatprep.subr.mxu0 0.0
    %2718 = vmatpush1.xpose.msra.mxu0 0.0
    %2719 = vmatprep.subr.mxu0 0.0
    %2720 = vmatpush1.xpose.msra.mxu0 0.0
    %2721 = vmatprep.subr.mxu0 0.0
    %2722 = vmatpush1.xpose.msra.mxu0 0.0
    %2723 = vmatprep.subr.mxu0 0.0
    %2724 = vmatpush1.xpose.msra.mxu0 0.0
    %2725 = vmatprep.subr.mxu0 0.0
    %2726 = vmatpush1.xpose.msra.mxu0 0.0
    %2727 = vmatprep.subr.mxu0 0.0
    %2728 = vmatpush1.xpose.msra.mxu0 0.0
    %2729 = vmatprep.subr.mxu0 0.0
    %2730 = vmatpush1.xpose.msra.mxu0 0.0
    %2731 = vmatprep.subr.mxu0 0.0
    %2732 = vmatpush1.xpose.msra.mxu0 0.0
    %2733 = vmatprep.subr.mxu0 0.0
    %2734 = vmatpush1.xpose.msra.mxu0 0.0
    %2735 = vmatprep.subr.mxu0 0.0
    %2736 = vmatpush1.xpose.msra.mxu0 0.0
    %2737 = vmatprep.subr.mxu0 0.0
    %2738 = vmatpush1.xpose.msra.mxu0 0.0
    %2739 = vmatprep.subr.mxu0 0.0
    %2740 = vmatpush1.xpose.msra.mxu0 0.0
    %2741 = vmatprep.subr.mxu0 0.0
    %2742 = vmatpush1.xpose.msra.mxu0 0.0
    %2743 = vmatprep.subr.mxu0 0.0
    %2744 = vmatpush1.xpose.msra.mxu0 0.0
    %2745 = vmatprep.subr.mxu0 0.0
    %2746 = vmatpush1.xpose.msra.mxu0 0.0
    %2747 = vmatprep.subr.mxu0 0.0
    %2748 = vmatpush1.xpose.msra.mxu0 0.0
    %2749 = vmatprep.subr.mxu0 0.0
    %2750 = vmatpush1.xpose.msra.mxu0 0.0
    %2751 = vmatprep.subr.mxu0 0.0
    %2752 = vmatpush1.xpose.msra.mxu0 0.0
    %2753 = vmatprep.subr.mxu0 0.0
    %2754 = vmatpush1.xpose.msra.mxu0 0.0
    %2755 = vmatprep.subr.mxu0 0.0
    %2756 = vmatpush1.xpose.msra.mxu0 0.0
    %2757 = vmatprep.subr.mxu0 0.0
    %2758 = vmatpush1.xpose.msra.mxu0 0.0
    %2759 = vmatprep.subr.mxu0 0.0
    %2760 = vmatpush1.xpose.msra.mxu0 0.0
    %2761 = vmatprep.subr.mxu0 0.0
    %2762 = vmatpush1.xpose.msra.mxu0 0.0
    %2763 = vmatprep.subr.mxu0 0.0
    %2764 = vmatpush1.xpose.msra.mxu0 0.0
    %2765 = vmatprep.subr.mxu0 0.0
    %2766 = vmatpush1.xpose.msra.mxu0 0.0
    %2767 = vmatprep.subr.mxu0 0.0
    %2768 = vmatpush1.xpose.msra.mxu0 0.0
    %2769 = vmatprep.subr.mxu0 0.0
    %2770 = vmatpush1.xpose.msra.mxu0 0.0
    %2771 = vmatprep.mubr.f32.mxu0 0.0
    %2772 = vmatmul.mubr.f32.gmra.mrb[0].mxu0 %v2703
    %v2773 = vpop.f32.mrb[0].mxu0
    %v2774 = vadd.f32 %v23, %v2773
    %v2775 = vpop.f32.mrb[0].mxu0
    %2776 = vdwg.mxu0
    %v2777 = vsel %vm158, %v2696, -inf
    %2778 = vmax.xlane.f32.xlu0 %v2777
    %v2779 = vpop.xlane.xlu0 %2778
    %v2780 = vsel %vm158, %v2774, -inf
    %2781 = vmax.xlane.f32.xlu0 %v2780
    %v2782 = vpop.xlane.xlu0 %2781
    %v2783 = vsub.f32 %v2696, %v2779
    %v2784 = vsub.f32 %v2774, %v2782
    %v2785 = vmul.f32 %v2783, 1.442695
    %v2786 = vpow.pop %v2785
    %v2787 = vmul.f32 %v2784, 1.442695
    %v2788 = vpow.pop %v2787
    %v2789 = vsel %vm158, %v2786, 0.0
    %2790 = vadd.xlane.f32.xlu0 %v2789
    %v2791 = vpop.xlane.xlu0 %2790
    %v2792 = vsel %vm158, %v2788, 0.0
    %2793 = vadd.xlane.f32.xlu0 %v2792
    %v2794 = vpop.xlane.xlu0 %2793
    %v2795 = vrcp.pop %v2791
    %v2796 = vmul.f32 %v2786, %v2795
    %v2797 = vrcp.pop %v2794
    %v2798 = vmul.f32 %v2788, %v2797
    %2799 = vrot.lane.b32.xlu0 %v1955, 48
    %v2800 = vpop.permute.xlu0 %2799
    %v2803 = vsel %vm158, %v2796, 0
    %2805 = vmatprep.subr.mxu0 0.0
    %2806 = vmatpush1.msra.mxu0 %v2800
    %2807 = vmatprep.subr.mxu0 0.0
    %2808 = vmatpush1.msra.mxu0 0.0
    %2809 = vmatprep.subr.mxu0 0.0
    %2810 = vmatpush1.msra.mxu0 0.0
    %2811 = vmatprep.subr.mxu0 0.0
    %2812 = vmatpush1.msra.mxu0 0.0
    %2813 = vmatprep.subr.mxu0 0.0
    %2814 = vmatpush1.msra.mxu0 0.0
    %2815 = vmatprep.subr.mxu0 0.0
    %2816 = vmatpush1.msra.mxu0 0.0
    %2817 = vmatprep.subr.mxu0 0.0
    %2818 = vmatpush1.msra.mxu0 0.0
    %2819 = vmatprep.subr.mxu0 0.0
    %2820 = vmatpush1.msra.mxu0 0.0
    %2821 = vmatprep.subr.mxu0 0.0
    %2822 = vmatpush1.msra.mxu0 0.0
    %2823 = vmatprep.subr.mxu0 0.0
    %2824 = vmatpush1.msra.mxu0 0.0
    %2825 = vmatprep.subr.mxu0 0.0
    %2826 = vmatpush1.msra.mxu0 0.0
    %2827 = vmatprep.subr.mxu0 0.0
    %2828 = vmatpush1.msra.mxu0 0.0
    %2829 = vmatprep.subr.mxu0 0.0
    %2830 = vmatpush1.msra.mxu0 0.0
    %2831 = vmatprep.subr.mxu0 0.0
    %2832 = vmatpush1.msra.mxu0 0.0
    %2833 = vmatprep.subr.mxu0 0.0
    %2834 = vmatpush1.msra.mxu0 0.0
    %2835 = vmatprep.subr.mxu0 0.0
    %2836 = vmatpush1.msra.mxu0 0.0
    %2837 = vmatprep.subr.mxu0 0.0
    %2838 = vmatpush1.msra.mxu0 0.0
    %2839 = vmatprep.subr.mxu0 0.0
    %2840 = vmatpush1.msra.mxu0 0.0
    %2841 = vmatprep.subr.mxu0 0.0
    %2842 = vmatpush1.msra.mxu0 0.0
    %2843 = vmatprep.subr.mxu0 0.0
    %2844 = vmatpush1.msra.mxu0 0.0
    %2845 = vmatprep.subr.mxu0 0.0
    %2846 = vmatpush1.msra.mxu0 0.0
    %2847 = vmatprep.subr.mxu0 0.0
    %2848 = vmatpush1.msra.mxu0 0.0
    %2849 = vmatprep.subr.mxu0 0.0
    %2850 = vmatpush1.msra.mxu0 0.0
    %2851 = vmatprep.subr.mxu0 0.0
    %2852 = vmatpush1.msra.mxu0 0.0
    %2853 = vmatprep.subr.mxu0 0.0
    %2854 = vmatpush1.msra.mxu0 0.0
    %2855 = vmatprep.subr.mxu0 0.0
    %2856 = vmatpush1.msra.mxu0 0.0
    %2857 = vmatprep.subr.mxu0 0.0
    %2858 = vmatpush1.msra.mxu0 0.0
    %2859 = vmatprep.subr.mxu0 0.0
    %2860 = vmatpush1.msra.mxu0 0.0
    %2861 = vmatprep.subr.mxu0 0.0
    %2862 = vmatpush1.msra.mxu0 0.0
    %2863 = vmatprep.subr.mxu0 0.0
    %2864 = vmatpush1.msra.mxu0 0.0
    %2865 = vmatprep.subr.mxu0 0.0
    %2866 = vmatpush1.msra.mxu0 0.0
    %2867 = vmatprep.subr.mxu0 0.0
    %2868 = vmatpush1.msra.mxu0 0.0
    %2869 = vmatprep.mubr.f32.mxu0 0.0
    %2870 = vmatmul.mubr.f32.gmra.mrb[0].mxu0 %v2803
    %v2871 = vpop.f32.mrb[0].mxu0
    %v2872 = vadd.f32 0.0, %v2871
    %v2873 = vpop.f32.mrb[0].mxu0
    %2874 = vdwg.mxu0
    %2875 = vrot.lane.b32.xlu0 %v1960, 48
    %v2876 = vpop.permute.xlu0 %2875
    %v2879 = vsel %vm158, %v2798, 0
    %2881 = vmatprep.subr.mxu0 0.0
    %2882 = vmatpush1.msra.mxu0 %v2876
    %2883 = vmatprep.subr.mxu0 0.0
    %2884 = vmatpush1.msra.mxu0 0.0
    %2885 = vmatprep.subr.mxu0 0.0
    %2886 = vmatpush1.msra.mxu0 0.0
    %2887 = vmatprep.subr.mxu0 0.0
    %2888 = vmatpush1.msra.mxu0 0.0
    %2889 = vmatprep.subr.mxu0 0.0
    %2890 = vmatpush1.msra.mxu0 0.0
    %2891 = vmatprep.subr.mxu0 0.0
    %2892 = vmatpush1.msra.mxu0 0.0
    %2893 = vmatprep.subr.mxu0 0.0
    %2894 = vmatpush1.msra.mxu0 0.0
    %2895 = vmatprep.subr.mxu0 0.0
    %2896 = vmatpush1.msra.mxu0 0.0
    %2897 = vmatprep.subr.mxu0 0.0
    %2898 = vmatpush1.msra.mxu0 0.0
    %2899 = vmatprep.subr.mxu0 0.0
    %2900 = vmatpush1.msra.mxu0 0.0
    %2901 = vmatprep.subr.mxu0 0.0
    %2902 = vmatpush1.msra.mxu0 0.0
    %2903 = vmatprep.subr.mxu0 0.0
    %2904 = vmatpush1.msra.mxu0 0.0
    %2905 = vmatprep.subr.mxu0 0.0
    %2906 = vmatpush1.msra.mxu0 0.0
    %2907 = vmatprep.subr.mxu0 0.0
    %2908 = vmatpush1.msra.mxu0 0.0
    %2909 = vmatprep.subr.mxu0 0.0
    %2910 = vmatpush1.msra.mxu0 0.0
    %2911 = vmatprep.subr.mxu0 0.0
    %2912 = vmatpush1.msra.mxu0 0.0
    %2913 = vmatprep.subr.mxu0 0.0
    %2914 = vmatpush1.msra.mxu0 0.0
    %2915 = vmatprep.subr.mxu0 0.0
    %2916 = vmatpush1.msra.mxu0 0.0
    %2917 = vmatprep.subr.mxu0 0.0
    %2918 = vmatpush1.msra.mxu0 0.0
    %2919 = vmatprep.subr.mxu0 0.0
    %2920 = vmatpush1.msra.mxu0 0.0
    %2921 = vmatprep.subr.mxu0 0.0
    %2922 = vmatpush1.msra.mxu0 0.0
    %2923 = vmatprep.subr.mxu0 0.0
    %2924 = vmatpush1.msra.mxu0 0.0
    %2925 = vmatprep.subr.mxu0 0.0
    %2926 = vmatpush1.msra.mxu0 0.0
    %2927 = vmatprep.subr.mxu0 0.0
    %2928 = vmatpush1.msra.mxu0 0.0
    %2929 = vmatprep.subr.mxu0 0.0
    %2930 = vmatpush1.msra.mxu0 0.0
    %2931 = vmatprep.subr.mxu0 0.0
    %2932 = vmatpush1.msra.mxu0 0.0
    %2933 = vmatprep.subr.mxu0 0.0
    %2934 = vmatpush1.msra.mxu0 0.0
    %2935 = vmatprep.subr.mxu0 0.0
    %2936 = vmatpush1.msra.mxu0 0.0
    %2937 = vmatprep.subr.mxu0 0.0
    %2938 = vmatpush1.msra.mxu0 0.0
    %2939 = vmatprep.subr.mxu0 0.0
    %2940 = vmatpush1.msra.mxu0 0.0
    %2941 = vmatprep.subr.mxu0 0.0
    %2942 = vmatpush1.msra.mxu0 0.0
    %2943 = vmatprep.subr.mxu0 0.0
    %2944 = vmatpush1.msra.mxu0 0.0
    %2945 = vmatprep.mubr.f32.mxu0 0.0
    %2946 = vmatmul.mubr.f32.gmra.mrb[0].mxu0 %v2879
    %v2947 = vpop.f32.mrb[0].mxu0
    %v2948 = vadd.f32 0.0, %v2947
    %v2949 = vpop.f32.mrb[0].mxu0
    %2950 = vdwg.mxu0
    %2951 = vrot.lane.b32.xlu0 %v1955, 104
    %v2952 = vpop.permute.xlu0 %2951
    %2953 = vrot.lane.b32.xlu0 %v1955, 72
    %v2954 = vpop.permute.xlu0 %2953
    %v2955 = vsel %vm158, %v2952, 0
    %v2957 = vsel %vm158, %v2954, 0
    %2959 = vmatprep.subr.mxu0 0.0
    %2960 = vmatpush1.xpose.msra.mxu0 %v2957
    %2961 = vmatprep.subr.mxu0 0.0
    %2962 = vmatpush1.xpose.msra.mxu0 0.0
    %2963 = vmatprep.subr.mxu0 0.0
    %2964 = vmatpush1.xpose.msra.mxu0 0.0
    %2965 = vmatprep.subr.mxu0 0.0
    %2966 = vmatpush1.xpose.msra.mxu0 0.0
    %2967 = vmatprep.subr.mxu0 0.0
    %2968 = vmatpush1.xpose.msra.mxu0 0.0
    %2969 = vmatprep.subr.mxu0 0.0
    %2970 = vmatpush1.xpose.msra.mxu0 0.0
    %2971 = vmatprep.subr.mxu0 0.0
    %2972 = vmatpush1.xpose.msra.mxu0 0.0
    %2973 = vmatprep.subr.mxu0 0.0
    %2974 = vmatpush1.xpose.msra.mxu0 0.0
    %2975 = vmatprep.subr.mxu0 0.0
    %2976 = vmatpush1.xpose.msra.mxu0 0.0
    %2977 = vmatprep.subr.mxu0 0.0
    %2978 = vmatpush1.xpose.msra.mxu0 0.0
    %2979 = vmatprep.subr.mxu0 0.0
    %2980 = vmatpush1.xpose.msra.mxu0 0.0
    %2981 = vmatprep.subr.mxu0 0.0
    %2982 = vmatpush1.xpose.msra.mxu0 0.0
    %2983 = vmatprep.subr.mxu0 0.0
    %2984 = vmatpush1.xpose.msra.mxu0 0.0
    %2985 = vmatprep.subr.mxu0 0.0
    %2986 = vmatpush1.xpose.msra.mxu0 0.0
    %2987 = vmatprep.subr.mxu0 0.0
    %2988 = vmatpush1.xpose.msra.mxu0 0.0
    %2989 = vmatprep.subr.mxu0 0.0
    %2990 = vmatpush1.xpose.msra.mxu0 0.0
    %2991 = vmatprep.subr.mxu0 0.0
    %2992 = vmatpush1.xpose.msra.mxu0 0.0
    %2993 = vmatprep.subr.mxu0 0.0
    %2994 = vmatpush1.xpose.msra.mxu0 0.0
    %2995 = vmatprep.subr.mxu0 0.0
    %2996 = vmatpush1.xpose.msra.mxu0 0.0
    %2997 = vmatprep.subr.mxu0 0.0
    %2998 = vmatpush1.xpose.msra.mxu0 0.0
    %2999 = vmatprep.subr.mxu0 0.0
    %3000 = vmatpush1.xpose.msra.mxu0 0.0
    %3001 = vmatprep.subr.mxu0 0.0
    %3002 = vmatpush1.xpose.msra.mxu0 0.0
    %3003 = vmatprep.subr.mxu0 0.0
    %3004 = vmatpush1.xpose.msra.mxu0 0.0
    %3005 = vmatprep.subr.mxu0 0.0
    %3006 = vmatpush1.xpose.msra.mxu0 0.0
    %3007 = vmatprep.subr.mxu0 0.0
    %3008 = vmatpush1.xpose.msra.mxu0 0.0
    %3009 = vmatprep.subr.mxu0 0.0
    %3010 = vmatpush1.xpose.msra.mxu0 0.0
    %3011 = vmatprep.subr.mxu0 0.0
    %3012 = vmatpush1.xpose.msra.mxu0 0.0
    %3013 = vmatprep.subr.mxu0 0.0
    %3014 = vmatpush1.xpose.msra.mxu0 0.0
    %3015 = vmatprep.subr.mxu0 0.0
    %3016 = vmatpush1.xpose.msra.mxu0 0.0
    %3017 = vmatprep.subr.mxu0 0.0
    %3018 = vmatpush1.xpose.msra.mxu0 0.0
    %3019 = vmatprep.subr.mxu0 0.0
    %3020 = vmatpush1.xpose.msra.mxu0 0.0
    %3021 = vmatprep.subr.mxu0 0.0
    %3022 = vmatpush1.xpose.msra.mxu0 0.0
    %3023 = vmatprep.mubr.f32.mxu0 0.0
    %3024 = vmatmul.mubr.f32.gmra.mrb[0].mxu0 %v2955
    %v3025 = vpop.f32.mrb[0].mxu0
    %v3026 = vadd.f32 %v20, %v3025
    %v3027 = vpop.f32.mrb[0].mxu0
    %3028 = vdwg.mxu0
    %3029 = vrot.lane.b32.xlu0 %v1960, 104
    %v3030 = vpop.permute.xlu0 %3029
    %3031 = vrot.lane.b32.xlu0 %v1960, 72
    %v3032 = vpop.permute.xlu0 %3031
    %v3033 = vsel %vm158, %v3030, 0
    %v3035 = vsel %vm158, %v3032, 0
    %3037 = vmatprep.subr.mxu0 0.0
    %3038 = vmatpush1.xpose.msra.mxu0 %v3035
    %3039 = vmatprep.subr.mxu0 0.0
    %3040 = vmatpush1.xpose.msra.mxu0 0.0
    %3041 = vmatprep.subr.mxu0 0.0
    %3042 = vmatpush1.xpose.msra.mxu0 0.0
    %3043 = vmatprep.subr.mxu0 0.0
    %3044 = vmatpush1.xpose.msra.mxu0 0.0
    %3045 = vmatprep.subr.mxu0 0.0
    %3046 = vmatpush1.xpose.msra.mxu0 0.0
    %3047 = vmatprep.subr.mxu0 0.0
    %3048 = vmatpush1.xpose.msra.mxu0 0.0
    %3049 = vmatprep.subr.mxu0 0.0
    %3050 = vmatpush1.xpose.msra.mxu0 0.0
    %3051 = vmatprep.subr.mxu0 0.0
    %3052 = vmatpush1.xpose.msra.mxu0 0.0
    %3053 = vmatprep.subr.mxu0 0.0
    %3054 = vmatpush1.xpose.msra.mxu0 0.0
    %3055 = vmatprep.subr.mxu0 0.0
    %3056 = vmatpush1.xpose.msra.mxu0 0.0
    %3057 = vmatprep.subr.mxu0 0.0
    %3058 = vmatpush1.xpose.msra.mxu0 0.0
    %3059 = vmatprep.subr.mxu0 0.0
    %3060 = vmatpush1.xpose.msra.mxu0 0.0
    %3061 = vmatprep.subr.mxu0 0.0
    %3062 = vmatpush1.xpose.msra.mxu0 0.0
    %3063 = vmatprep.subr.mxu0 0.0
    %3064 = vmatpush1.xpose.msra.mxu0 0.0
    %3065 = vmatprep.subr.mxu0 0.0
    %3066 = vmatpush1.xpose.msra.mxu0 0.0
    %3067 = vmatprep.subr.mxu0 0.0
    %3068 = vmatpush1.xpose.msra.mxu0 0.0
    %3069 = vmatprep.subr.mxu0 0.0
    %3070 = vmatpush1.xpose.msra.mxu0 0.0
    %3071 = vmatprep.subr.mxu0 0.0
    %3072 = vmatpush1.xpose.msra.mxu0 0.0
    %3073 = vmatprep.subr.mxu0 0.0
    %3074 = vmatpush1.xpose.msra.mxu0 0.0
    %3075 = vmatprep.subr.mxu0 0.0
    %3076 = vmatpush1.xpose.msra.mxu0 0.0
    %3077 = vmatprep.subr.mxu0 0.0
    %3078 = vmatpush1.xpose.msra.mxu0 0.0
    %3079 = vmatprep.subr.mxu0 0.0
    %3080 = vmatpush1.xpose.msra.mxu0 0.0
    %3081 = vmatprep.subr.mxu0 0.0
    %3082 = vmatpush1.xpose.msra.mxu0 0.0
    %3083 = vmatprep.subr.mxu0 0.0
    %3084 = vmatpush1.xpose.msra.mxu0 0.0
    %3085 = vmatprep.subr.mxu0 0.0
    %3086 = vmatpush1.xpose.msra.mxu0 0.0
    %3087 = vmatprep.subr.mxu0 0.0
    %3088 = vmatpush1.xpose.msra.mxu0 0.0
    %3089 = vmatprep.subr.mxu0 0.0
    %3090 = vmatpush1.xpose.msra.mxu0 0.0
    %3091 = vmatprep.subr.mxu0 0.0
    %3092 = vmatpush1.xpose.msra.mxu0 0.0
    %3093 = vmatprep.subr.mxu0 0.0
    %3094 = vmatpush1.xpose.msra.mxu0 0.0
    %3095 = vmatprep.subr.mxu0 0.0
    %3096 = vmatpush1.xpose.msra.mxu0 0.0
    %3097 = vmatprep.subr.mxu0 0.0
    %3098 = vmatpush1.xpose.msra.mxu0 0.0
    %3099 = vmatprep.subr.mxu0 0.0
    %3100 = vmatpush1.xpose.msra.mxu0 0.0
    %3101 = vmatprep.mubr.f32.mxu0 0.0
    %3102 = vmatmul.mubr.f32.gmra.mrb[0].mxu0 %v3033
    %v3103 = vpop.f32.mrb[0].mxu0
    %v3104 = vadd.f32 %v24, %v3103
    %v3105 = vpop.f32.mrb[0].mxu0
    %3106 = vdwg.mxu0
    %v3107 = vsel %vm158, %v3026, -inf
    %3108 = vmax.xlane.f32.xlu0 %v3107
    %v3109 = vpop.xlane.xlu0 %3108
    %v3110 = vsel %vm158, %v3104, -inf
    %3111 = vmax.xlane.f32.xlu0 %v3110
    %v3112 = vpop.xlane.xlu0 %3111
    %v3113 = vsub.f32 %v3026, %v3109
    %v3114 = vsub.f32 %v3104, %v3112
    %v3115 = vmul.f32 %v3113, 1.442695
    %v3116 = vpow.pop %v3115
    %v3117 = vmul.f32 %v3114, 1.442695
    %v3118 = vpow.pop %v3117
    %v3119 = vsel %vm158, %v3116, 0.0
    %3120 = vadd.xlane.f32.xlu0 %v3119
    %v3121 = vpop.xlane.xlu0 %3120
    %v3122 = vsel %vm158, %v3118, 0.0
    %3123 = vadd.xlane.f32.xlu0 %v3122
    %v3124 = vpop.xlane.xlu0 %3123
    %v3125 = vrcp.pop %v3121
    %v3126 = vmul.f32 %v3116, %v3125
    %v3127 = vrcp.pop %v3124
    %v3128 = vmul.f32 %v3118, %v3127
    %3129 = vrot.lane.b32.xlu0 %v1955, 40
    %v3130 = vpop.permute.xlu0 %3129
    %v3133 = vsel %vm158, %v3126, 0
    %3135 = vmatprep.subr.mxu0 0.0
    %3136 = vmatpush1.msra.mxu0 %v3130
    %3137 = vmatprep.subr.mxu0 0.0
    %3138 = vmatpush1.msra.mxu0 0.0
    %3139 = vmatprep.subr.mxu0 0.0
    %3140 = vmatpush1.msra.mxu0 0.0
    %3141 = vmatprep.subr.mxu0 0.0
    %3142 = vmatpush1.msra.mxu0 0.0
    %3143 = vmatprep.subr.mxu0 0.0
    %3144 = vmatpush1.msra.mxu0 0.0
    %3145 = vmatprep.subr.mxu0 0.0
    %3146 = vmatpush1.msra.mxu0 0.0
    %3147 = vmatprep.subr.mxu0 0.0
    %3148 = vmatpush1.msra.mxu0 0.0
    %3149 = vmatprep.subr.mxu0 0.0
    %3150 = vmatpush1.msra.mxu0 0.0
    %3151 = vmatprep.subr.mxu0 0.0
    %3152 = vmatpush1.msra.mxu0 0.0
    %3153 = vmatprep.subr.mxu0 0.0
    %3154 = vmatpush1.msra.mxu0 0.0
    %3155 = vmatprep.subr.mxu0 0.0
    %3156 = vmatpush1.msra.mxu0 0.0
    %3157 = vmatprep.subr.mxu0 0.0
    %3158 = vmatpush1.msra.mxu0 0.0
    %3159 = vmatprep.subr.mxu0 0.0
    %3160 = vmatpush1.msra.mxu0 0.0
    %3161 = vmatprep.subr.mxu0 0.0
    %3162 = vmatpush1.msra.mxu0 0.0
    %3163 = vmatprep.subr.mxu0 0.0
    %3164 = vmatpush1.msra.mxu0 0.0
    %3165 = vmatprep.subr.mxu0 0.0
    %3166 = vmatpush1.msra.mxu0 0.0
    %3167 = vmatprep.subr.mxu0 0.0
    %3168 = vmatpush1.msra.mxu0 0.0
    %3169 = vmatprep.subr.mxu0 0.0
    %3170 = vmatpush1.msra.mxu0 0.0
    %3171 = vmatprep.subr.mxu0 0.0
    %3172 = vmatpush1.msra.mxu0 0.0
    %3173 = vmatprep.subr.mxu0 0.0
    %3174 = vmatpush1.msra.mxu0 0.0
    %3175 = vmatprep.subr.mxu0 0.0
    %3176 = vmatpush1.msra.mxu0 0.0
    %3177 = vmatprep.subr.mxu0 0.0
    %3178 = vmatpush1.msra.mxu0 0.0
    %3179 = vmatprep.subr.mxu0 0.0
    %3180 = vmatpush1.msra.mxu0 0.0
    %3181 = vmatprep.subr.mxu0 0.0
    %3182 = vmatpush1.msra.mxu0 0.0
    %3183 = vmatprep.subr.mxu0 0.0
    %3184 = vmatpush1.msra.mxu0 0.0
    %3185 = vmatprep.subr.mxu0 0.0
    %3186 = vmatpush1.msra.mxu0 0.0
    %3187 = vmatprep.subr.mxu0 0.0
    %3188 = vmatpush1.msra.mxu0 0.0
    %3189 = vmatprep.subr.mxu0 0.0
    %3190 = vmatpush1.msra.mxu0 0.0
    %3191 = vmatprep.subr.mxu0 0.0
    %3192 = vmatpush1.msra.mxu0 0.0
    %3193 = vmatprep.subr.mxu0 0.0
    %3194 = vmatpush1.msra.mxu0 0.0
    %3195 = vmatprep.subr.mxu0 0.0
    %3196 = vmatpush1.msra.mxu0 0.0
    %3197 = vmatprep.subr.mxu0 0.0
    %3198 = vmatpush1.msra.mxu0 0.0
    %3199 = vmatprep.mubr.f32.mxu0 0.0
    %3200 = vmatmul.mubr.f32.gmra.mrb[0].mxu0 %v3133
    %v3201 = vpop.f32.mrb[0].mxu0
    %v3202 = vadd.f32 0.0, %v3201
    %v3203 = vpop.f32.mrb[0].mxu0
    %3204 = vdwg.mxu0
    %3205 = vrot.lane.b32.xlu0 %v1960, 40
    %v3206 = vpop.permute.xlu0 %3205
    %v3209 = vsel %vm158, %v3128, 0
    %3211 = vmatprep.subr.mxu0 0.0
    %3212 = vmatpush1.msra.mxu0 %v3206
    %3213 = vmatprep.subr.mxu0 0.0
    %3214 = vmatpush1.msra.mxu0 0.0
    %3215 = vmatprep.subr.mxu0 0.0
    %3216 = vmatpush1.msra.mxu0 0.0
    %3217 = vmatprep.subr.mxu0 0.0
    %3218 = vmatpush1.msra.mxu0 0.0
    %3219 = vmatprep.subr.mxu0 0.0
    %3220 = vmatpush1.msra.mxu0 0.0
    %3221 = vmatprep.subr.mxu0 0.0
    %3222 = vmatpush1.msra.mxu0 0.0
    %3223 = vmatprep.subr.mxu0 0.0
    %3224 = vmatpush1.msra.mxu0 0.0
    %3225 = vmatprep.subr.mxu0 0.0
    %3226 = vmatpush1.msra.mxu0 0.0
    %3227 = vmatprep.subr.mxu0 0.0
    %3228 = vmatpush1.msra.mxu0 0.0
    %3229 = vmatprep.subr.mxu0 0.0
    %3230 = vmatpush1.msra.mxu0 0.0
    %3231 = vmatprep.subr.mxu0 0.0
    %3232 = vmatpush1.msra.mxu0 0.0
    %3233 = vmatprep.subr.mxu0 0.0
    %3234 = vmatpush1.msra.mxu0 0.0
    %3235 = vmatprep.subr.mxu0 0.0
    %3236 = vmatpush1.msra.mxu0 0.0
    %3237 = vmatprep.subr.mxu0 0.0
    %3238 = vmatpush1.msra.mxu0 0.0
    %3239 = vmatprep.subr.mxu0 0.0
    %3240 = vmatpush1.msra.mxu0 0.0
    %3241 = vmatprep.subr.mxu0 0.0
    %3242 = vmatpush1.msra.mxu0 0.0
    %3243 = vmatprep.subr.mxu0 0.0
    %3244 = vmatpush1.msra.mxu0 0.0
    %3245 = vmatprep.subr.mxu0 0.0
    %3246 = vmatpush1.msra.mxu0 0.0
    %3247 = vmatprep.subr.mxu0 0.0
    %3248 = vmatpush1.msra.mxu0 0.0
    %3249 = vmatprep.subr.mxu0 0.0
    %3250 = vmatpush1.msra.mxu0 0.0
    %3251 = vmatprep.subr.mxu0 0.0
    %3252 = vmatpush1.msra.mxu0 0.0
    %3253 = vmatprep.subr.mxu0 0.0
    %3254 = vmatpush1.msra.mxu0 0.0
    %3255 = vmatprep.subr.mxu0 0.0
    %3256 = vmatpush1.msra.mxu0 0.0
    %3257 = vmatprep.subr.mxu0 0.0
    %3258 = vmatpush1.msra.mxu0 0.0
    %3259 = vmatprep.subr.mxu0 0.0
    %3260 = vmatpush1.msra.mxu0 0.0
    %3261 = vmatprep.subr.mxu0 0.0
    %3262 = vmatpush1.msra.mxu0 0.0
    %3263 = vmatprep.subr.mxu0 0.0
    %3264 = vmatpush1.msra.mxu0 0.0
    %3265 = vmatprep.subr.mxu0 0.0
    %3266 = vmatpush1.msra.mxu0 0.0
    %3267 = vmatprep.subr.mxu0 0.0
    %3268 = vmatpush1.msra.mxu0 0.0
    %3269 = vmatprep.subr.mxu0 0.0
    %3270 = vmatpush1.msra.mxu0 0.0
    %3271 = vmatprep.subr.mxu0 0.0
    %3272 = vmatpush1.msra.mxu0 0.0
    %3273 = vmatprep.subr.mxu0 0.0
    %3274 = vmatpush1.msra.mxu0 0.0
    %3275 = vmatprep.mubr.f32.mxu0 0.0
    %3276 = vmatmul.mubr.f32.gmra.mrb[0].mxu0 %v3209
    %v3277 = vpop.f32.mrb[0].mxu0
    %v3278 = vadd.f32 0.0, %v3277
    %v3279 = vpop.f32.mrb[0].mxu0
    %3280 = vdwg.mxu0
    %3283 = vrot.lane.b32.xlu0 %v2542, 8
    %v3284 = vpop.permute.xlu0 %3283
    %3285 = vrot.lane.b32.xlu0 %v2618, 8
    %v3286 = vpop.permute.xlu0 %3285
    %3291 = vrot.lane.b32.xlu0 %v2872, 16
    %v3292 = vpop.permute.xlu0 %3291
    %3293 = vrot.lane.b32.xlu0 %v2948, 16
    %v3294 = vpop.permute.xlu0 %3293
    %3299 = vrot.lane.b32.xlu0 %v3202, 24
    %v3300 = vpop.permute.xlu0 %3299
    %3301 = vrot.lane.b32.xlu0 %v3278, 24
    %v3302 = vpop.permute.xlu0 %3301
    %v3305 = vsel %vm158, %v2212, %v3284
    %v3306 = vsel %vm158, %v2288, %v3286
    %v3307 = vsel %vm1500, %v3305, %v3292
    %v3308 = vsel %vm1500, %v3306, %v3294
    %v3309 = vsel %vm1503, %v3307, %v3300
    %v3310 = vsel %vm1503, %v3308, %v3302
    %v3311 = vld [vmem:[%s2 + $0xc8] sm:$0xff]
    %v3312 = vld [vmem:[%s2 + $0xd0] sm:$0xff]
    %v3313 = vld [vmem:[%s2 + $0xd8] sm:$0xff]
    %v3314 = vld [vmem:[%s2 + $0xe0] sm:$0xff]
    %v3316 = vsel %vm26, %v3309, 0
    %v3319 = vsel %vm26, %v3310, 0
    %3321 = vmatprep.subr.mxu0 0.0
    %3322 = vmatpush1.msra.mxu0 %v3311
    %3323 = vmatprep.subr.mxu0 0.0
    %3324 = vmatpush1.msra.mxu0 %v3312
    %3325 = vmatprep.subr.mxu0 0.0
    %3326 = vmatpush1.msra.mxu0 %v3313
    %3327 = vmatprep.subr.mxu0 0.0
    %3328 = vmatpush1.msra.mxu0 %v3314
    %3329 = vmatprep.subr.mxu0 0.0
    %3330 = vmatpush1.msra.mxu0 0.0
    %3331 = vmatprep.subr.mxu0 0.0
    %3332 = vmatpush1.msra.mxu0 0.0
    %3333 = vmatprep.subr.mxu0 0.0
    %3334 = vmatpush1.msra.mxu0 0.0
    %3335 = vmatprep.subr.mxu0 0.0
    %3336 = vmatpush1.msra.mxu0 0.0
    %3337 = vmatprep.subr.mxu0 0.0
    %3338 = vmatpush1.msra.mxu0 0.0
    %3339 = vmatprep.subr.mxu0 0.0
    %3340 = vmatpush1.msra.mxu0 0.0
    %3341 = vmatprep.subr.mxu0 0.0
    %3342 = vmatpush1.msra.mxu0 0.0
    %3343 = vmatprep.subr.mxu0 0.0
    %3344 = vmatpush1.msra.mxu0 0.0
    %3345 = vmatprep.subr.mxu0 0.0
    %3346 = vmatpush1.msra.mxu0 0.0
    %3347 = vmatprep.subr.mxu0 0.0
    %3348 = vmatpush1.msra.mxu0 0.0
    %3349 = vmatprep.subr.mxu0 0.0
    %3350 = vmatpush1.msra.mxu0 0.0
    %3351 = vmatprep.subr.mxu0 0.0
    %3352 = vmatpush1.msra.mxu0 0.0
    %3353 = vmatprep.subr.mxu0 0.0
    %3354 = vmatpush1.msra.mxu0 0.0
    %3355 = vmatprep.subr.mxu0 0.0
    %3356 = vmatpush1.msra.mxu0 0.0
    %3357 = vmatprep.subr.mxu0 0.0
    %3358 = vmatpush1.msra.mxu0 0.0
    %3359 = vmatprep.subr.mxu0 0.0
    %3360 = vmatpush1.msra.mxu0 0.0
    %3361 = vmatprep.subr.mxu0 0.0
    %3362 = vmatpush1.msra.mxu0 0.0
    %3363 = vmatprep.subr.mxu0 0.0
    %3364 = vmatpush1.msra.mxu0 0.0
    %3365 = vmatprep.subr.mxu0 0.0
    %3366 = vmatpush1.msra.mxu0 0.0
    %3367 = vmatprep.subr.mxu0 0.0
    %3368 = vmatpush1.msra.mxu0 0.0
    %3369 = vmatprep.subr.mxu0 0.0
    %3370 = vmatpush1.msra.mxu0 0.0
    %3371 = vmatprep.subr.mxu0 0.0
    %3372 = vmatpush1.msra.mxu0 0.0
    %3373 = vmatprep.subr.mxu0 0.0
    %3374 = vmatpush1.msra.mxu0 0.0
    %3375 = vmatprep.subr.mxu0 0.0
    %3376 = vmatpush1.msra.mxu0 0.0
    %3377 = vmatprep.subr.mxu0 0.0
    %3378 = vmatpush1.msra.mxu0 0.0
    %3379 = vmatprep.subr.mxu0 0.0
    %3380 = vmatpush1.msra.mxu0 0.0
    %3381 = vmatprep.subr.mxu0 0.0
    %3382 = vmatpush1.msra.mxu0 0.0
    %3383 = vmatprep.subr.mxu0 0.0
    %3384 = vmatpush1.msra.mxu0 0.0
    %3385 = vmatprep.mubr.f32.mxu0 0.0
    %3386 = vmatmul.mubr.f32.gmra.mrb[0].mxu0 %v3316
    %v3387 = vpop.f32.mrb[0].mxu0
    %v3388 = vadd.f32 0.0, %v3387
    %v3389 = vpop.f32.mrb[0].mxu0
    %3390 = vmatprep.mubr.f32.mxu0 0.0
    %3391 = vmatmul.mubr.f32.gmra.mrb[0].mxu0 %v3319
    %v3392 = vpop.f32.mrb[0].mxu0
    %v3393 = vadd.f32 0.0, %v3392
    %v3394 = vpop.f32.mrb[0].mxu0
    %3395 = vdwg.mxu0
    %v3396 = vadd.f32 %v1833, %v3388
    %v3397 = vadd.f32 %v1834, %v3393
    %v3398 = vlaneseq
    %v3399 = vshrl.u32 %v3398, 7
    %v3400 = vsub.s32 4, %v3399
    %v3401 = vrot.slane %v1835, %v3400
    %v3402 = vadd.f32 %v3396, %v3401
    %v3403 = vadd.f32 %v3397, %v3401
    %v3404 = vsel %vm26, %v3402, 0.0
    %3405 = vadd.xlane.f32.xlu0 %v3404
    %v3406 = vpop.xlane.xlu0 %3405
    %v3407 = vsel %vm26, %v3403, 0.0
    %3408 = vadd.xlane.f32.xlu0 %v3407
    %v3409 = vpop.xlane.xlu0 %3408
    %v3410 = vmul.f32 %v3406, %v33
    %v3411 = vmul.f32 %v3409, %v33
    %v3412 = vsub.f32 %v3402, %v3410
    %v3413 = vsub.f32 %v3403, %v3411
    %v3414 = vmul.f32 %v3412, %v3412
    %v3415 = vmul.f32 %v3413, %v3413
    %v3416 = vsel %vm26, %v3414, 0.0
    %3417 = vadd.xlane.f32.xlu0 %v3416
    %v3418 = vpop.xlane.xlu0 %3417
    %v3419 = vsel %vm26, %v3415, 0.0
    %3420 = vadd.xlane.f32.xlu0 %v3419
    %v3421 = vpop.xlane.xlu0 %3420
    %v3422 = vmul.f32 %v3418, %v33
    %v3423 = vmul.f32 %v3421, %v33
    %v3424 = vadd.f32 %v3422, 1e-05
    %v3425 = vadd.f32 %v3423, 1e-05
    %v3426 = vrsqrt.pop %v3424
    %v3427 = vrsqrt.pop %v3425
    %v3428 = vmul.f32 %v3412, %v3426
    %v3429 = vmul.f32 %v3413, %v3427
    %v3430 = vlaneseq
    %v3431 = vshrl.u32 %v3430, 7
    %v3432 = vsub.s32 2, %v3431
    %v3433 = vrot.slane %v1835, %v3432
    %v3434 = vmul.f32 %v3428, %v3433
    %v3435 = vmul.f32 %v3429, %v3433
    %v3436 = vlaneseq
    %v3437 = vshrl.u32 %v3436, 7
    %v3438 = vsub.s32 3, %v3437
    %v3439 = vrot.slane %v1835, %v3438
    %v3440 = vadd.f32 %v3434, %v3439
    %v3441 = vadd.f32 %v3435, %v3439
    %v3442 = vld [vmem:[%s2 + $0xe8] sm:$0xff]
    %v3443 = vld [vmem:[%s2 + $0xf0] sm:$0xff]
    %v3444 = vld [vmem:[%s2 + $0xf8] sm:$0xff]
    %v3445 = vld [vmem:[%s2 + $0x100] sm:$0xff]
    %v3446 = vld [vmem:[%s2 + $0x108] sm:$0xff]
    %v3447 = vld [vmem:[%s2 + $0x110] sm:$0xff]
    %v3448 = vld [vmem:[%s2 + $0x118] sm:$0xff]
    %v3449 = vld [vmem:[%s2 + $0x120] sm:$0xff]
    %v3450 = vld [vmem:[%s2 + $0x128] sm:$0xff]
    %v3451 = vld [vmem:[%s2 + $0x130] sm:$0xff]
    %v3452 = vld [vmem:[%s2 + $0x138] sm:$0xff]
    %v3453 = vld [vmem:[%s2 + $0x140] sm:$0xff]
    %v3454 = vlaneseq
    %v3455 = vshrl.u32 %v3454, 7
    %v3456 = vsub.s32 7, %v3455
    %v3457 = vrot.slane %v1835, %v3456
    %v3459 = vsel %vm26, %v3440, 0
    %v3462 = vsel %vm26, %v3441, 0
    %3464 = vmatprep.subr.mxu0 0.0
    %3465 = vmatpush1.msra.mxu0 %v3442
    %3466 = vmatprep.subr.mxu0 0.0
    %3467 = vmatpush1.msra.mxu0 %v3443
    %3468 = vmatprep.subr.mxu0 0.0
    %3469 = vmatpush1.msra.mxu0 %v3444
    %3470 = vmatprep.subr.mxu0 0.0
    %3471 = vmatpush1.msra.mxu0 %v3445
    %3472 = vmatprep.subr.mxu0 0.0
    %3473 = vmatpush1.msra.mxu0 0.0
    %3474 = vmatprep.subr.mxu0 0.0
    %3475 = vmatpush1.msra.mxu0 0.0
    %3476 = vmatprep.subr.mxu0 0.0
    %3477 = vmatpush1.msra.mxu0 0.0
    %3478 = vmatprep.subr.mxu0 0.0
    %3479 = vmatpush1.msra.mxu0 0.0
    %3480 = vmatprep.subr.mxu0 0.0
    %3481 = vmatpush1.msra.mxu0 0.0
    %3482 = vmatprep.subr.mxu0 0.0
    %3483 = vmatpush1.msra.mxu0 0.0
    %3484 = vmatprep.subr.mxu0 0.0
    %3485 = vmatpush1.msra.mxu0 0.0
    %3486 = vmatprep.subr.mxu0 0.0
    %3487 = vmatpush1.msra.mxu0 0.0
    %3488 = vmatprep.subr.mxu0 0.0
    %3489 = vmatpush1.msra.mxu0 0.0
    %3490 = vmatprep.subr.mxu0 0.0
    %3491 = vmatpush1.msra.mxu0 0.0
    %3492 = vmatprep.subr.mxu0 0.0
    %3493 = vmatpush1.msra.mxu0 0.0
    %3494 = vmatprep.subr.mxu0 0.0
    %3495 = vmatpush1.msra.mxu0 0.0
    %3496 = vmatprep.subr.mxu0 0.0
    %3497 = vmatpush1.msra.mxu0 0.0
    %3498 = vmatprep.subr.mxu0 0.0
    %3499 = vmatpush1.msra.mxu0 0.0
    %3500 = vmatprep.subr.mxu0 0.0
    %3501 = vmatpush1.msra.mxu0 0.0
    %3502 = vmatprep.subr.mxu0 0.0
    %3503 = vmatpush1.msra.mxu0 0.0
    %3504 = vmatprep.subr.mxu0 0.0
    %3505 = vmatpush1.msra.mxu0 0.0
    %3506 = vmatprep.subr.mxu0 0.0
    %3507 = vmatpush1.msra.mxu0 0.0
    %3508 = vmatprep.subr.mxu0 0.0
    %3509 = vmatpush1.msra.mxu0 0.0
    %3510 = vmatprep.subr.mxu0 0.0
    %3511 = vmatpush1.msra.mxu0 0.0
    %3512 = vmatprep.subr.mxu0 0.0
    %3513 = vmatpush1.msra.mxu0 0.0
    %3514 = vmatprep.subr.mxu0 0.0
    %3515 = vmatpush1.msra.mxu0 0.0
    %3516 = vmatprep.subr.mxu0 0.0
    %3517 = vmatpush1.msra.mxu0 0.0
    %3518 = vmatprep.subr.mxu0 0.0
    %3519 = vmatpush1.msra.mxu0 0.0
    %3520 = vmatprep.subr.mxu0 0.0
    %3521 = vmatpush1.msra.mxu0 0.0
    %3522 = vmatprep.subr.mxu0 0.0
    %3523 = vmatpush1.msra.mxu0 0.0
    %3524 = vmatprep.subr.mxu0 0.0
    %3525 = vmatpush1.msra.mxu0 0.0
    %3526 = vmatprep.subr.mxu0 0.0
    %3527 = vmatpush1.msra.mxu0 0.0
    %3528 = vmatprep.mubr.f32.mxu0 0.0
    %3529 = vmatmul.mubr.f32.gmra.mrb[0].mxu0 %v3459
    %v3530 = vpop.f32.mrb[0].mxu0
    %v3531 = vadd.f32 %v3457, %v3530
    %v3532 = vpop.f32.mrb[0].mxu0
    %3533 = vmatprep.mubr.f32.mxu0 0.0
    %3534 = vmatmul.mubr.f32.gmra.mrb[0].mxu0 %v3462
    %v3535 = vpop.f32.mrb[0].mxu0
    %v3536 = vadd.f32 %v3457, %v3535
    %v3537 = vpop.f32.mrb[0].mxu0
    %3538 = vdwg.mxu0
    %v3539 = vmul.f32 %v3531, 0.5
    %v3540 = vmul.f32 %v3536, 0.5
    %v3541 = vmul.f32 %v3531, %v1736
    %v3542 = vmul.f32 %v3536, %v1736
    %v3543 = verf.f32.pop %v3541
    %v3544 = verf.f32.pop %v3542
    %v3545 = vadd.f32 %v3543, 1.0
    %v3546 = vadd.f32 %v3544, 1.0
    %v3547 = vmul.f32 %v3539, %v3545
    %v3548 = vmul.f32 %v3540, %v3546
    %v3550 = vsel %vm1745, %v3547, 0
    %v3553 = vsel %vm1745, %v3548, 0
    %3555 = vmatprep.subr.mxu0 0.0
    %3556 = vmatpush1.msra.mxu0 %v3446
    %3557 = vmatprep.subr.mxu0 0.0
    %3558 = vmatpush1.msra.mxu0 %v3447
    %3559 = vmatprep.subr.mxu0 0.0
    %3560 = vmatpush1.msra.mxu0 %v3448
    %3561 = vmatprep.subr.mxu0 0.0
    %3562 = vmatpush1.msra.mxu0 %v3449
    %3563 = vmatprep.subr.mxu0 0.0
    %3564 = vmatpush1.msra.mxu0 %v3450
    %3565 = vmatprep.subr.mxu0 0.0
    %3566 = vmatpush1.msra.mxu0 %v3451
    %3567 = vmatprep.subr.mxu0 0.0
    %3568 = vmatpush1.msra.mxu0 %v3452
    %3569 = vmatprep.subr.mxu0 0.0
    %3570 = vmatpush1.msra.mxu0 %v3453
    %3571 = vmatprep.subr.mxu0 0.0
    %3572 = vmatpush1.msra.mxu0 0.0
    %3573 = vmatprep.subr.mxu0 0.0
    %3574 = vmatpush1.msra.mxu0 0.0
    %3575 = vmatprep.subr.mxu0 0.0
    %3576 = vmatpush1.msra.mxu0 0.0
    %3577 = vmatprep.subr.mxu0 0.0
    %3578 = vmatpush1.msra.mxu0 0.0
    %3579 = vmatprep.subr.mxu0 0.0
    %3580 = vmatpush1.msra.mxu0 0.0
    %3581 = vmatprep.subr.mxu0 0.0
    %3582 = vmatpush1.msra.mxu0 0.0
    %3583 = vmatprep.subr.mxu0 0.0
    %3584 = vmatpush1.msra.mxu0 0.0
    %3585 = vmatprep.subr.mxu0 0.0
    %3586 = vmatpush1.msra.mxu0 0.0
    %3587 = vmatprep.subr.mxu0 0.0
    %3588 = vmatpush1.msra.mxu0 0.0
    %3589 = vmatprep.subr.mxu0 0.0
    %3590 = vmatpush1.msra.mxu0 0.0
    %3591 = vmatprep.subr.mxu0 0.0
    %3592 = vmatpush1.msra.mxu0 0.0
    %3593 = vmatprep.subr.mxu0 0.0
    %3594 = vmatpush1.msra.mxu0 0.0
    %3595 = vmatprep.subr.mxu0 0.0
    %3596 = vmatpush1.msra.mxu0 0.0
    %3597 = vmatprep.subr.mxu0 0.0
    %3598 = vmatpush1.msra.mxu0 0.0
    %3599 = vmatprep.subr.mxu0 0.0
    %3600 = vmatpush1.msra.mxu0 0.0
    %3601 = vmatprep.subr.mxu0 0.0
    %3602 = vmatpush1.msra.mxu0 0.0
    %3603 = vmatprep.subr.mxu0 0.0
    %3604 = vmatpush1.msra.mxu0 0.0
    %3605 = vmatprep.subr.mxu0 0.0
    %3606 = vmatpush1.msra.mxu0 0.0
    %3607 = vmatprep.subr.mxu0 0.0
    %3608 = vmatpush1.msra.mxu0 0.0
    %3609 = vmatprep.subr.mxu0 0.0
    %3610 = vmatpush1.msra.mxu0 0.0
    %3611 = vmatprep.subr.mxu0 0.0
    %3612 = vmatpush1.msra.mxu0 0.0
    %3613 = vmatprep.subr.mxu0 0.0
    %3614 = vmatpush1.msra.mxu0 0.0
    %3615 = vmatprep.subr.mxu0 0.0
    %3616 = vmatpush1.msra.mxu0 0.0
    %3617 = vmatprep.subr.mxu0 0.0
    %3618 = vmatpush1.msra.mxu0 0.0
    %3619 = vmatprep.mubr.f32.mxu0 0.0
    %3620 = vmatmul.mubr.f32.gmra.mrb[0].mxu0 %v3550
    %v3621 = vpop.f32.mrb[0].mxu0
    %v3622 = vadd.f32 0.0, %v3621
    %v3623 = vpop.f32.mrb[0].mxu0
    %3624 = vmatprep.mubr.f32.mxu0 0.0
    %3625 = vmatmul.mubr.f32.gmra.mrb[0].mxu0 %v3553
    %v3626 = vpop.f32.mrb[0].mxu0
    %v3627 = vadd.f32 0.0, %v3626
    %v3628 = vpop.f32.mrb[0].mxu0
    %3629 = vdwg.mxu0
    %v3630 = vadd.f32 %v3402, %v3622
    %v3631 = vadd.f32 %v3403, %v3627
    %v3632 = vlaneseq
    %v3633 = vshrl.u32 %v3632, 7
    %v3634 = vsub.s32 5, %v3633
    %v3635 = vrot.slane %v1835, %v3634
    %v3636 = vadd.f32 %v3630, %v3635
    %v3637 = vadd.f32 %v3631, %v3635
    %v3638 = vld [vmem:[%s2 + $0x170] sm:$0xff]
    %v3639 = vld [vmem:[%s2 + $0x150] sm:$0xff]
    %v3640 = vld [vmem:[%s2 + $0x158] sm:$0xff]
    %v3641 = vld [vmem:[%s2 + $0x160] sm:$0xff]
    %v3642 = vld [vmem:[%s2 + $0x168] sm:$0xff]
    %vm3643 = vcmask 253952
    %v3644 = vsel %vm3643, %v3636, 0.0
    %3645 = vadd.xlane.f32.xlu0 %v3644
    %v3646 = vpop.xlane.xlu0 %3645
    %v3647 = vsel %vm3643, %v3637, 0.0
    %3648 = vadd.xlane.f32.xlu0 %v3647
    %v3649 = vpop.xlane.xlu0 %3648
    %v3650 = vmul.f32 %v3646, %v33
    %v3651 = vmul.f32 %v3649, %v33
    %v3652 = vsub.f32 %v3636, %v3650
    %v3653 = vsub.f32 %v3637, %v3651
    %v3654 = vmul.f32 %v3652, %v3652
    %v3655 = vmul.f32 %v3653, %v3653
    %v3656 = vsel %vm3643, %v3654, 0.0
    %3657 = vadd.xlane.f32.xlu0 %v3656
    %v3658 = vpop.xlane.xlu0 %3657
    %v3659 = vsel %vm3643, %v3655, 0.0
    %3660 = vadd.xlane.f32.xlu0 %v3659
    %v3661 = vpop.xlane.xlu0 %3660
    %v3662 = vmul.f32 %v3658, %v33
    %v3663 = vmul.f32 %v3661, %v33
    %v3664 = vadd.f32 %v3662, 1e-05
    %v3665 = vadd.f32 %v3663, 1e-05
    %v3666 = vrsqrt.pop %v3664
    %v3667 = vrsqrt.pop %v3665
    %v3668 = vmul.f32 %v3652, %v3666
    %v3669 = vmul.f32 %v3653, %v3667
    %v3670 = vmul.f32 %v3668, %v3638
    %v3671 = vmul.f32 %v3669, %v3638
    %v3673 = vrot.slane %v3638, 1
    %v3675 = vadd.f32 %v3670, %v3673
    %v3676 = vadd.f32 %v3671, %v3673
    %v3679 = vrot.slane %v3676, 7
    %vm3680 = vcmask 1041409
    %v3681 = vsel %vm3680, %v3679, %v3675
    %v3682 = vrot.slane %v3638, 2
    %v3683 = vsel %vm3680, %v3673, %v3682
    %v3685 = vsel %vm26, %v3681, 0
    %3687 = vmatprep.subr.mxu0 0.0
    %3688 = vmatpush1.msra.mxu0 %v3639
    %3689 = vmatprep.subr.mxu0 0.0
    %3690 = vmatpush1.msra.mxu0 %v3640
    %3691 = vmatprep.subr.mxu0 0.0
    %3692 = vmatpush1.msra.mxu0 %v3641
    %3693 = vmatprep.subr.mxu0 0.0
    %3694 = vmatpush1.msra.mxu0 %v3642
    %3695 = vmatprep.subr.mxu0 0.0
    %3696 = vmatpush1.msra.mxu0 0.0
    %3697 = vmatprep.subr.mxu0 0.0
    %3698 = vmatpush1.msra.mxu0 0.0
    %3699 = vmatprep.subr.mxu0 0.0
    %3700 = vmatpush1.msra.mxu0 0.0
    %3701 = vmatprep.subr.mxu0 0.0
    %3702 = vmatpush1.msra.mxu0 0.0
    %3703 = vmatprep.subr.mxu0 0.0
    %3704 = vmatpush1.msra.mxu0 0.0
    %3705 = vmatprep.subr.mxu0 0.0
    %3706 = vmatpush1.msra.mxu0 0.0
    %3707 = vmatprep.subr.mxu0 0.0
    %3708 = vmatpush1.msra.mxu0 0.0
    %3709 = vmatprep.subr.mxu0 0.0
    %3710 = vmatpush1.msra.mxu0 0.0
    %3711 = vmatprep.subr.mxu0 0.0
    %3712 = vmatpush1.msra.mxu0 0.0
    %3713 = vmatprep.subr.mxu0 0.0
    %3714 = vmatpush1.msra.mxu0 0.0
    %3715 = vmatprep.subr.mxu0 0.0
    %3716 = vmatpush1.msra.mxu0 0.0
    %3717 = vmatprep.subr.mxu0 0.0
    %3718 = vmatpush1.msra.mxu0 0.0
    %3719 = vmatprep.subr.mxu0 0.0
    %3720 = vmatpush1.msra.mxu0 0.0
    %3721 = vmatprep.subr.mxu0 0.0
    %3722 = vmatpush1.msra.mxu0 0.0
    %3723 = vmatprep.subr.mxu0 0.0
    %3724 = vmatpush1.msra.mxu0 0.0
    %3725 = vmatprep.subr.mxu0 0.0
    %3726 = vmatpush1.msra.mxu0 0.0
    %3727 = vmatprep.subr.mxu0 0.0
    %3728 = vmatpush1.msra.mxu0 0.0
    %3729 = vmatprep.subr.mxu0 0.0
    %3730 = vmatpush1.msra.mxu0 0.0
    %3731 = vmatprep.subr.mxu0 0.0
    %3732 = vmatpush1.msra.mxu0 0.0
    %3733 = vmatprep.subr.mxu0 0.0
    %3734 = vmatpush1.msra.mxu0 0.0
    %3735 = vmatprep.subr.mxu0 0.0
    %3736 = vmatpush1.msra.mxu0 0.0
    %3737 = vmatprep.subr.mxu0 0.0
    %3738 = vmatpush1.msra.mxu0 0.0
    %3739 = vmatprep.subr.mxu0 0.0
    %3740 = vmatpush1.msra.mxu0 0.0
    %3741 = vmatprep.subr.mxu0 0.0
    %3742 = vmatpush1.msra.mxu0 0.0
    %3743 = vmatprep.subr.mxu0 0.0
    %3744 = vmatpush1.msra.mxu0 0.0
    %3745 = vmatprep.subr.mxu0 0.0
    %3746 = vmatpush1.msra.mxu0 0.0
    %3747 = vmatprep.subr.mxu0 0.0
    %3748 = vmatpush1.msra.mxu0 0.0
    %3749 = vmatprep.subr.mxu0 0.0
    %3750 = vmatpush1.msra.mxu0 0.0
    %3751 = vmatprep.mubr.f32.mxu0 0.0
    %3752 = vmatmul.mubr.f32.gmra.mrb[0].mxu0 %v3685
    %v3753 = vpop.f32.mrb[0].mxu0
    %v3754 = vadd.f32 %v3683, %v3753
    %v3755 = vpop.f32.mrb[0].mxu0
    %3756 = vdwg.mxu0
    %v3759 = vunpack.c.l.s4 1966171168
    %v3760 = vunpack.c.0.s8 %v3759
    %v3761 = vlaneseq
    %v3762 = vshrl.u32 %v3761, 7
    %v3763 = vsub.s32 %v3760, %v3762
    %v3764 = vrot.slane %v3754, %v3763
    %v3765 = vcombine.high %v3764, %v3764
    %v3767 = vunpack.c.l.s4 1966171168
    %v3768 = vunpack.c.0.s8 %v3767
    %v3769 = vlaneseq
    %v3770 = vshrl.u32 %v3769, 7
    %v3771 = vsub.s32 %v3768, %v3770
    %v3772 = vrot.slane %v3764, %v3771
    %v3774 = vunpack.c.l.s4 1966171168
    %v3775 = vunpack.c.0.s8 %v3774
    %v3776 = vlaneseq
    %v3777 = vshrl.u32 %v3776, 7
    %v3778 = vsub.s32 %v3775, %v3777
    %v3779 = vrot.slane %v3765, %v3778
    %vm3782 = vcmask 57344
    %3783 = vst.msk [vmem:[#allocation2] sm:$0x1] %vm3782, %v3772
    %3784 = vst.msk [vmem:[#allocation2 + $0x1] sm:$0x1] %vm3782, %v3779
    // Predicated region
    $region14: #{graphormer_forward.1} parent=1 // pred_check
      _
    $region15: #{graphormer_forward.1} parent=1 // pred_check_branch
      %3786 = sbr.rel (0) target = $region17
    $region16: #{graphormer_forward.1} parent=1 // pred_region
      %s3788 = ssub.s32 32, 32
      %3789 = vsyncadd [#allocation3], %s3788
      %s3790 = sshll.u32 [#allocation2], 4
      %s3791 = int_to_ptr.vmem [resolvable:$true] %s3790
      %3796 = dma.vmem_to_hbm [thread:$0]  %s3791, 32, %s3, [#allocation3], 16, 16, 1
    $region17: #{graphormer_forward.1} parent=1 // pred_fallthru
      _
    // Predicated region
    $region18: #{graphormer_forward.1} parent=1 // pred_check
      _
    $region19: #{graphormer_forward.1} parent=1 // pred_check_branch
      %3798 = sbr.rel (0) target = $region21
    $region20: #{graphormer_forward.1} parent=1 // pred_region
      %3799 = dma.done [#allocation3], 32
    $region21: #{graphormer_forward.1} parent=1 // pred_fallthru
      _
    %3800 = vsyncpa [#allocation3], 1

</llo_original>
